<compile_context>
chip_gen: v7x
topology: tpu7x:2x2x1
jax: 0.10.0
libtpu: 0.0.40
codegen_flags: <defaults>
</compile_context>

<pallas_src>
import functools

import jax
import jax.numpy as jnp
from jax import lax
from jax.experimental import pallas as pl
from jax.experimental.pallas import tpu as pltpu


# ----------------------------------------------------------------------------
# Helpers
# ----------------------------------------------------------------------------
def _pick_block_batch(n, cap=8):
    """Largest divisor of n that is <= cap, preferring >= 2 grid steps (v7x)."""
    divisors = [b for b in range(1, min(n, cap) + 1) if n % b == 0]
    multi = [b for b in divisors if n // b >= 2]
    return max(multi) if multi else max(divisors)


# ----------------------------------------------------------------------------
# Fused (conv-as-one-matmul) + bias + MaxPool2d(2) kernel, B images per step
# ----------------------------------------------------------------------------
def _conv_pool_kernel(p_ref, w_ref, b_ref, o_ref, v_ref, *, B, H, W, Cout, K):
    H2, W2 = H // 2, W // 2
    m = B * H * W

    # One MXU matmul per grid step: (B*H*W, 25*Cin) @ (25*Cin, Cout),
    # bf16 operands, f32 accumulation.  The reshape only merges leading dims
    # (last dim kept), so it is layout-preserving.
    conv = jnp.dot(p_ref[...].reshape(m, K), w_ref[...],
                   preferred_element_type=jnp.float32)       # (m, Cout) f32

    # Vertical 2:1 max: split the leading dim (free, W is a multiple of 8 so
    # the sublane tiling is untouched) and max the two outer-dim slices.
    conv = conv.reshape(B * H2, 2, W, Cout)
    v_ref[...] = jnp.maximum(conv[:, 0], conv[:, 1])         # (B*H2, W, Cout)

    # Horizontal 2:1 max: sublane-strided reads of the half-height scratch.
    pooled = jnp.maximum(v_ref[:, pl.ds(0, W2, 2), :],
                         v_ref[:, pl.ds(1, W2, 2), :])       # (B*H2, W2, Cout)

    # Bias is per-channel, so it commutes with max-pool: add once, post-pool.
    out = pooled.reshape(B, H2, W2, Cout) + b_ref[...]
    o_ref[...] = out.astype(o_ref.dtype)


def conv_pool_stage(x_nhwc, w_mat, b_row, *, k=5, pad=2):
    """x: (N,H,W,Cin) bf16; w_mat: (k*k*Cin, Cout) bf16 (tap-major rows);
    b_row: (1, Cout) f32.  Returns maxpool2x2(conv_same(x) + b) as
    (N, H/2, W/2, Cout) bf16."""
    N, H, W, Cin = x_nhwc.shape
    K, Cout = w_mat.shape
    assert K == k * k * Cin
    assert H % 2 == 0 and W % 2 == 0, "maxpool2x2 needs even H, W"
    H2, W2 = H // 2, W // 2

    # im2col in the wrapper (XLA): lane-dense patches, rows ordered (di,dj,ci).
    xp = jnp.pad(x_nhwc, ((0, 0), (pad, pad), (pad, pad), (0, 0)))
    patches = jnp.concatenate(
        [xp[:, di:di + H, dj:dj + W, :] for di in range(k) for dj in range(k)],
        axis=-1)                                              # (N, H, W, K) bf16

    B = _pick_block_batch(N)
    grid = (N // B,)
    kernel = functools.partial(_conv_pool_kernel,
                               B=B, H=H, W=W, Cout=Cout, K=K)

    return pl.pallas_call(
        kernel,
        out_shape=jax.ShapeDtypeStruct((N, H2, W2, Cout), jnp.bfloat16),
        grid=grid,
        in_specs=[
            pl.BlockSpec((B, H, W, K), lambda n: (n, 0, 0, 0)),
            pl.BlockSpec((K, Cout), lambda n: (0, 0)),
            pl.BlockSpec((1, Cout), lambda n: (0, 0)),
        ],
        out_specs=pl.BlockSpec((B, H2, W2, Cout), lambda n: (n, 0, 0, 0)),
        scratch_shapes=[pltpu.VMEM((B * H2, W, Cout), jnp.float32)],
        compiler_params=pltpu.CompilerParams(
            dimension_semantics=("parallel",),
            vmem_limit_bytes=32 * 1024 * 1024),
    )(patches, w_mat, b_row)


# ----------------------------------------------------------------------------
# Fused fc1 + fc2 head
# ----------------------------------------------------------------------------
def _mlp_kernel(x_ref, w1_ref, b1_ref, w2_ref, b2_ref, o_ref):
    x = x_ref[...].astype(jnp.bfloat16)
    h = jnp.dot(x, w1_ref[...], preferred_element_type=jnp.float32) + b1_ref[...]
    o_ref[...] = (jnp.dot(h.astype(jnp.bfloat16), w2_ref[...],
                          preferred_element_type=jnp.float32) + b2_ref[...])


def mlp_head(x, w1, b1, w2, b2):
    """Fused (x @ w1 + b1) @ w2 + b2.  x: (M, K1) bf16; w1/w2 bf16; b f32."""
    M, K1 = x.shape
    N1 = w1.shape[1]
    N2 = w2.shape[1]
    bm = min(M, 256)
    grid = (pl.cdiv(M, bm),)
    return pl.pallas_call(
        _mlp_kernel,
        out_shape=jax.ShapeDtypeStruct((M, N2), jnp.float32),
        grid=grid,
        in_specs=[
            pl.BlockSpec((bm, K1), lambda i: (i, 0)),
            pl.BlockSpec((K1, N1), lambda i: (0, 0)),
            pl.BlockSpec((1, N1), lambda i: (0, 0)),
            pl.BlockSpec((N1, N2), lambda i: (0, 0)),
            pl.BlockSpec((1, N2), lambda i: (0, 0)),
        ],
        out_specs=pl.BlockSpec((bm, N2), lambda i: (i, 0)),
        compiler_params=pltpu.CompilerParams(
            dimension_semantics=("parallel",)),
    )(x, w1, b1, w2, b2)


# ----------------------------------------------------------------------------
# Parameters
# ----------------------------------------------------------------------------
def init_params(key):
    """Deterministic synthetic parameters with the module's shapes."""
    keys = jax.random.split(key, 10)

    def w(k_, shape, fan_in):
        bound = 1.0 / jnp.sqrt(fan_in)
        return jax.random.uniform(k_, shape, jnp.float32, -bound, bound)

    p = {}
    p["c1_w"] = w(keys[0], (32, 3, 5, 5), 3 * 25)
    p["c1_b"] = w(keys[1], (32,), 3 * 25)
    p["c2_w"] = w(keys[2], (32, 32, 5, 5), 32 * 25)
    p["c2_b"] = w(keys[3], (32,), 32 * 25)
    p["c3_w"] = w(keys[4], (64, 32, 5, 5), 32 * 25)
    p["c3_b"] = w(keys[5], (64,), 32 * 25)
    p["fc1_w"] = w(keys[6], (1024, 64), 1024)   # (in, out), in = CHW flatten idx
    p["fc1_b"] = w(keys[7], (64,), 1024)
    p["fc2_w"] = w(keys[8], (64, 10), 64)
    p["fc2_b"] = w(keys[9], (64, 10)[0:1] + (10,), 64)[0] * 0 + w(keys[9], (10,), 64)
    return p


def prepare_params(params):
    """One-time, kernel-ready parameter prep (hoisted out of the forward):
    conv weights -> (25*Cin, Cout) tap-major bf16 matrices; fc1 rows permuted
    CHW -> HWC to match the NHWC flatten; biases as (1, C) f32 rows."""
    def conv_w(w):
        cout, cin, kh, kw = w.shape
        return (jnp.transpose(w, (2, 3, 1, 0))
                .reshape(kh * kw * cin, cout).astype(jnp.bfloat16))

    kp = {}
    kp["c1_w"] = conv_w(params["c1_w"])
    kp["c2_w"] = conv_w(params["c2_w"])
    kp["c3_w"] = conv_w(params["c3_w"])
    kp["c1_b"] = params["c1_b"].reshape(1, -1).astype(jnp.float32)
    kp["c2_b"] = params["c2_b"].reshape(1, -1).astype(jnp.float32)
    kp["c3_b"] = params["c3_b"].reshape(1, -1).astype(jnp.float32)

    # Stage-3 output is (N, 4, 4, 64) NHWC; torch flattens NCHW, so permute
    # fc1's rows from c*HW + h*W + w  ->  h*W*C + w*C + c   (once, here).
    Cf, Hf, Wf = 64, 4, 4
    w1 = (params["fc1_w"].reshape(Cf, Hf, Wf, -1)
          .transpose(1, 2, 0, 3).reshape(Hf * Wf * Cf, -1))
    kp["fc1_w"] = w1.astype(jnp.bfloat16)
    kp["fc1_b"] = params["fc1_b"].reshape(1, -1).astype(jnp.float32)
    kp["fc2_w"] = params["fc2_w"].astype(jnp.bfloat16)
    kp["fc2_b"] = params["fc2_b"].reshape(1, -1).astype(jnp.float32)
    return kp


# ----------------------------------------------------------------------------
# jlNet forward
# ----------------------------------------------------------------------------
@jax.jit
def jlnet_forward(kp, x_nchw):
    # NCHW (torch) -> NHWC (channels on the lane axis), bf16 activations.
    x = jnp.transpose(x_nchw, (0, 2, 3, 1)).astype(jnp.bfloat16)

    x = conv_pool_stage(x, kp["c1_w"], kp["c1_b"])   # (N,16,16,32)
    x = conv_pool_stage(x, kp["c2_w"], kp["c2_b"])   # (N, 8, 8,32)
    x = conv_pool_stage(x, kp["c3_w"], kp["c3_b"])   # (N, 4, 4,64)

    N = x.shape[0]
    x = x.reshape(N, -1)                             # HWC flatten (free)
    return mlp_head(x, kp["fc1_w"], kp["fc1_b"], kp["fc2_w"], kp["fc2_b"])


# ----------------------------------------------------------------------------
# Pure-XLA reference (f32, highest precision) for in-script validation
# ----------------------------------------------------------------------------
def reference_forward(params, x_nchw):
    def conv(x, w, b):
        y = lax.conv_general_dilated(
            x, w, window_strides=(1, 1), padding=((2, 2), (2, 2)),
            dimension_numbers=("NCHW", "OIHW", "NCHW"),
            precision=lax.Precision.HIGHEST)
        return y + b.reshape(1, -1, 1, 1)

    def pool(x):
        return lax.reduce_window(x, -jnp.inf, lax.max,
                                 (1, 1, 2, 2), (1, 1, 2, 2), "VALID")

    x = pool(conv(x_nchw, params["c1_w"], params["c1_b"]))
    x = pool(conv(x, params["c2_w"], params["c2_b"]))
    x = pool(conv(x, params["c3_w"], params["c3_b"]))
    x = x.reshape(x.shape[0], -1)                             # NCHW flatten
    x = jnp.dot(x, params["fc1_w"],
                precision=lax.Precision.HIGHEST) + params["fc1_b"]
    x = jnp.dot(x, params["fc2_w"],
                precision=lax.Precision.HIGHEST) + params["fc2_b"]
    return x


if __name__ == "__main__":
    key = jax.random.PRNGKey(0)
    pkey, xkey = jax.random.split(key)
    params = init_params(pkey)
    kparams = prepare_params(params)
    # Input must be (N, 3, 32, 32) for Linear(1024, 64) to be consistent.
    x = jax.random.normal(xkey, (2, 3, 32, 32), dtype=jnp.float32)

    out = jlnet_forward(kparams, x)
    jax.block_until_ready(out)
    assert out.shape == (2, 10), out.shape

    ref = reference_forward(params, x)
    err = float(jnp.max(jnp.abs(out - ref)))
    # bf16 matmul operands w/ f32 accumulation: expected max abs err ~1e-3.
    assert err < 3e-2, f"mismatch vs XLA reference: max abs err = {err}"

    print("KERNEL_OK")
</pallas_src>

<mosaic_0001>
module attributes {stable_mosaic.version = 11 : i64} {
  func.func @_conv_pool_kernel(%arg0: i32, %arg1: memref<1x32x32x75xbf16, #tpu.memory_space<vmem>>, %arg2: memref<75x32xbf16, #tpu.memory_space<vmem>>, %arg3: memref<1x32xf32, #tpu.memory_space<vmem>>, %arg4: memref<1x16x16x32xbf16, #tpu.memory_space<vmem>>, %arg5: memref<16x32x32xf32, #tpu.memory_space<vmem>>) attributes {dimension_semantics = [#tpu.dimension_semantics<parallel>], iteration_bounds = array<i64: 2>, scalar_prefetch = 0 : i64, scratch_operands = 1 : i64, tpu.core_type = #tpu.core_type<tc>, window_params = [{transform_indices = @transform_0, window_bounds = array<i64: 1, 32, 32, 75>}, {pipeline_mode = #tpu.pipeline_mode<synchronous>, transform_indices = @transform_1, window_bounds = array<i64: 75, 32>}, {pipeline_mode = #tpu.pipeline_mode<synchronous>, transform_indices = @transform_2, window_bounds = array<i64: 1, 32>}, {transform_indices = @transform_3, window_bounds = array<i64: 1, 16, 16, 32>}]} {
    %c0 = arith.constant 0 : index
    %c0_0 = arith.constant 0 : index
    %c0_1 = arith.constant 0 : index
    %c0_2 = arith.constant 0 : index
    %0 = vector.load %arg1[%c0, %c0_0, %c0_1, %c0_2] : memref<1x32x32x75xbf16, #tpu.memory_space<vmem>>, vector<1x32x32x75xbf16>
    %1 = vector.shape_cast %0 : vector<1x32x32x75xbf16> to vector<1024x75xbf16>
    %c0_3 = arith.constant 0 : index
    %c0_4 = arith.constant 0 : index
    %2 = vector.load %arg2[%c0_3, %c0_4] : memref<75x32xbf16, #tpu.memory_space<vmem>>, vector<75x32xbf16>
    %cst = arith.constant dense<0.000000e+00> : vector<1024x32xf32>
    %3 = tpu.matmul %1, %2, %cst {dimension_numbers = #tpu.dot_dimension_numbers<[1], [0], [0], [1], [0, 0, 1, 1], [], []>} : vector<1024x75xbf16>, vector<75x32xbf16>, vector<1024x32xf32> -> vector<1024x32xf32>
    %4 = vector.shape_cast %3 : vector<1024x32xf32> to vector<16x2x32x32xf32>
    %5 = vector.extract_strided_slice %4 {offsets = [0, 0, 0, 0], sizes = [16, 1, 32, 32], strides = [1, 1, 1, 1]} : vector<16x2x32x32xf32> to vector<16x1x32x32xf32>
    %6 = vector.shape_cast %5 : vector<16x1x32x32xf32> to vector<16x32x32xf32>
    %7 = vector.extract_strided_slice %4 {offsets = [0, 1, 0, 0], sizes = [16, 1, 32, 32], strides = [1, 1, 1, 1]} : vector<16x2x32x32xf32> to vector<16x1x32x32xf32>
    %8 = vector.shape_cast %7 : vector<16x1x32x32xf32> to vector<16x32x32xf32>
    %9 = arith.maximumf %6, %8 : vector<16x32x32xf32>
    %c0_5 = arith.constant 0 : index
    %c0_6 = arith.constant 0 : index
    %c0_7 = arith.constant 0 : index
    %10 = vector.load %arg5[%c0_5, %c0_6, %c0_7] : memref<16x32x32xf32, #tpu.memory_space<vmem>>, vector<16x32x32xf32>
    tpu.vector_store %arg5[%c0_5, %c0_6, %c0_7], %9 {strides = array<i32>} : memref<16x32x32xf32, #tpu.memory_space<vmem>>, vector<16x32x32xf32>,
    %c0_8 = arith.constant 0 : index
    %c0_9 = arith.constant 0 : index
    %c0_10 = arith.constant 0 : index
    %11 = tpu.strided_load %arg5[%c0_8, %c0_9, %c0_10] {strides = array<i32: 1, 2, 1>} : memref<16x32x32xf32, #tpu.memory_space<vmem>>, vector<16x16x32xf32>
    %c0_11 = arith.constant 0 : index
    %c1 = arith.constant 1 : index
    %c0_12 = arith.constant 0 : index
    %12 = tpu.strided_load %arg5[%c0_11, %c1, %c0_12] {strides = array<i32: 1, 2, 1>} : memref<16x32x32xf32, #tpu.memory_space<vmem>>, vector<16x16x32xf32>
    %13 = arith.maximumf %11, %12 : vector<16x16x32xf32>
    %14 = vector.shape_cast %13 : vector<16x16x32xf32> to vector<1x16x16x32xf32>
    %c0_13 = arith.constant 0 : index
    %c0_14 = arith.constant 0 : index
    %15 = vector.load %arg3[%c0_13, %c0_14] : memref<1x32xf32, #tpu.memory_space<vmem>>, vector<1x32xf32>
    %16 = vector.shape_cast %15 : vector<1x32xf32> to vector<1x1x1x32xf32>
    %17 = vector.broadcast %16 : vector<1x1x1x32xf32> to vector<1x16x16x32xf32>
    %18 = arith.addf %14, %17 : vector<1x16x16x32xf32>
    %19 = arith.truncf %18 : vector<1x16x16x32xf32> to vector<1x16x16x32xbf16>
    %c0_15 = arith.constant 0 : index
    %c0_16 = arith.constant 0 : index
    %c0_17 = arith.constant 0 : index
    %c0_18 = arith.constant 0 : index
    %20 = vector.load %arg4[%c0_15, %c0_16, %c0_17, %c0_18] : memref<1x16x16x32xbf16, #tpu.memory_space<vmem>>, vector<1x16x16x32xbf16>
    tpu.vector_store %arg4[%c0_15, %c0_16, %c0_17, %c0_18], %19 {strides = array<i32>} : memref<1x16x16x32xbf16, #tpu.memory_space<vmem>>, vector<1x16x16x32xbf16>,
    return
  }
  func.func @transform_0(%arg0: i32) -> (i32, i32, i32, i32) {
    %c0_i32 = arith.constant 0 : i32
    %c0_i32_0 = arith.constant 0 : i32
    %c0_i32_1 = arith.constant 0 : i32
    %c0_i32_2 = arith.constant 0 : i32
    return %arg0, %c0_i32, %c0_i32_0, %c0_i32_1 : i32, i32, i32, i32
  }
  func.func @transform_1(%arg0: i32) -> (i32, i32) {
    %c0_i32 = arith.constant 0 : i32
    %c0_i32_0 = arith.constant 0 : i32
    %c0_i32_1 = arith.constant 0 : i32
    return %c0_i32, %c0_i32_0 : i32, i32
  }
  func.func @transform_2(%arg0: i32) -> (i32, i32) {
    %c0_i32 = arith.constant 0 : i32
    %c0_i32_0 = arith.constant 0 : i32
    %c0_i32_1 = arith.constant 0 : i32
    return %c0_i32, %c0_i32_0 : i32, i32
  }
  func.func @transform_3(%arg0: i32) -> (i32, i32, i32, i32) {
    %c0_i32 = arith.constant 0 : i32
    %c0_i32_0 = arith.constant 0 : i32
    %c0_i32_1 = arith.constant 0 : i32
    %c0_i32_2 = arith.constant 0 : i32
    return %arg0, %c0_i32, %c0_i32_0, %c0_i32_1 : i32, i32, i32, i32
  }
}

module attributes {stable_mosaic.version = 11 : i64} {
  func.func @_conv_pool_kernel(%arg0: i32, %arg1: memref<1x16x16x800xbf16, #tpu.memory_space<vmem>>, %arg2: memref<800x32xbf16, #tpu.memory_space<vmem>>, %arg3: memref<1x32xf32, #tpu.memory_space<vmem>>, %arg4: memref<1x8x8x32xbf16, #tpu.memory_space<vmem>>, %arg5: memref<8x16x32xf32, #tpu.memory_space<vmem>>) attributes {dimension_semantics = [#tpu.dimension_semantics<parallel>], iteration_bounds = array<i64: 2>, scalar_prefetch = 0 : i64, scratch_operands = 1 : i64, tpu.core_type = #tpu.core_type<tc>, window_params = [{transform_indices = @transform_0, window_bounds = array<i64: 1, 16, 16, 800>}, {pipeline_mode = #tpu.pipeline_mode<synchronous>, transform_indices = @transform_1, window_bounds = array<i64: 800, 32>}, {pipeline_mode = #tpu.pipeline_mode<synchronous>, transform_indices = @transform_2, window_bounds = array<i64: 1, 32>}, {transform_indices = @transform_3, window_bounds = array<i64: 1, 8, 8, 32>}]} {
    %c0 = arith.constant 0 : index
    %c0_0 = arith.constant 0 : index
    %c0_1 = arith.constant 0 : index
    %c0_2 = arith.constant 0 : index
    %0 = vector.load %arg1[%c0, %c0_0, %c0_1, %c0_2] : memref<1x16x16x800xbf16, #tpu.memory_space<vmem>>, vector<1x16x16x800xbf16>
    %1 = vector.shape_cast %0 : vector<1x16x16x800xbf16> to vector<256x800xbf16>
    %c0_3 = arith.constant 0 : index
    %c0_4 = arith.constant 0 : index
    %2 = vector.load %arg2[%c0_3, %c0_4] : memref<800x32xbf16, #tpu.memory_space<vmem>>, vector<800x32xbf16>
    %cst = arith.constant dense<0.000000e+00> : vector<256x32xf32>
    %3 = tpu.matmul %1, %2, %cst {dimension_numbers = #tpu.dot_dimension_numbers<[1], [0], [0], [1], [0, 0, 1, 1], [], []>} : vector<256x800xbf16>, vector<800x32xbf16>, vector<256x32xf32> -> vector<256x32xf32>
    %4 = vector.shape_cast %3 : vector<256x32xf32> to vector<8x2x16x32xf32>
    %5 = vector.extract_strided_slice %4 {offsets = [0, 0, 0, 0], sizes = [8, 1, 16, 32], strides = [1, 1, 1, 1]} : vector<8x2x16x32xf32> to vector<8x1x16x32xf32>
    %6 = vector.shape_cast %5 : vector<8x1x16x32xf32> to vector<8x16x32xf32>
    %7 = vector.extract_strided_slice %4 {offsets = [0, 1, 0, 0], sizes = [8, 1, 16, 32], strides = [1, 1, 1, 1]} : vector<8x2x16x32xf32> to vector<8x1x16x32xf32>
    %8 = vector.shape_cast %7 : vector<8x1x16x32xf32> to vector<8x16x32xf32>
    %9 = arith.maximumf %6, %8 : vector<8x16x32xf32>
    %c0_5 = arith.constant 0 : index
    %c0_6 = arith.constant 0 : index
    %c0_7 = arith.constant 0 : index
    %10 = vector.load %arg5[%c0_5, %c0_6, %c0_7] : memref<8x16x32xf32, #tpu.memory_space<vmem>>, vector<8x16x32xf32>
    tpu.vector_store %arg5[%c0_5, %c0_6, %c0_7], %9 {strides = array<i32>} : memref<8x16x32xf32, #tpu.memory_space<vmem>>, vector<8x16x32xf32>,
    %c0_8 = arith.constant 0 : index
    %c0_9 = arith.constant 0 : index
    %c0_10 = arith.constant 0 : index
    %11 = tpu.strided_load %arg5[%c0_8, %c0_9, %c0_10] {strides = array<i32: 1, 2, 1>} : memref<8x16x32xf32, #tpu.memory_space<vmem>>, vector<8x8x32xf32>
    %c0_11 = arith.constant 0 : index
    %c1 = arith.constant 1 : index
    %c0_12 = arith.constant 0 : index
    %12 = tpu.strided_load %arg5[%c0_11, %c1, %c0_12] {strides = array<i32: 1, 2, 1>} : memref<8x16x32xf32, #tpu.memory_space<vmem>>, vector<8x8x32xf32>
    %13 = arith.maximumf %11, %12 : vector<8x8x32xf32>
    %14 = vector.shape_cast %13 : vector<8x8x32xf32> to vector<1x8x8x32xf32>
    %c0_13 = arith.constant 0 : index
    %c0_14 = arith.constant 0 : index
    %15 = vector.load %arg3[%c0_13, %c0_14] : memref<1x32xf32, #tpu.memory_space<vmem>>, vector<1x32xf32>
    %16 = vector.shape_cast %15 : vector<1x32xf32> to vector<1x1x1x32xf32>
    %17 = vector.broadcast %16 : vector<1x1x1x32xf32> to vector<1x8x8x32xf32>
    %18 = arith.addf %14, %17 : vector<1x8x8x32xf32>
    %19 = arith.truncf %18 : vector<1x8x8x32xf32> to vector<1x8x8x32xbf16>
    %c0_15 = arith.constant 0 : index
    %c0_16 = arith.constant 0 : index
    %c0_17 = arith.constant 0 : index
    %c0_18 = arith.constant 0 : index
    %20 = vector.load %arg4[%c0_15, %c0_16, %c0_17, %c0_18] : memref<1x8x8x32xbf16, #tpu.memory_space<vmem>>, vector<1x8x8x32xbf16>
    tpu.vector_store %arg4[%c0_15, %c0_16, %c0_17, %c0_18], %19 {strides = array<i32>} : memref<1x8x8x32xbf16, #tpu.memory_space<vmem>>, vector<1x8x8x32xbf16>,
    return
  }
  func.func @transform_0(%arg0: i32) -> (i32, i32, i32, i32) {
    %c0_i32 = arith.constant 0 : i32
    %c0_i32_0 = arith.constant 0 : i32
    %c0_i32_1 = arith.constant 0 : i32
    %c0_i32_2 = arith.constant 0 : i32
    return %arg0, %c0_i32, %c0_i32_0, %c0_i32_1 : i32, i32, i32, i32
  }
  func.func @transform_1(%arg0: i32) -> (i32, i32) {
    %c0_i32 = arith.constant 0 : i32
    %c0_i32_0 = arith.constant 0 : i32
    %c0_i32_1 = arith.constant 0 : i32
    return %c0_i32, %c0_i32_0 : i32, i32
  }
  func.func @transform_2(%arg0: i32) -> (i32, i32) {
    %c0_i32 = arith.constant 0 : i32
    %c0_i32_0 = arith.constant 0 : i32
    %c0_i32_1 = arith.constant 0 : i32
    return %c0_i32, %c0_i32_0 : i32, i32
  }
  func.func @transform_3(%arg0: i32) -> (i32, i32, i32, i32) {
    %c0_i32 = arith.constant 0 : i32
    %c0_i32_0 = arith.constant 0 : i32
    %c0_i32_1 = arith.constant 0 : i32
    %c0_i32_2 = arith.constant 0 : i32
    return %arg0, %c0_i32, %c0_i32_0, %c0_i32_1 : i32, i32, i32, i32
  }
}

module attributes {stable_mosaic.version = 11 : i64} {
  func.func @_conv_pool_kernel(%arg0: i32, %arg1: memref<1x8x8x800xbf16, #tpu.memory_space<vmem>>, %arg2: memref<800x64xbf16, #tpu.memory_space<vmem>>, %arg3: memref<1x64xf32, #tpu.memory_space<vmem>>, %arg4: memref<1x4x4x64xbf16, #tpu.memory_space<vmem>>, %arg5: memref<4x8x64xf32, #tpu.memory_space<vmem>>) attributes {dimension_semantics = [#tpu.dimension_semantics<parallel>], iteration_bounds = array<i64: 2>, scalar_prefetch = 0 : i64, scratch_operands = 1 : i64, tpu.core_type = #tpu.core_type<tc>, window_params = [{transform_indices = @transform_0, window_bounds = array<i64: 1, 8, 8, 800>}, {pipeline_mode = #tpu.pipeline_mode<synchronous>, transform_indices = @transform_1, window_bounds = array<i64: 800, 64>}, {pipeline_mode = #tpu.pipeline_mode<synchronous>, transform_indices = @transform_2, window_bounds = array<i64: 1, 64>}, {transform_indices = @transform_3, window_bounds = array<i64: 1, 4, 4, 64>}]} {
    %c0 = arith.constant 0 : index
    %c0_0 = arith.constant 0 : index
    %c0_1 = arith.constant 0 : index
    %c0_2 = arith.constant 0 : index
    %0 = vector.load %arg1[%c0, %c0_0, %c0_1, %c0_2] : memref<1x8x8x800xbf16, #tpu.memory_space<vmem>>, vector<1x8x8x800xbf16>
    %1 = vector.shape_cast %0 : vector<1x8x8x800xbf16> to vector<64x800xbf16>
    %c0_3 = arith.constant 0 : index
    %c0_4 = arith.constant 0 : index
    %2 = vector.load %arg2[%c0_3, %c0_4] : memref<800x64xbf16, #tpu.memory_space<vmem>>, vector<800x64xbf16>
    %cst = arith.constant dense<0.000000e+00> : vector<64x64xf32>
    %3 = tpu.matmul %1, %2, %cst {dimension_numbers = #tpu.dot_dimension_numbers<[1], [0], [0], [1], [0, 0, 1, 1], [], []>} : vector<64x800xbf16>, vector<800x64xbf16>, vector<64x64xf32> -> vector<64x64xf32>
    %4 = vector.shape_cast %3 : vector<64x64xf32> to vector<4x2x8x64xf32>
    %5 = vector.extract_strided_slice %4 {offsets = [0, 0, 0, 0], sizes = [4, 1, 8, 64], strides = [1, 1, 1, 1]} : vector<4x2x8x64xf32> to vector<4x1x8x64xf32>
    %6 = vector.shape_cast %5 : vector<4x1x8x64xf32> to vector<4x8x64xf32>
    %7 = vector.extract_strided_slice %4 {offsets = [0, 1, 0, 0], sizes = [4, 1, 8, 64], strides = [1, 1, 1, 1]} : vector<4x2x8x64xf32> to vector<4x1x8x64xf32>
    %8 = vector.shape_cast %7 : vector<4x1x8x64xf32> to vector<4x8x64xf32>
    %9 = arith.maximumf %6, %8 : vector<4x8x64xf32>
    %c0_5 = arith.constant 0 : index
    %c0_6 = arith.constant 0 : index
    %c0_7 = arith.constant 0 : index
    %10 = vector.load %arg5[%c0_5, %c0_6, %c0_7] : memref<4x8x64xf32, #tpu.memory_space<vmem>>, vector<4x8x64xf32>
    tpu.vector_store %arg5[%c0_5, %c0_6, %c0_7], %9 {strides = array<i32>} : memref<4x8x64xf32, #tpu.memory_space<vmem>>, vector<4x8x64xf32>,
    %c0_8 = arith.constant 0 : index
    %c0_9 = arith.constant 0 : index
    %c0_10 = arith.constant 0 : index
    %11 = tpu.strided_load %arg5[%c0_8, %c0_9, %c0_10] {strides = array<i32: 1, 2, 1>} : memref<4x8x64xf32, #tpu.memory_space<vmem>>, vector<4x4x64xf32>
    %c0_11 = arith.constant 0 : index
    %c1 = arith.constant 1 : index
    %c0_12 = arith.constant 0 : index
    %12 = tpu.strided_load %arg5[%c0_11, %c1, %c0_12] {strides = array<i32: 1, 2, 1>} : memref<4x8x64xf32, #tpu.memory_space<vmem>>, vector<4x4x64xf32>
    %13 = arith.maximumf %11, %12 : vector<4x4x64xf32>
    %14 = vector.shape_cast %13 : vector<4x4x64xf32> to vector<1x4x4x64xf32>
    %c0_13 = arith.constant 0 : index
    %c0_14 = arith.constant 0 : index
    %15 = vector.load %arg3[%c0_13, %c0_14] : memref<1x64xf32, #tpu.memory_space<vmem>>, vector<1x64xf32>
    %16 = vector.shape_cast %15 : vector<1x64xf32> to vector<1x1x1x64xf32>
    %17 = vector.broadcast %16 : vector<1x1x1x64xf32> to vector<1x4x4x64xf32>
    %18 = arith.addf %14, %17 : vector<1x4x4x64xf32>
    %19 = arith.truncf %18 : vector<1x4x4x64xf32> to vector<1x4x4x64xbf16>
    %c0_15 = arith.constant 0 : index
    %c0_16 = arith.constant 0 : index
    %c0_17 = arith.constant 0 : index
    %c0_18 = arith.constant 0 : index
    %20 = vector.load %arg4[%c0_15, %c0_16, %c0_17, %c0_18] : memref<1x4x4x64xbf16, #tpu.memory_space<vmem>>, vector<1x4x4x64xbf16>
    tpu.vector_store %arg4[%c0_15, %c0_16, %c0_17, %c0_18], %19 {strides = array<i32>} : memref<1x4x4x64xbf16, #tpu.memory_space<vmem>>, vector<1x4x4x64xbf16>,
    return
  }
  func.func @transform_0(%arg0: i32) -> (i32, i32, i32, i32) {
    %c0_i32 = arith.constant 0 : i32
    %c0_i32_0 = arith.constant 0 : i32
    %c0_i32_1 = arith.constant 0 : i32
    %c0_i32_2 = arith.constant 0 : i32
    return %arg0, %c0_i32, %c0_i32_0, %c0_i32_1 : i32, i32, i32, i32
  }
  func.func @transform_1(%arg0: i32) -> (i32, i32) {
    %c0_i32 = arith.constant 0 : i32
    %c0_i32_0 = arith.constant 0 : i32
    %c0_i32_1 = arith.constant 0 : i32
    return %c0_i32, %c0_i32_0 : i32, i32
  }
  func.func @transform_2(%arg0: i32) -> (i32, i32) {
    %c0_i32 = arith.constant 0 : i32
    %c0_i32_0 = arith.constant 0 : i32
    %c0_i32_1 = arith.constant 0 : i32
    return %c0_i32, %c0_i32_0 : i32, i32
  }
  func.func @transform_3(%arg0: i32) -> (i32, i32, i32, i32) {
    %c0_i32 = arith.constant 0 : i32
    %c0_i32_0 = arith.constant 0 : i32
    %c0_i32_1 = arith.constant 0 : i32
    %c0_i32_2 = arith.constant 0 : i32
    return %arg0, %c0_i32, %c0_i32_0, %c0_i32_1 : i32, i32, i32, i32
  }
}

module attributes {stable_mosaic.version = 11 : i64} {
  func.func @_mlp_kernel(%arg0: i32, %arg1: memref<2x1024xbf16, #tpu.memory_space<vmem>>, %arg2: memref<1024x64xbf16, #tpu.memory_space<vmem>>, %arg3: memref<1x64xf32, #tpu.memory_space<vmem>>, %arg4: memref<64x10xbf16, #tpu.memory_space<vmem>>, %arg5: memref<1x10xf32, #tpu.memory_space<vmem>>, %arg6: memref<2x10xf32, #tpu.memory_space<vmem>>) attributes {dimension_semantics = [#tpu.dimension_semantics<parallel>], iteration_bounds = array<i64: 1>, scalar_prefetch = 0 : i64, scratch_operands = 0 : i64, tpu.core_type = #tpu.core_type<tc>, window_params = [{transform_indices = @transform_0, window_bounds = array<i64: 2, 1024>}, {pipeline_mode = #tpu.pipeline_mode<synchronous>, transform_indices = @transform_1, window_bounds = array<i64: 1024, 64>}, {pipeline_mode = #tpu.pipeline_mode<synchronous>, transform_indices = @transform_2, window_bounds = array<i64: 1, 64>}, {pipeline_mode = #tpu.pipeline_mode<synchronous>, transform_indices = @transform_3, window_bounds = array<i64: 64, 10>}, {pipeline_mode = #tpu.pipeline_mode<synchronous>, transform_indices = @transform_4, window_bounds = array<i64: 1, 10>}, {transform_indices = @transform_5, window_bounds = array<i64: 2, 10>}]} {
    %c0 = arith.constant 0 : index
    %c0_0 = arith.constant 0 : index
    %0 = vector.load %arg1[%c0, %c0_0] : memref<2x1024xbf16, #tpu.memory_space<vmem>>, vector<2x1024xbf16>
    %c0_1 = arith.constant 0 : index
    %c0_2 = arith.constant 0 : index
    %1 = vector.load %arg2[%c0_1, %c0_2] : memref<1024x64xbf16, #tpu.memory_space<vmem>>, vector<1024x64xbf16>
    %cst = arith.constant dense<0.000000e+00> : vector<2x64xf32>
    %2 = tpu.matmul %0, %1, %cst {dimension_numbers = #tpu.dot_dimension_numbers<[1], [0], [0], [1], [0, 0, 1, 1], [], []>} : vector<2x1024xbf16>, vector<1024x64xbf16>, vector<2x64xf32> -> vector<2x64xf32>
    %c0_3 = arith.constant 0 : index
    %c0_4 = arith.constant 0 : index
    %3 = vector.load %arg3[%c0_3, %c0_4] : memref<1x64xf32, #tpu.memory_space<vmem>>, vector<1x64xf32>
    %4 = vector.broadcast %3 : vector<1x64xf32> to vector<2x64xf32>
    %5 = arith.addf %2, %4 : vector<2x64xf32>
    %6 = arith.truncf %5 : vector<2x64xf32> to vector<2x64xbf16>
    %c0_5 = arith.constant 0 : index
    %c0_6 = arith.constant 0 : index
    %7 = vector.load %arg4[%c0_5, %c0_6] : memref<64x10xbf16, #tpu.memory_space<vmem>>, vector<64x10xbf16>
    %cst_7 = arith.constant dense<0.000000e+00> : vector<2x10xf32>
    %8 = tpu.matmul %6, %7, %cst_7 {dimension_numbers = #tpu.dot_dimension_numbers<[1], [0], [0], [1], [0, 0, 1, 1], [], []>} : vector<2x64xbf16>, vector<64x10xbf16>, vector<2x10xf32> -> vector<2x10xf32>
    %c0_8 = arith.constant 0 : index
    %c0_9 = arith.constant 0 : index
    %9 = vector.load %arg5[%c0_8, %c0_9] : memref<1x10xf32, #tpu.memory_space<vmem>>, vector<1x10xf32>
    %10 = vector.broadcast %9 : vector<1x10xf32> to vector<2x10xf32>
    %11 = arith.addf %8, %10 : vector<2x10xf32>
    %c0_10 = arith.constant 0 : index
    %c0_11 = arith.constant 0 : index
    %12 = vector.load %arg6[%c0_10, %c0_11] : memref<2x10xf32, #tpu.memory_space<vmem>>, vector<2x10xf32>
    tpu.vector_store %arg6[%c0_10, %c0_11], %11 {strides = array<i32>} : memref<2x10xf32, #tpu.memory_space<vmem>>, vector<2x10xf32>,
    return
  }
  func.func @transform_0(%arg0: i32) -> (i32, i32) {
    %c0_i32 = arith.constant 0 : i32
    %c0_i32_0 = arith.constant 0 : i32
    return %arg0, %c0_i32 : i32, i32
  }
  func.func @transform_1(%arg0: i32) -> (i32, i32) {
    %c0_i32 = arith.constant 0 : i32
    %c0_i32_0 = arith.constant 0 : i32
    %c0_i32_1 = arith.constant 0 : i32
    return %c0_i32, %c0_i32_0 : i32, i32
  }
  func.func @transform_2(%arg0: i32) -> (i32, i32) {
    %c0_i32 = arith.constant 0 : i32
    %c0_i32_0 = arith.constant 0 : i32
    %c0_i32_1 = arith.constant 0 : i32
    return %c0_i32, %c0_i32_0 : i32, i32
  }
  func.func @transform_3(%arg0: i32) -> (i32, i32) {
    %c0_i32 = arith.constant 0 : i32
    %c0_i32_0 = arith.constant 0 : i32
    %c0_i32_1 = arith.constant 0 : i32
    return %c0_i32, %c0_i32_0 : i32, i32
  }
  func.func @transform_4(%arg0: i32) -> (i32, i32) {
    %c0_i32 = arith.constant 0 : i32
    %c0_i32_0 = arith.constant 0 : i32
    %c0_i32_1 = arith.constant 0 : i32
    return %c0_i32, %c0_i32_0 : i32, i32
  }
  func.func @transform_5(%arg0: i32) -> (i32, i32) {
    %c0_i32 = arith.constant 0 : i32
    %c0_i32_0 = arith.constant 0 : i32
    return %arg0, %c0_i32 : i32, i32
  }
}

</mosaic_0001>

<llo_original>
// kernel: jlnet_forward.4
$region0: #{jlnet_forward.4}
  #allocation0 [shape = 'u32[]', space=smem, size = 0x4, offset = 0x4, fixed_abs, tag = 'smem constant byte address 0x4 - core index']
  #allocation1 [shape = 'u32[144,128]{1,0:T(1,128)}', space=vmem, size = 0x12000, scoped, tag = 'internal scratch']
  #allocation2 [shape = 'f32[16,32,32]{2,1,0:T(8,128)}', space=vmem, size = 0x40000, scoped, tag = 'scratch operand']
  %s0 = inlined_call_operand.vmem [shape: bf16[2,32,32,75], index: 0, kind: input, shape index: {}]
  %s1 = inlined_call_operand.vmem [shape: bf16[75,32], index: 1, kind: input, shape index: {}]
  %s2 = inlined_call_operand.vmem [shape: f32[1,32], index: 2, kind: input, shape index: {}]
  %s3 = inlined_call_operand.vmem [shape: bf16[2,16,16,32], index: 3, kind: output, shape index: {}]
  %s4 = sld [smem:[#allocation0]]
  $region45: #{jlnet_forward.4} parent=0
    _
  %s6 = ssub.s32 1, %s4
  %s7 = scalar_select 0, %s6, %s4
  loop: start=0, step=1, limit=4
  $region2: #{jlnet_forward.4} parent=0 // loop_pre_header
    _
  $region3: #{jlnet_forward.4} parent=0 // loop_header
    %s9 = sphi 0, %s13
    %p10 = scmp.ge.s32.totalorder %s9, 4
    %s19 = sphi 0, %s21
    %s22 = sphi 0, %s19
    %s23 = sphi 0, %s22
    %s39 = sphi 0, %s23
    %s43 = sphi 0, %s43
    %s45 = sphi 0, %s43
    %s46 = sphi 0, %s45
    %s60 = sphi 0, %s46
    %s64 = sphi 0, %s64
    %s66 = sphi 0, %s64
    %s67 = sphi 0, %s66
    %s81 = sphi 0, %s67
    %s87 = sphi 0, %s89
    %s90 = sphi 0, %s87
    %s91 = sphi 0, %s90
    %s107 = sphi 0, %s91
  $region4: #{jlnet_forward.4} parent=0 // loop_header_branch
    %12 = sbr.rel (%p10) target = $region8
  $region5: #{jlnet_forward.4} parent=0 // loop_body
    %s14 = ssub.s32 %s9, 1
    %s15 = ssub.s32 %s9, 2
    %s16 = sadd.s32 %s9, 1
    %s17 = ssub.s32 %s9, %s16
    %p18 = scmp.eq.s32.totalorder %s17, 0
    %s20 = sadd.s32 %s19, 1
    %s21 = scalar_select %p18, %s19, %s20
    %p24 = pneg %p18
    %p25 = scmp.eq.s32.totalorder %s9, 1
    %p26 = por %p24, %p25
    %p27 = scmp.ne.s32.totalorder %s19, %s22
    %p28 = scmp.eq.s32.totalorder %s9, 0
    %p29 = por %p27, %p28
    %p30 = scmp.ne.s32.totalorder %s19, %s22
    %p31 = scmp.eq.s32.totalorder %s14, 1
    %p32 = por %p30, %p31
    %p33 = scmp.ne.s32.totalorder %s22, %s23
    %p34 = scmp.eq.s32.totalorder %s14, 0
    %p35 = por %p33, %p34
    %p36 = scmp.ne.s32.totalorder %s22, %s23
    %p37 = scmp.eq.s32.totalorder %s15, 1
    %p38 = por %p36, %p37
    %p40 = scmp.ne.s32.totalorder %s23, %s39
    %p41 = scmp.eq.s32.totalorder %s15, 0
    %p42 = por %p40, %p41
    %s44 = sadd.s32 %s43, 1
    %p47 = scmp.eq.s32.totalorder %s9, 1
    %p48 = scmp.ne.s32.totalorder %s43, %s45
    %p49 = scmp.eq.s32.totalorder %s9, 0
    %p50 = por %p48, %p49
    %p51 = scmp.ne.s32.totalorder %s43, %s45
    %p52 = scmp.eq.s32.totalorder %s14, 1
    %p53 = por %p51, %p52
    %p54 = scmp.ne.s32.totalorder %s45, %s46
    %p55 = scmp.eq.s32.totalorder %s14, 0
    %p56 = por %p54, %p55
    %p57 = scmp.ne.s32.totalorder %s45, %s46
    %p58 = scmp.eq.s32.totalorder %s15, 1
    %p59 = por %p57, %p58
    %p61 = scmp.ne.s32.totalorder %s46, %s60
    %p62 = scmp.eq.s32.totalorder %s15, 0
    %p63 = por %p61, %p62
    %s65 = sadd.s32 %s64, 1
    %p68 = scmp.eq.s32.totalorder %s9, 1
    %p69 = scmp.ne.s32.totalorder %s64, %s66
    %p70 = scmp.eq.s32.totalorder %s9, 0
    %p71 = por %p69, %p70
    %p72 = scmp.ne.s32.totalorder %s64, %s66
    %p73 = scmp.eq.s32.totalorder %s14, 1
    %p74 = por %p72, %p73
    %p75 = scmp.ne.s32.totalorder %s66, %s67
    %p76 = scmp.eq.s32.totalorder %s14, 0
    %p77 = por %p75, %p76
    %p78 = scmp.ne.s32.totalorder %s66, %s67
    %p79 = scmp.eq.s32.totalorder %s15, 1
    %p80 = por %p78, %p79
    %p82 = scmp.ne.s32.totalorder %s67, %s81
    %p83 = scmp.eq.s32.totalorder %s15, 0
    %p84 = por %p82, %p83
    %s85 = ssub.s32 %s9, %s16
    %p86 = scmp.eq.s32.totalorder %s85, 0
    %s88 = sadd.s32 %s87, 1
    %s89 = scalar_select %p86, %s87, %s88
    %p92 = pneg %p86
    %p93 = scmp.eq.s32.totalorder %s9, 1
    %p94 = por %p92, %p93
    %p95 = scmp.ne.s32.totalorder %s87, %s90
    %p96 = scmp.eq.s32.totalorder %s9, 0
    %p97 = por %p95, %p96
    %p98 = scmp.ne.s32.totalorder %s87, %s90
    %p99 = scmp.eq.s32.totalorder %s14, 1
    %p100 = por %p98, %p99
    %p101 = scmp.ne.s32.totalorder %s90, %s91
    %p102 = scmp.eq.s32.totalorder %s14, 0
    %p103 = por %p101, %p102
    %p104 = scmp.ne.s32.totalorder %s90, %s91
    %p105 = scmp.eq.s32.totalorder %s15, 1
    %p106 = por %p104, %p105
    %p108 = scmp.ne.s32.totalorder %s91, %s107
    %p109 = scmp.eq.s32.totalorder %s15, 0
    %p110 = por %p108, %p109
    %p111 = scmp.le.s32.totalorder 1, %s9
    %p112 = scmp.lt.s32.totalorder %s9, 3
    %p113 = pnand %p111, %p112
    %p114 = pneg %p113
    // Predicated region
    $region9: #{jlnet_forward.4} parent=5 // pred_check
      _
    $region10: #{jlnet_forward.4} parent=5 // pred_check_branch
      %116 = sbr.rel (%p113) target = $region12
    $region11: #{jlnet_forward.4} parent=5 // pred_region
      %s117 = ssub.s32 %s9, 1
      // Predicated region
      $region13: #{jlnet_forward.4} parent=11 // pred_check
        %p118 = pneg %p56
      $region14: #{jlnet_forward.4} parent=11 // pred_check_branch
        %120 = sbr.rel (%p118) target = $region16
      $region15: #{jlnet_forward.4} parent=11 // pred_region
        _
      $region16: #{jlnet_forward.4} parent=11 // pred_fallthru
        _
      // Predicated region
      $region17: #{jlnet_forward.4} parent=11 // pred_check
        %p121 = pneg %p77
      $region18: #{jlnet_forward.4} parent=11 // pred_check_branch
        %123 = sbr.rel (%p121) target = $region20
      $region19: #{jlnet_forward.4} parent=11 // pred_region
        _
      $region20: #{jlnet_forward.4} parent=11 // pred_fallthru
        _
    $region12: #{jlnet_forward.4} parent=5 // pred_fallthru
      _
    %p124 = scmp.lt.s32.totalorder %s9, 2
    // Predicated region
    $region21: #{jlnet_forward.4} parent=5 // pred_check
      %p125 = pneg %p124
    $region22: #{jlnet_forward.4} parent=5 // pred_check_branch
      %127 = sbr.rel (%p125) target = $region24
    $region23: #{jlnet_forward.4} parent=5 // pred_region
      // Predicated region
      $region25: #{jlnet_forward.4} parent=23 // pred_check
        %p128 = pneg %p29
      $region26: #{jlnet_forward.4} parent=23 // pred_check_branch
        %130 = sbr.rel (%p128) target = $region28
      $region27: #{jlnet_forward.4} parent=23 // pred_region
        %p131 = scmp.lt.s32.totalorder %s9, 1
        %s132 = scalar_select %p131, %s9, 1
        %s133 = smul.addr %s132, 128
        %s134 = smul.addr %s133, 4
        %s135 = scalar_lea.vmem %s0, %s134
      $region28: #{jlnet_forward.4} parent=23 // pred_fallthru
        _
    $region24: #{jlnet_forward.4} parent=5 // pred_fallthru
      _
    %p136 = scmp.le.s32.totalorder 1, %s9
    %p137 = scmp.lt.s32.totalorder %s9, 3
    %p138 = pnand %p136, %p137
    %p139 = pneg %p138
    // Predicated region
    $region29: #{jlnet_forward.4} parent=5 // pred_check
      _
    $region30: #{jlnet_forward.4} parent=5 // pred_check_branch
      %141 = sbr.rel (%p138) target = $region32
    $region31: #{jlnet_forward.4} parent=5 // pred_region
      %s142 = ssub.s32 %s9, 1
      %p143 = scmp.lt.s32.totalorder %s14, 1
      %s144 = scalar_select %p143, %s14, 1
      %s145 = smul.addr %s144, 128
      %s146 = smul.addr %s145, 4
      %s147 = scalar_lea.vmem %s0, %s146
      %p148 = pneg %p35
      %p149 = pneg %p32
      %p150 = pneg %p56
      %p151 = pneg %p53
      %p152 = pneg %p77
      %p153 = pneg %p74
      %p154 = pneg %p103
      %p155 = pneg %p100
      %p156 = scmp.lt.s32.totalorder %s14, 1
      %s157 = scalar_select %p156, %s14, 1
      %s158 = smul.addr %s157, 32
      %s159 = smul.addr %s158, 4
      %s160 = scalar_lea.vmem %s3, %s159
      %p161 = scmp.lt.s32.totalorder %s14, 1
      %s162 = scalar_select %p161, %s14, 1
      %s163 = smul.addr %s162, 128
      %s164 = smul.addr %s163, 4
      %s165 = scalar_lea.vmem %s0, %s164
      %p166 = scmp.lt.s32.totalorder %s14, 1
      %s167 = scalar_select %p166, %s14, 1
      %s168 = smul.addr %s167, 32
      %s169 = smul.addr %s168, 4
      %s170 = scalar_lea.vmem %s3, %s169
      %v172 = vld [vmem:[%s165] sm:$0xf]
      %v173 = vld [vmem:[%s165 + $0x4] sm:$0xf]
      %v174 = vld [vmem:[%s165 + $0x8] sm:$0xf]
      %v175 = vld [vmem:[%s165 + $0xc] sm:$0xf]
      %v176 = vld [vmem:[%s165 + $0x10] sm:$0xf]
      %v177 = vld [vmem:[%s165 + $0x14] sm:$0xf]
      %v178 = vld [vmem:[%s165 + $0x18] sm:$0xf]
      %v179 = vld [vmem:[%s165 + $0x1c] sm:$0xf]
      %v180 = vld [vmem:[%s165 + $0x20] sm:$0xf]
      %v181 = vld [vmem:[%s165 + $0x24] sm:$0xf]
      %v182 = vld [vmem:[%s165 + $0x28] sm:$0xf]
      %v183 = vld [vmem:[%s165 + $0x2c] sm:$0xf]
      %v184 = vld [vmem:[%s165 + $0x30] sm:$0xf]
      %v185 = vld [vmem:[%s165 + $0x34] sm:$0xf]
      %v186 = vld [vmem:[%s165 + $0x38] sm:$0xf]
      %v187 = vld [vmem:[%s165 + $0x3c] sm:$0xf]
      %v188 = vld [vmem:[%s165 + $0x40] sm:$0xf]
      %v189 = vld [vmem:[%s165 + $0x44] sm:$0xf]
      %v190 = vld [vmem:[%s165 + $0x48] sm:$0xf]
      %v191 = vld [vmem:[%s165 + $0x4c] sm:$0xf]
      %v192 = vld [vmem:[%s165 + $0x50] sm:$0xf]
      %v193 = vld [vmem:[%s165 + $0x54] sm:$0xf]
      %v194 = vld [vmem:[%s165 + $0x58] sm:$0xf]
      %v195 = vld [vmem:[%s165 + $0x5c] sm:$0xf]
      %v196 = vld [vmem:[%s165 + $0x60] sm:$0xf]
      %v197 = vld [vmem:[%s165 + $0x64] sm:$0xf]
      %v198 = vld [vmem:[%s165 + $0x68] sm:$0xf]
      %v199 = vld [vmem:[%s165 + $0x6c] sm:$0xf]
      %v200 = vld [vmem:[%s165 + $0x70] sm:$0xf]
      %v201 = vld [vmem:[%s165 + $0x74] sm:$0xf]
      %v202 = vld [vmem:[%s165 + $0x78] sm:$0xf]
      %v203 = vld [vmem:[%s165 + $0x7c] sm:$0xf]
      %v204 = vld [vmem:[%s165 + $0x80] sm:$0xf]
      %v205 = vld [vmem:[%s165 + $0x84] sm:$0xf]
      %v206 = vld [vmem:[%s165 + $0x88] sm:$0xf]
      %v207 = vld [vmem:[%s165 + $0x8c] sm:$0xf]
      %v208 = vld [vmem:[%s165 + $0x90] sm:$0xf]
      %v209 = vld [vmem:[%s165 + $0x94] sm:$0xf]
      %v210 = vld [vmem:[%s165 + $0x98] sm:$0xf]
      %v211 = vld [vmem:[%s165 + $0x9c] sm:$0xf]
      %v212 = vld [vmem:[%s165 + $0xa0] sm:$0xf]
      %v213 = vld [vmem:[%s165 + $0xa4] sm:$0xf]
      %v214 = vld [vmem:[%s165 + $0xa8] sm:$0xf]
      %v215 = vld [vmem:[%s165 + $0xac] sm:$0xf]
      %v216 = vld [vmem:[%s165 + $0xb0] sm:$0xf]
      %v217 = vld [vmem:[%s165 + $0xb4] sm:$0xf]
      %v218 = vld [vmem:[%s165 + $0xb8] sm:$0xf]
      %v219 = vld [vmem:[%s165 + $0xbc] sm:$0xf]
      %v220 = vld [vmem:[%s165 + $0xc0] sm:$0xf]
      %v221 = vld [vmem:[%s165 + $0xc4] sm:$0xf]
      %v222 = vld [vmem:[%s165 + $0xc8] sm:$0xf]
      %v223 = vld [vmem:[%s165 + $0xcc] sm:$0xf]
      %v224 = vld [vmem:[%s165 + $0xd0] sm:$0xf]
      %v225 = vld [vmem:[%s165 + $0xd4] sm:$0xf]
      %v226 = vld [vmem:[%s165 + $0xd8] sm:$0xf]
      %v227 = vld [vmem:[%s165 + $0xdc] sm:$0xf]
      %v228 = vld [vmem:[%s165 + $0xe0] sm:$0xf]
      %v229 = vld [vmem:[%s165 + $0xe4] sm:$0xf]
      %v230 = vld [vmem:[%s165 + $0xe8] sm:$0xf]
      %v231 = vld [vmem:[%s165 + $0xec] sm:$0xf]
      %v232 = vld [vmem:[%s165 + $0xf0] sm:$0xf]
      %v233 = vld [vmem:[%s165 + $0xf4] sm:$0xf]
      %v234 = vld [vmem:[%s165 + $0xf8] sm:$0xf]
      %v235 = vld [vmem:[%s165 + $0xfc] sm:$0xf]
      %v236 = vld [vmem:[%s165 + $0x100] sm:$0xf]
      %v237 = vld [vmem:[%s165 + $0x104] sm:$0xf]
      %v238 = vld [vmem:[%s165 + $0x108] sm:$0xf]
      %v239 = vld [vmem:[%s165 + $0x10c] sm:$0xf]
      %v240 = vld [vmem:[%s165 + $0x110] sm:$0xf]
      %v241 = vld [vmem:[%s165 + $0x114] sm:$0xf]
      %v242 = vld [vmem:[%s165 + $0x118] sm:$0xf]
      %v243 = vld [vmem:[%s165 + $0x11c] sm:$0xf]
      %v244 = vld [vmem:[%s165 + $0x120] sm:$0xf]
      %v245 = vld [vmem:[%s165 + $0x124] sm:$0xf]
      %v246 = vld [vmem:[%s165 + $0x128] sm:$0xf]
      %v247 = vld [vmem:[%s165 + $0x12c] sm:$0xf]
      %v248 = vld [vmem:[%s165 + $0x130] sm:$0xf]
      %v249 = vld [vmem:[%s165 + $0x134] sm:$0xf]
      %v250 = vld [vmem:[%s165 + $0x138] sm:$0xf]
      %v251 = vld [vmem:[%s165 + $0x13c] sm:$0xf]
      %v252 = vld [vmem:[%s165 + $0x140] sm:$0xf]
      %v253 = vld [vmem:[%s165 + $0x144] sm:$0xf]
      %v254 = vld [vmem:[%s165 + $0x148] sm:$0xf]
      %v255 = vld [vmem:[%s165 + $0x14c] sm:$0xf]
      %v256 = vld [vmem:[%s165 + $0x150] sm:$0xf]
      %v257 = vld [vmem:[%s165 + $0x154] sm:$0xf]
      %v258 = vld [vmem:[%s165 + $0x158] sm:$0xf]
      %v259 = vld [vmem:[%s165 + $0x15c] sm:$0xf]
      %v260 = vld [vmem:[%s165 + $0x160] sm:$0xf]
      %v261 = vld [vmem:[%s165 + $0x164] sm:$0xf]
      %v262 = vld [vmem:[%s165 + $0x168] sm:$0xf]
      %v263 = vld [vmem:[%s165 + $0x16c] sm:$0xf]
      %v264 = vld [vmem:[%s165 + $0x170] sm:$0xf]
      %v265 = vld [vmem:[%s165 + $0x174] sm:$0xf]
      %v266 = vld [vmem:[%s165 + $0x178] sm:$0xf]
      %v267 = vld [vmem:[%s165 + $0x17c] sm:$0xf]
      %v268 = vld [vmem:[%s165 + $0x180] sm:$0xf]
      %v269 = vld [vmem:[%s165 + $0x184] sm:$0xf]
      %v270 = vld [vmem:[%s165 + $0x188] sm:$0xf]
      %v271 = vld [vmem:[%s165 + $0x18c] sm:$0xf]
      %v272 = vld [vmem:[%s165 + $0x190] sm:$0xf]
      %v273 = vld [vmem:[%s165 + $0x194] sm:$0xf]
      %v274 = vld [vmem:[%s165 + $0x198] sm:$0xf]
      %v275 = vld [vmem:[%s165 + $0x19c] sm:$0xf]
      %v276 = vld [vmem:[%s165 + $0x1a0] sm:$0xf]
      %v277 = vld [vmem:[%s165 + $0x1a4] sm:$0xf]
      %v278 = vld [vmem:[%s165 + $0x1a8] sm:$0xf]
      %v279 = vld [vmem:[%s165 + $0x1ac] sm:$0xf]
      %v280 = vld [vmem:[%s165 + $0x1b0] sm:$0xf]
      %v281 = vld [vmem:[%s165 + $0x1b4] sm:$0xf]
      %v282 = vld [vmem:[%s165 + $0x1b8] sm:$0xf]
      %v283 = vld [vmem:[%s165 + $0x1bc] sm:$0xf]
      %v284 = vld [vmem:[%s165 + $0x1c0] sm:$0xf]
      %v285 = vld [vmem:[%s165 + $0x1c4] sm:$0xf]
      %v286 = vld [vmem:[%s165 + $0x1c8] sm:$0xf]
      %v287 = vld [vmem:[%s165 + $0x1cc] sm:$0xf]
      %v288 = vld [vmem:[%s165 + $0x1d0] sm:$0xf]
      %v289 = vld [vmem:[%s165 + $0x1d4] sm:$0xf]
      %v290 = vld [vmem:[%s165 + $0x1d8] sm:$0xf]
      %v291 = vld [vmem:[%s165 + $0x1dc] sm:$0xf]
      %v292 = vld [vmem:[%s165 + $0x1e0] sm:$0xf]
      %v293 = vld [vmem:[%s165 + $0x1e4] sm:$0xf]
      %v294 = vld [vmem:[%s165 + $0x1e8] sm:$0xf]
      %v295 = vld [vmem:[%s165 + $0x1ec] sm:$0xf]
      %v296 = vld [vmem:[%s165 + $0x1f0] sm:$0xf]
      %v297 = vld [vmem:[%s165 + $0x1f4] sm:$0xf]
      %v298 = vld [vmem:[%s165 + $0x1f8] sm:$0xf]
      %v299 = vld [vmem:[%s165 + $0x1fc] sm:$0xf]
      %v300 = vld [vmem:[%s1] sm:$0xf]
      %v301 = vld [vmem:[%s1 + $0x4] sm:$0xf]
      %v302 = vld [vmem:[%s1 + $0x8] sm:$0xf]
      %v303 = vld [vmem:[%s1 + $0xc] sm:$0xf]
      %v304 = vld [vmem:[%s1 + $0x10] sm:$0xf]
      %v305 = vld [vmem:[%s1 + $0x14] sm:$0xf]
      %v306 = vld [vmem:[%s1 + $0x18] sm:$0xf]
      %v307 = vld [vmem:[%s1 + $0x1c] sm:$0xf]
      %v308 = vld [vmem:[%s1 + $0x20] sm:$0xf]
      %v309 = vld [vmem:[%s1 + $0x24] sm:$0x3]
      %v438 = vunpack.c.l.b16 %v172
      %v439 = vunpack.c.l.b16 %v173
      %v440 = vunpack.c.l.b16 %v174
      %v441 = vunpack.c.l.b16 %v175
      %v442 = vunpack.c.l.b16 %v176
      %v443 = vunpack.c.l.b16 %v177
      %v444 = vunpack.c.l.b16 %v178
      %v445 = vunpack.c.l.b16 %v179
      %v446 = vunpack.c.l.b16 %v180
      %v447 = vunpack.c.l.b16 %v181
      %v448 = vunpack.c.l.b16 %v182
      %v449 = vunpack.c.l.b16 %v183
      %v450 = vunpack.c.l.b16 %v184
      %v451 = vunpack.c.l.b16 %v185
      %v452 = vunpack.c.l.b16 %v186
      %v453 = vunpack.c.l.b16 %v187
      %v454 = vunpack.c.l.b16 %v188
      %v455 = vunpack.c.l.b16 %v189
      %v456 = vunpack.c.l.b16 %v190
      %v457 = vunpack.c.l.b16 %v191
      %v458 = vunpack.c.l.b16 %v192
      %v459 = vunpack.c.l.b16 %v193
      %v460 = vunpack.c.l.b16 %v194
      %v461 = vunpack.c.l.b16 %v195
      %v462 = vunpack.c.l.b16 %v196
      %v463 = vunpack.c.l.b16 %v197
      %v464 = vunpack.c.l.b16 %v198
      %v465 = vunpack.c.l.b16 %v199
      %v466 = vunpack.c.l.b16 %v200
      %v467 = vunpack.c.l.b16 %v201
      %v468 = vunpack.c.l.b16 %v202
      %v469 = vunpack.c.l.b16 %v203
      %v470 = vunpack.c.l.b16 %v204
      %v471 = vunpack.c.l.b16 %v205
      %v472 = vunpack.c.l.b16 %v206
      %v473 = vunpack.c.l.b16 %v207
      %v474 = vunpack.c.l.b16 %v208
      %v475 = vunpack.c.l.b16 %v209
      %v476 = vunpack.c.l.b16 %v210
      %v477 = vunpack.c.l.b16 %v211
      %v478 = vunpack.c.l.b16 %v212
      %v479 = vunpack.c.l.b16 %v213
      %v480 = vunpack.c.l.b16 %v214
      %v481 = vunpack.c.l.b16 %v215
      %v482 = vunpack.c.l.b16 %v216
      %v483 = vunpack.c.l.b16 %v217
      %v484 = vunpack.c.l.b16 %v218
      %v485 = vunpack.c.l.b16 %v219
      %v486 = vunpack.c.l.b16 %v220
      %v487 = vunpack.c.l.b16 %v221
      %v488 = vunpack.c.l.b16 %v222
      %v489 = vunpack.c.l.b16 %v223
      %v490 = vunpack.c.l.b16 %v224
      %v491 = vunpack.c.l.b16 %v225
      %v492 = vunpack.c.l.b16 %v226
      %v493 = vunpack.c.l.b16 %v227
      %v494 = vunpack.c.l.b16 %v228
      %v495 = vunpack.c.l.b16 %v229
      %v496 = vunpack.c.l.b16 %v230
      %v497 = vunpack.c.l.b16 %v231
      %v498 = vunpack.c.l.b16 %v232
      %v499 = vunpack.c.l.b16 %v233
      %v500 = vunpack.c.l.b16 %v234
      %v501 = vunpack.c.l.b16 %v235
      %v502 = vunpack.c.l.b16 %v236
      %v503 = vunpack.c.l.b16 %v237
      %v504 = vunpack.c.l.b16 %v238
      %v505 = vunpack.c.l.b16 %v239
      %v506 = vunpack.c.l.b16 %v240
      %v507 = vunpack.c.l.b16 %v241
      %v508 = vunpack.c.l.b16 %v242
      %v509 = vunpack.c.l.b16 %v243
      %v510 = vunpack.c.l.b16 %v244
      %v511 = vunpack.c.l.b16 %v245
      %v512 = vunpack.c.l.b16 %v246
      %v513 = vunpack.c.l.b16 %v247
      %v514 = vunpack.c.l.b16 %v248
      %v515 = vunpack.c.l.b16 %v249
      %v516 = vunpack.c.l.b16 %v250
      %v517 = vunpack.c.l.b16 %v251
      %v518 = vunpack.c.l.b16 %v252
      %v519 = vunpack.c.l.b16 %v253
      %v520 = vunpack.c.l.b16 %v254
      %v521 = vunpack.c.l.b16 %v255
      %v522 = vunpack.c.l.b16 %v256
      %v523 = vunpack.c.l.b16 %v257
      %v524 = vunpack.c.l.b16 %v258
      %v525 = vunpack.c.l.b16 %v259
      %v526 = vunpack.c.l.b16 %v260
      %v527 = vunpack.c.l.b16 %v261
      %v528 = vunpack.c.l.b16 %v262
      %v529 = vunpack.c.l.b16 %v263
      %v530 = vunpack.c.l.b16 %v264
      %v531 = vunpack.c.l.b16 %v265
      %v532 = vunpack.c.l.b16 %v266
      %v533 = vunpack.c.l.b16 %v267
      %v534 = vunpack.c.l.b16 %v268
      %v535 = vunpack.c.l.b16 %v269
      %v536 = vunpack.c.l.b16 %v270
      %v537 = vunpack.c.l.b16 %v271
      %v538 = vunpack.c.l.b16 %v272
      %v539 = vunpack.c.l.b16 %v273
      %v540 = vunpack.c.l.b16 %v274
      %v541 = vunpack.c.l.b16 %v275
      %v542 = vunpack.c.l.b16 %v276
      %v543 = vunpack.c.l.b16 %v277
      %v544 = vunpack.c.l.b16 %v278
      %v545 = vunpack.c.l.b16 %v279
      %v546 = vunpack.c.l.b16 %v280
      %v547 = vunpack.c.l.b16 %v281
      %v548 = vunpack.c.l.b16 %v282
      %v549 = vunpack.c.l.b16 %v283
      %v550 = vunpack.c.l.b16 %v284
      %v551 = vunpack.c.l.b16 %v285
      %v552 = vunpack.c.l.b16 %v286
      %v553 = vunpack.c.l.b16 %v287
      %v554 = vunpack.c.l.b16 %v288
      %v555 = vunpack.c.l.b16 %v289
      %v556 = vunpack.c.l.b16 %v290
      %v557 = vunpack.c.l.b16 %v291
      %v558 = vunpack.c.l.b16 %v292
      %v559 = vunpack.c.l.b16 %v293
      %v560 = vunpack.c.l.b16 %v294
      %v561 = vunpack.c.l.b16 %v295
      %v562 = vunpack.c.l.b16 %v296
      %v563 = vunpack.c.l.b16 %v297
      %v564 = vunpack.c.l.b16 %v298
      %v565 = vunpack.c.l.b16 %v299
      %v566 = vpack.c.b16 %v439, %v438
      %v567 = vpack.c.b16 %v441, %v440
      %v568 = vpack.c.b16 %v443, %v442
      %v569 = vpack.c.b16 %v445, %v444
      %v570 = vpack.c.b16 %v447, %v446
      %v571 = vpack.c.b16 %v449, %v448
      %v572 = vpack.c.b16 %v451, %v450
      %v573 = vpack.c.b16 %v453, %v452
      %v574 = vpack.c.b16 %v455, %v454
      %v575 = vpack.c.b16 %v457, %v456
      %v576 = vpack.c.b16 %v459, %v458
      %v577 = vpack.c.b16 %v461, %v460
      %v578 = vpack.c.b16 %v463, %v462
      %v579 = vpack.c.b16 %v465, %v464
      %v580 = vpack.c.b16 %v467, %v466
      %v581 = vpack.c.b16 %v469, %v468
      %v582 = vpack.c.b16 %v471, %v470
      %v583 = vpack.c.b16 %v473, %v472
      %v584 = vpack.c.b16 %v475, %v474
      %v585 = vpack.c.b16 %v477, %v476
      %v586 = vpack.c.b16 %v479, %v478
      %v587 = vpack.c.b16 %v481, %v480
      %v588 = vpack.c.b16 %v483, %v482
      %v589 = vpack.c.b16 %v485, %v484
      %v590 = vpack.c.b16 %v487, %v486
      %v591 = vpack.c.b16 %v489, %v488
      %v592 = vpack.c.b16 %v491, %v490
      %v593 = vpack.c.b16 %v493, %v492
      %v594 = vpack.c.b16 %v495, %v494
      %v595 = vpack.c.b16 %v497, %v496
      %v596 = vpack.c.b16 %v499, %v498
      %v597 = vpack.c.b16 %v501, %v500
      %v598 = vpack.c.b16 %v503, %v502
      %v599 = vpack.c.b16 %v505, %v504
      %v600 = vpack.c.b16 %v507, %v506
      %v601 = vpack.c.b16 %v509, %v508
      %v602 = vpack.c.b16 %v511, %v510
      %v603 = vpack.c.b16 %v513, %v512
      %v604 = vpack.c.b16 %v515, %v514
      %v605 = vpack.c.b16 %v517, %v516
      %v606 = vpack.c.b16 %v519, %v518
      %v607 = vpack.c.b16 %v521, %v520
      %v608 = vpack.c.b16 %v523, %v522
      %v609 = vpack.c.b16 %v525, %v524
      %v610 = vpack.c.b16 %v527, %v526
      %v611 = vpack.c.b16 %v529, %v528
      %v612 = vpack.c.b16 %v531, %v530
      %v613 = vpack.c.b16 %v533, %v532
      %v614 = vpack.c.b16 %v535, %v534
      %v615 = vpack.c.b16 %v537, %v536
      %v616 = vpack.c.b16 %v539, %v538
      %v617 = vpack.c.b16 %v541, %v540
      %v618 = vpack.c.b16 %v543, %v542
      %v619 = vpack.c.b16 %v545, %v544
      %v620 = vpack.c.b16 %v547, %v546
      %v621 = vpack.c.b16 %v549, %v548
      %v622 = vpack.c.b16 %v551, %v550
      %v623 = vpack.c.b16 %v553, %v552
      %v624 = vpack.c.b16 %v555, %v554
      %v625 = vpack.c.b16 %v557, %v556
      %v626 = vpack.c.b16 %v559, %v558
      %v627 = vpack.c.b16 %v561, %v560
      %v628 = vpack.c.b16 %v563, %v562
      %v629 = vpack.c.b16 %v565, %v564
      %v640 = vunpack.c.l.b16 %v300
      %v641 = vunpack.c.l.b16 %v301
      %v642 = vunpack.c.l.b16 %v302
      %v643 = vunpack.c.l.b16 %v303
      %v644 = vunpack.c.l.b16 %v304
      %v645 = vunpack.c.l.b16 %v305
      %v646 = vunpack.c.l.b16 %v306
      %v647 = vunpack.c.l.b16 %v307
      %v648 = vunpack.c.l.b16 %v308
      %v649 = vunpack.c.l.b16 %v309
      %v650 = vpack.c.b16 %v641, %v640
      %v651 = vpack.c.b16 %v643, %v642
      %v652 = vpack.c.b16 %v645, %v644
      %v653 = vpack.c.b16 %v647, %v646
      %v654 = vpack.c.b16 %v649, %v648
      %vm659 = vcmask 613376
      %v661 = vsel %vm659, %v566, 0
      %v664 = vsel %vm659, %v567, 0
      %v667 = vsel %vm659, %v568, 0
      %v670 = vsel %vm659, %v569, 0
      %v673 = vsel %vm659, %v570, 0
      %v676 = vsel %vm659, %v571, 0
      %v679 = vsel %vm659, %v572, 0
      %v682 = vsel %vm659, %v573, 0
      %v685 = vsel %vm659, %v574, 0
      %v688 = vsel %vm659, %v575, 0
      %v691 = vsel %vm659, %v576, 0
      %v694 = vsel %vm659, %v577, 0
      %v697 = vsel %vm659, %v578, 0
      %v700 = vsel %vm659, %v579, 0
      %v703 = vsel %vm659, %v580, 0
      %v706 = vsel %vm659, %v581, 0
      %v709 = vsel %vm659, %v582, 0
      %v712 = vsel %vm659, %v583, 0
      %v715 = vsel %vm659, %v584, 0
      %v718 = vsel %vm659, %v585, 0
      %v721 = vsel %vm659, %v586, 0
      %v724 = vsel %vm659, %v587, 0
      %v727 = vsel %vm659, %v588, 0
      %v730 = vsel %vm659, %v589, 0
      %v733 = vsel %vm659, %v590, 0
      %v736 = vsel %vm659, %v591, 0
      %v739 = vsel %vm659, %v592, 0
      %v742 = vsel %vm659, %v593, 0
      %v745 = vsel %vm659, %v594, 0
      %v748 = vsel %vm659, %v595, 0
      %v751 = vsel %vm659, %v596, 0
      %v754 = vsel %vm659, %v597, 0
      %v757 = vsel %vm659, %v598, 0
      %v760 = vsel %vm659, %v599, 0
      %v763 = vsel %vm659, %v600, 0
      %v766 = vsel %vm659, %v601, 0
      %v769 = vsel %vm659, %v602, 0
      %v772 = vsel %vm659, %v603, 0
      %v775 = vsel %vm659, %v604, 0
      %v778 = vsel %vm659, %v605, 0
      %v781 = vsel %vm659, %v606, 0
      %v784 = vsel %vm659, %v607, 0
      %v787 = vsel %vm659, %v608, 0
      %v790 = vsel %vm659, %v609, 0
      %v793 = vsel %vm659, %v610, 0
      %v796 = vsel %vm659, %v611, 0
      %v799 = vsel %vm659, %v612, 0
      %v802 = vsel %vm659, %v613, 0
      %v805 = vsel %vm659, %v614, 0
      %v808 = vsel %vm659, %v615, 0
      %v811 = vsel %vm659, %v616, 0
      %v814 = vsel %vm659, %v617, 0
      %v817 = vsel %vm659, %v618, 0
      %v820 = vsel %vm659, %v619, 0
      %v823 = vsel %vm659, %v620, 0
      %v826 = vsel %vm659, %v621, 0
      %v829 = vsel %vm659, %v622, 0
      %v832 = vsel %vm659, %v623, 0
      %v835 = vsel %vm659, %v624, 0
      %v838 = vsel %vm659, %v625, 0
      %v841 = vsel %vm659, %v626, 0
      %v844 = vsel %vm659, %v627, 0
      %v847 = vsel %vm659, %v628, 0
      %v850 = vsel %vm659, %v629, 0
      %vm852 = vcmask 1044480
      %vm853 = vcmask 1045504
      %v854 = vsel %vm852, 4294967295, 65535
      %v855 = vsel %vm853, %v854, 0
      %v857 = vand.u32 %v654, %v855
      %859 = vmatprep.subr.bf16.mxu0 0
      %860 = vmatpush1.bf16.msra.mxu0 %v650
      %861 = vmatprep.subr.bf16.mxu0 0
      %862 = vmatpush1.bf16.msra.mxu0 %v651
      %863 = vmatprep.subr.bf16.mxu0 0
      %864 = vmatpush1.bf16.msra.mxu0 %v652
      %865 = vmatprep.subr.bf16.mxu0 0
      %866 = vmatpush1.bf16.msra.mxu0 %v653
      %867 = vmatprep.subr.bf16.mxu0 0
      %868 = vmatpush1.bf16.msra.mxu0 %v857
      %869 = vmatprep.subr.bf16.mxu0 0
      %870 = vmatpush1.bf16.msra.mxu0 0
      %871 = vmatprep.subr.bf16.mxu0 0
      %872 = vmatpush1.bf16.msra.mxu0 0
      %873 = vmatprep.subr.bf16.mxu0 0
      %874 = vmatpush1.bf16.msra.mxu0 0
      %875 = vmatprep.subr.bf16.mxu0 0
      %876 = vmatpush1.bf16.msra.mxu0 0
      %877 = vmatprep.subr.bf16.mxu0 0
      %878 = vmatpush1.bf16.msra.mxu0 0
      %879 = vmatprep.subr.bf16.mxu0 0
      %880 = vmatpush1.bf16.msra.mxu0 0
      %881 = vmatprep.subr.bf16.mxu0 0
      %882 = vmatpush1.bf16.msra.mxu0 0
      %883 = vmatprep.subr.bf16.mxu0 0
      %884 = vmatpush1.bf16.msra.mxu0 0
      %885 = vmatprep.subr.bf16.mxu0 0
      %886 = vmatpush1.bf16.msra.mxu0 0
      %887 = vmatprep.subr.bf16.mxu0 0
      %888 = vmatpush1.bf16.msra.mxu0 0
      %889 = vmatprep.subr.bf16.mxu0 0
      %890 = vmatpush1.bf16.msra.mxu0 0
      %891 = vmatprep.mubr.bf16.mxu0 0
      %892 = vmatmul.mubr.bf16.gmra.mrb[0].mxu0 %v661
      %v893 = vpop.f32.mrb[0].mxu0
      %v894 = vadd.f32 0.0, %v893
      %v895 = vpop.f32.mrb[0].mxu0
      %v896 = vpop.f32.mrb[0].mxu0
      %v897 = vadd.f32 0.0, %v896
      %v898 = vpop.f32.mrb[0].mxu0
      %899 = vmatprep.mubr.bf16.mxu0 0
      %900 = vmatmul.mubr.bf16.gmra.mrb[0].mxu0 %v664
      %v901 = vpop.f32.mrb[0].mxu0
      %v902 = vadd.f32 0.0, %v901
      %v903 = vpop.f32.mrb[0].mxu0
      %v904 = vpop.f32.mrb[0].mxu0
      %v905 = vadd.f32 0.0, %v904
      %v906 = vpop.f32.mrb[0].mxu0
      %907 = vmatprep.mubr.bf16.mxu0 0
      %908 = vmatmul.mubr.bf16.gmra.mrb[0].mxu0 %v667
      %v909 = vpop.f32.mrb[0].mxu0
      %v910 = vadd.f32 0.0, %v909
      %v911 = vpop.f32.mrb[0].mxu0
      %v912 = vpop.f32.mrb[0].mxu0
      %v913 = vadd.f32 0.0, %v912
      %v914 = vpop.f32.mrb[0].mxu0
      %915 = vmatprep.mubr.bf16.mxu0 0
      %916 = vmatmul.mubr.bf16.gmra.mrb[0].mxu0 %v670
      %v917 = vpop.f32.mrb[0].mxu0
      %v918 = vadd.f32 0.0, %v917
      %v919 = vpop.f32.mrb[0].mxu0
      %v920 = vpop.f32.mrb[0].mxu0
      %v921 = vadd.f32 0.0, %v920
      %v922 = vpop.f32.mrb[0].mxu0
      %923 = vmatprep.mubr.bf16.mxu0 0
      %924 = vmatmul.mubr.bf16.gmra.mrb[0].mxu0 %v673
      %v925 = vpop.f32.mrb[0].mxu0
      %v926 = vadd.f32 0.0, %v925
      %v927 = vpop.f32.mrb[0].mxu0
      %v928 = vpop.f32.mrb[0].mxu0
      %v929 = vadd.f32 0.0, %v928
      %v930 = vpop.f32.mrb[0].mxu0
      %931 = vmatprep.mubr.bf16.mxu0 0
      %932 = vmatmul.mubr.bf16.gmra.mrb[0].mxu0 %v676
      %v933 = vpop.f32.mrb[0].mxu0
      %v934 = vadd.f32 0.0, %v933
      %v935 = vpop.f32.mrb[0].mxu0
      %v936 = vpop.f32.mrb[0].mxu0
      %v937 = vadd.f32 0.0, %v936
      %v938 = vpop.f32.mrb[0].mxu0
      %939 = vmatprep.mubr.bf16.mxu0 0
      %940 = vmatmul.mubr.bf16.gmra.mrb[0].mxu0 %v679
      %v941 = vpop.f32.mrb[0].mxu0
      %v942 = vadd.f32 0.0, %v941
      %v943 = vpop.f32.mrb[0].mxu0
      %v944 = vpop.f32.mrb[0].mxu0
      %v945 = vadd.f32 0.0, %v944
      %v946 = vpop.f32.mrb[0].mxu0
      %947 = vmatprep.mubr.bf16.mxu0 0
      %948 = vmatmul.mubr.bf16.gmra.mrb[0].mxu0 %v682
      %v949 = vpop.f32.mrb[0].mxu0
      %v950 = vadd.f32 0.0, %v949
      %v951 = vpop.f32.mrb[0].mxu0
      %v952 = vpop.f32.mrb[0].mxu0
      %v953 = vadd.f32 0.0, %v952
      %v954 = vpop.f32.mrb[0].mxu0
      %955 = vmatprep.mubr.bf16.mxu0 0
      %956 = vmatmul.mubr.bf16.gmra.mrb[0].mxu0 %v685
      %v957 = vpop.f32.mrb[0].mxu0
      %v958 = vadd.f32 0.0, %v957
      %v959 = vpop.f32.mrb[0].mxu0
      %v960 = vpop.f32.mrb[0].mxu0
      %v961 = vadd.f32 0.0, %v960
      %v962 = vpop.f32.mrb[0].mxu0
      %963 = vmatprep.mubr.bf16.mxu0 0
      %964 = vmatmul.mubr.bf16.gmra.mrb[0].mxu0 %v688
      %v965 = vpop.f32.mrb[0].mxu0
      %v966 = vadd.f32 0.0, %v965
      %v967 = vpop.f32.mrb[0].mxu0
      %v968 = vpop.f32.mrb[0].mxu0
      %v969 = vadd.f32 0.0, %v968
      %v970 = vpop.f32.mrb[0].mxu0
      %971 = vmatprep.mubr.bf16.mxu0 0
      %972 = vmatmul.mubr.bf16.gmra.mrb[0].mxu0 %v691
      %v973 = vpop.f32.mrb[0].mxu0
      %v974 = vadd.f32 0.0, %v973
      %v975 = vpop.f32.mrb[0].mxu0
      %v976 = vpop.f32.mrb[0].mxu0
      %v977 = vadd.f32 0.0, %v976
      %v978 = vpop.f32.mrb[0].mxu0
      %979 = vmatprep.mubr.bf16.mxu0 0
      %980 = vmatmul.mubr.bf16.gmra.mrb[0].mxu0 %v694
      %v981 = vpop.f32.mrb[0].mxu0
      %v982 = vadd.f32 0.0, %v981
      %v983 = vpop.f32.mrb[0].mxu0
      %v984 = vpop.f32.mrb[0].mxu0
      %v985 = vadd.f32 0.0, %v984
      %v986 = vpop.f32.mrb[0].mxu0
      %987 = vmatprep.mubr.bf16.mxu0 0
      %988 = vmatmul.mubr.bf16.gmra.mrb[0].mxu0 %v697
      %v989 = vpop.f32.mrb[0].mxu0
      %v990 = vadd.f32 0.0, %v989
      %v991 = vpop.f32.mrb[0].mxu0
      %v992 = vpop.f32.mrb[0].mxu0
      %v993 = vadd.f32 0.0, %v992
      %v994 = vpop.f32.mrb[0].mxu0
      %995 = vmatprep.mubr.bf16.mxu0 0
      %996 = vmatmul.mubr.bf16.gmra.mrb[0].mxu0 %v700
      %v997 = vpop.f32.mrb[0].mxu0
      %v998 = vadd.f32 0.0, %v997
      %v999 = vpop.f32.mrb[0].mxu0
      %v1000 = vpop.f32.mrb[0].mxu0
      %v1001 = vadd.f32 0.0, %v1000
      %v1002 = vpop.f32.mrb[0].mxu0
      %1003 = vmatprep.mubr.bf16.mxu0 0
      %1004 = vmatmul.mubr.bf16.gmra.mrb[0].mxu0 %v703
      %v1005 = vpop.f32.mrb[0].mxu0
      %v1006 = vadd.f32 0.0, %v1005
      %v1007 = vpop.f32.mrb[0].mxu0
      %v1008 = vpop.f32.mrb[0].mxu0
      %v1009 = vadd.f32 0.0, %v1008
      %v1010 = vpop.f32.mrb[0].mxu0
      %1011 = vmatprep.mubr.bf16.mxu0 0
      %1012 = vmatmul.mubr.bf16.gmra.mrb[0].mxu0 %v706
      %v1013 = vpop.f32.mrb[0].mxu0
      %v1014 = vadd.f32 0.0, %v1013
      %v1015 = vpop.f32.mrb[0].mxu0
      %v1016 = vpop.f32.mrb[0].mxu0
      %v1017 = vadd.f32 0.0, %v1016
      %v1018 = vpop.f32.mrb[0].mxu0
      %1019 = vmatprep.mubr.bf16.mxu0 0
      %1020 = vmatmul.mubr.bf16.gmra.mrb[0].mxu0 %v709
      %v1021 = vpop.f32.mrb[0].mxu0
      %v1022 = vadd.f32 0.0, %v1021
      %v1023 = vpop.f32.mrb[0].mxu0
      %v1024 = vpop.f32.mrb[0].mxu0
      %v1025 = vadd.f32 0.0, %v1024
      %v1026 = vpop.f32.mrb[0].mxu0
      %1027 = vmatprep.mubr.bf16.mxu0 0
      %1028 = vmatmul.mubr.bf16.gmra.mrb[0].mxu0 %v712
      %v1029 = vpop.f32.mrb[0].mxu0
      %v1030 = vadd.f32 0.0, %v1029
      %v1031 = vpop.f32.mrb[0].mxu0
      %v1032 = vpop.f32.mrb[0].mxu0
      %v1033 = vadd.f32 0.0, %v1032
      %v1034 = vpop.f32.mrb[0].mxu0
      %1035 = vmatprep.mubr.bf16.mxu0 0
      %1036 = vmatmul.mubr.bf16.gmra.mrb[0].mxu0 %v715
      %v1037 = vpop.f32.mrb[0].mxu0
      %v1038 = vadd.f32 0.0, %v1037
      %v1039 = vpop.f32.mrb[0].mxu0
      %v1040 = vpop.f32.mrb[0].mxu0
      %v1041 = vadd.f32 0.0, %v1040
      %v1042 = vpop.f32.mrb[0].mxu0
      %1043 = vmatprep.mubr.bf16.mxu0 0
      %1044 = vmatmul.mubr.bf16.gmra.mrb[0].mxu0 %v718
      %v1045 = vpop.f32.mrb[0].mxu0
      %v1046 = vadd.f32 0.0, %v1045
      %v1047 = vpop.f32.mrb[0].mxu0
      %v1048 = vpop.f32.mrb[0].mxu0
      %v1049 = vadd.f32 0.0, %v1048
      %v1050 = vpop.f32.mrb[0].mxu0
      %1051 = vmatprep.mubr.bf16.mxu0 0
      %1052 = vmatmul.mubr.bf16.gmra.mrb[0].mxu0 %v721
      %v1053 = vpop.f32.mrb[0].mxu0
      %v1054 = vadd.f32 0.0, %v1053
      %v1055 = vpop.f32.mrb[0].mxu0
      %v1056 = vpop.f32.mrb[0].mxu0
      %v1057 = vadd.f32 0.0, %v1056
      %v1058 = vpop.f32.mrb[0].mxu0
      %1059 = vmatprep.mubr.bf16.mxu0 0
      %1060 = vmatmul.mubr.bf16.gmra.mrb[0].mxu0 %v724
      %v1061 = vpop.f32.mrb[0].mxu0
      %v1062 = vadd.f32 0.0, %v1061
      %v1063 = vpop.f32.mrb[0].mxu0
      %v1064 = vpop.f32.mrb[0].mxu0
      %v1065 = vadd.f32 0.0, %v1064
      %v1066 = vpop.f32.mrb[0].mxu0
      %1067 = vmatprep.mubr.bf16.mxu0 0
      %1068 = vmatmul.mubr.bf16.gmra.mrb[0].mxu0 %v727
      %v1069 = vpop.f32.mrb[0].mxu0
      %v1070 = vadd.f32 0.0, %v1069
      %v1071 = vpop.f32.mrb[0].mxu0
      %v1072 = vpop.f32.mrb[0].mxu0
      %v1073 = vadd.f32 0.0, %v1072
      %v1074 = vpop.f32.mrb[0].mxu0
      %1075 = vmatprep.mubr.bf16.mxu0 0
      %1076 = vmatmul.mubr.bf16.gmra.mrb[0].mxu0 %v730
      %v1077 = vpop.f32.mrb[0].mxu0
      %v1078 = vadd.f32 0.0, %v1077
      %v1079 = vpop.f32.mrb[0].mxu0
      %v1080 = vpop.f32.mrb[0].mxu0
      %v1081 = vadd.f32 0.0, %v1080
      %v1082 = vpop.f32.mrb[0].mxu0
      %1083 = vmatprep.mubr.bf16.mxu0 0
      %1084 = vmatmul.mubr.bf16.gmra.mrb[0].mxu0 %v733
      %v1085 = vpop.f32.mrb[0].mxu0
      %v1086 = vadd.f32 0.0, %v1085
      %v1087 = vpop.f32.mrb[0].mxu0
      %v1088 = vpop.f32.mrb[0].mxu0
      %v1089 = vadd.f32 0.0, %v1088
      %v1090 = vpop.f32.mrb[0].mxu0
      %1091 = vmatprep.mubr.bf16.mxu0 0
      %1092 = vmatmul.mubr.bf16.gmra.mrb[0].mxu0 %v736
      %v1093 = vpop.f32.mrb[0].mxu0
      %v1094 = vadd.f32 0.0, %v1093
      %v1095 = vpop.f32.mrb[0].mxu0
      %v1096 = vpop.f32.mrb[0].mxu0
      %v1097 = vadd.f32 0.0, %v1096
      %v1098 = vpop.f32.mrb[0].mxu0
      %1099 = vmatprep.mubr.bf16.mxu0 0
      %1100 = vmatmul.mubr.bf16.gmra.mrb[0].mxu0 %v739
      %v1101 = vpop.f32.mrb[0].mxu0
      %v1102 = vadd.f32 0.0, %v1101
      %v1103 = vpop.f32.mrb[0].mxu0
      %v1104 = vpop.f32.mrb[0].mxu0
      %v1105 = vadd.f32 0.0, %v1104
      %v1106 = vpop.f32.mrb[0].mxu0
      %1107 = vmatprep.mubr.bf16.mxu0 0
      %1108 = vmatmul.mubr.bf16.gmra.mrb[0].mxu0 %v742
      %v1109 = vpop.f32.mrb[0].mxu0
      %v1110 = vadd.f32 0.0, %v1109
      %v1111 = vpop.f32.mrb[0].mxu0
      %v1112 = vpop.f32.mrb[0].mxu0
      %v1113 = vadd.f32 0.0, %v1112
      %v1114 = vpop.f32.mrb[0].mxu0
      %1115 = vmatprep.mubr.bf16.mxu0 0
      %1116 = vmatmul.mubr.bf16.gmra.mrb[0].mxu0 %v745
      %v1117 = vpop.f32.mrb[0].mxu0
      %v1118 = vadd.f32 0.0, %v1117
      %v1119 = vpop.f32.mrb[0].mxu0
      %v1120 = vpop.f32.mrb[0].mxu0
      %v1121 = vadd.f32 0.0, %v1120
      %v1122 = vpop.f32.mrb[0].mxu0
      %1123 = vmatprep.mubr.bf16.mxu0 0
      %1124 = vmatmul.mubr.bf16.gmra.mrb[0].mxu0 %v748
      %v1125 = vpop.f32.mrb[0].mxu0
      %v1126 = vadd.f32 0.0, %v1125
      %v1127 = vpop.f32.mrb[0].mxu0
      %v1128 = vpop.f32.mrb[0].mxu0
      %v1129 = vadd.f32 0.0, %v1128
      %v1130 = vpop.f32.mrb[0].mxu0
      %1131 = vmatprep.mubr.bf16.mxu0 0
      %1132 = vmatmul.mubr.bf16.gmra.mrb[0].mxu0 %v751
      %v1133 = vpop.f32.mrb[0].mxu0
      %v1134 = vadd.f32 0.0, %v1133
      %v1135 = vpop.f32.mrb[0].mxu0
      %v1136 = vpop.f32.mrb[0].mxu0
      %v1137 = vadd.f32 0.0, %v1136
      %v1138 = vpop.f32.mrb[0].mxu0
      %1139 = vmatprep.mubr.bf16.mxu0 0
      %1140 = vmatmul.mubr.bf16.gmra.mrb[0].mxu0 %v754
      %v1141 = vpop.f32.mrb[0].mxu0
      %v1142 = vadd.f32 0.0, %v1141
      %v1143 = vpop.f32.mrb[0].mxu0
      %v1144 = vpop.f32.mrb[0].mxu0
      %v1145 = vadd.f32 0.0, %v1144
      %v1146 = vpop.f32.mrb[0].mxu0
      %1147 = vmatprep.mubr.bf16.mxu0 0
      %1148 = vmatmul.mubr.bf16.gmra.mrb[0].mxu0 %v757
      %v1149 = vpop.f32.mrb[0].mxu0
      %v1150 = vadd.f32 0.0, %v1149
      %v1151 = vpop.f32.mrb[0].mxu0
      %v1152 = vpop.f32.mrb[0].mxu0
      %v1153 = vadd.f32 0.0, %v1152
      %v1154 = vpop.f32.mrb[0].mxu0
      %1155 = vmatprep.mubr.bf16.mxu0 0
      %1156 = vmatmul.mubr.bf16.gmra.mrb[0].mxu0 %v760
      %v1157 = vpop.f32.mrb[0].mxu0
      %v1158 = vadd.f32 0.0, %v1157
      %v1159 = vpop.f32.mrb[0].mxu0
      %v1160 = vpop.f32.mrb[0].mxu0
      %v1161 = vadd.f32 0.0, %v1160
      %v1162 = vpop.f32.mrb[0].mxu0
      %1163 = vmatprep.mubr.bf16.mxu0 0
      %1164 = vmatmul.mubr.bf16.gmra.mrb[0].mxu0 %v763
      %v1165 = vpop.f32.mrb[0].mxu0
      %v1166 = vadd.f32 0.0, %v1165
      %v1167 = vpop.f32.mrb[0].mxu0
      %v1168 = vpop.f32.mrb[0].mxu0
      %v1169 = vadd.f32 0.0, %v1168
      %v1170 = vpop.f32.mrb[0].mxu0
      %1171 = vmatprep.mubr.bf16.mxu0 0
      %1172 = vmatmul.mubr.bf16.gmra.mrb[0].mxu0 %v766
      %v1173 = vpop.f32.mrb[0].mxu0
      %v1174 = vadd.f32 0.0, %v1173
      %v1175 = vpop.f32.mrb[0].mxu0
      %v1176 = vpop.f32.mrb[0].mxu0
      %v1177 = vadd.f32 0.0, %v1176
      %v1178 = vpop.f32.mrb[0].mxu0
      %1179 = vmatprep.mubr.bf16.mxu0 0
      %1180 = vmatmul.mubr.bf16.gmra.mrb[0].mxu0 %v769
      %v1181 = vpop.f32.mrb[0].mxu0
      %v1182 = vadd.f32 0.0, %v1181
      %v1183 = vpop.f32.mrb[0].mxu0
      %v1184 = vpop.f32.mrb[0].mxu0
      %v1185 = vadd.f32 0.0, %v1184
      %v1186 = vpop.f32.mrb[0].mxu0
      %1187 = vmatprep.mubr.bf16.mxu0 0
      %1188 = vmatmul.mubr.bf16.gmra.mrb[0].mxu0 %v772
      %v1189 = vpop.f32.mrb[0].mxu0
      %v1190 = vadd.f32 0.0, %v1189
      %v1191 = vpop.f32.mrb[0].mxu0
      %v1192 = vpop.f32.mrb[0].mxu0
      %v1193 = vadd.f32 0.0, %v1192
      %v1194 = vpop.f32.mrb[0].mxu0
      %1195 = vmatprep.mubr.bf16.mxu0 0
      %1196 = vmatmul.mubr.bf16.gmra.mrb[0].mxu0 %v775
      %v1197 = vpop.f32.mrb[0].mxu0
      %v1198 = vadd.f32 0.0, %v1197
      %v1199 = vpop.f32.mrb[0].mxu0
      %v1200 = vpop.f32.mrb[0].mxu0
      %v1201 = vadd.f32 0.0, %v1200
      %v1202 = vpop.f32.mrb[0].mxu0
      %1203 = vmatprep.mubr.bf16.mxu0 0
      %1204 = vmatmul.mubr.bf16.gmra.mrb[0].mxu0 %v778
      %v1205 = vpop.f32.mrb[0].mxu0
      %v1206 = vadd.f32 0.0, %v1205
      %v1207 = vpop.f32.mrb[0].mxu0
      %v1208 = vpop.f32.mrb[0].mxu0
      %v1209 = vadd.f32 0.0, %v1208
      %v1210 = vpop.f32.mrb[0].mxu0
      %1211 = vmatprep.mubr.bf16.mxu0 0
      %1212 = vmatmul.mubr.bf16.gmra.mrb[0].mxu0 %v781
      %v1213 = vpop.f32.mrb[0].mxu0
      %v1214 = vadd.f32 0.0, %v1213
      %v1215 = vpop.f32.mrb[0].mxu0
      %v1216 = vpop.f32.mrb[0].mxu0
      %v1217 = vadd.f32 0.0, %v1216
      %v1218 = vpop.f32.mrb[0].mxu0
      %1219 = vmatprep.mubr.bf16.mxu0 0
      %1220 = vmatmul.mubr.bf16.gmra.mrb[0].mxu0 %v784
      %v1221 = vpop.f32.mrb[0].mxu0
      %v1222 = vadd.f32 0.0, %v1221
      %v1223 = vpop.f32.mrb[0].mxu0
      %v1224 = vpop.f32.mrb[0].mxu0
      %v1225 = vadd.f32 0.0, %v1224
      %v1226 = vpop.f32.mrb[0].mxu0
      %1227 = vmatprep.mubr.bf16.mxu0 0
      %1228 = vmatmul.mubr.bf16.gmra.mrb[0].mxu0 %v787
      %v1229 = vpop.f32.mrb[0].mxu0
      %v1230 = vadd.f32 0.0, %v1229
      %v1231 = vpop.f32.mrb[0].mxu0
      %v1232 = vpop.f32.mrb[0].mxu0
      %v1233 = vadd.f32 0.0, %v1232
      %v1234 = vpop.f32.mrb[0].mxu0
      %1235 = vmatprep.mubr.bf16.mxu0 0
      %1236 = vmatmul.mubr.bf16.gmra.mrb[0].mxu0 %v790
      %v1237 = vpop.f32.mrb[0].mxu0
      %v1238 = vadd.f32 0.0, %v1237
      %v1239 = vpop.f32.mrb[0].mxu0
      %v1240 = vpop.f32.mrb[0].mxu0
      %v1241 = vadd.f32 0.0, %v1240
      %v1242 = vpop.f32.mrb[0].mxu0
      %1243 = vmatprep.mubr.bf16.mxu0 0
      %1244 = vmatmul.mubr.bf16.gmra.mrb[0].mxu0 %v793
      %v1245 = vpop.f32.mrb[0].mxu0
      %v1246 = vadd.f32 0.0, %v1245
      %v1247 = vpop.f32.mrb[0].mxu0
      %v1248 = vpop.f32.mrb[0].mxu0
      %v1249 = vadd.f32 0.0, %v1248
      %v1250 = vpop.f32.mrb[0].mxu0
      %1251 = vmatprep.mubr.bf16.mxu0 0
      %1252 = vmatmul.mubr.bf16.gmra.mrb[0].mxu0 %v796
      %v1253 = vpop.f32.mrb[0].mxu0
      %v1254 = vadd.f32 0.0, %v1253
      %v1255 = vpop.f32.mrb[0].mxu0
      %v1256 = vpop.f32.mrb[0].mxu0
      %v1257 = vadd.f32 0.0, %v1256
      %v1258 = vpop.f32.mrb[0].mxu0
      %1259 = vmatprep.mubr.bf16.mxu0 0
      %1260 = vmatmul.mubr.bf16.gmra.mrb[0].mxu0 %v799
      %v1261 = vpop.f32.mrb[0].mxu0
      %v1262 = vadd.f32 0.0, %v1261
      %v1263 = vpop.f32.mrb[0].mxu0
      %v1264 = vpop.f32.mrb[0].mxu0
      %v1265 = vadd.f32 0.0, %v1264
      %v1266 = vpop.f32.mrb[0].mxu0
      %1267 = vmatprep.mubr.bf16.mxu0 0
      %1268 = vmatmul.mubr.bf16.gmra.mrb[0].mxu0 %v802
      %v1269 = vpop.f32.mrb[0].mxu0
      %v1270 = vadd.f32 0.0, %v1269
      %v1271 = vpop.f32.mrb[0].mxu0
      %v1272 = vpop.f32.mrb[0].mxu0
      %v1273 = vadd.f32 0.0, %v1272
      %v1274 = vpop.f32.mrb[0].mxu0
      %1275 = vmatprep.mubr.bf16.mxu0 0
      %1276 = vmatmul.mubr.bf16.gmra.mrb[0].mxu0 %v805
      %v1277 = vpop.f32.mrb[0].mxu0
      %v1278 = vadd.f32 0.0, %v1277
      %v1279 = vpop.f32.mrb[0].mxu0
      %v1280 = vpop.f32.mrb[0].mxu0
      %v1281 = vadd.f32 0.0, %v1280
      %v1282 = vpop.f32.mrb[0].mxu0
      %1283 = vmatprep.mubr.bf16.mxu0 0
      %1284 = vmatmul.mubr.bf16.gmra.mrb[0].mxu0 %v808
      %v1285 = vpop.f32.mrb[0].mxu0
      %v1286 = vadd.f32 0.0, %v1285
      %v1287 = vpop.f32.mrb[0].mxu0
      %v1288 = vpop.f32.mrb[0].mxu0
      %v1289 = vadd.f32 0.0, %v1288
      %v1290 = vpop.f32.mrb[0].mxu0
      %1291 = vmatprep.mubr.bf16.mxu0 0
      %1292 = vmatmul.mubr.bf16.gmra.mrb[0].mxu0 %v811
      %v1293 = vpop.f32.mrb[0].mxu0
      %v1294 = vadd.f32 0.0, %v1293
      %v1295 = vpop.f32.mrb[0].mxu0
      %v1296 = vpop.f32.mrb[0].mxu0
      %v1297 = vadd.f32 0.0, %v1296
      %v1298 = vpop.f32.mrb[0].mxu0
      %1299 = vmatprep.mubr.bf16.mxu0 0
      %1300 = vmatmul.mubr.bf16.gmra.mrb[0].mxu0 %v814
      %v1301 = vpop.f32.mrb[0].mxu0
      %v1302 = vadd.f32 0.0, %v1301
      %v1303 = vpop.f32.mrb[0].mxu0
      %v1304 = vpop.f32.mrb[0].mxu0
      %v1305 = vadd.f32 0.0, %v1304
      %v1306 = vpop.f32.mrb[0].mxu0
      %1307 = vmatprep.mubr.bf16.mxu0 0
      %1308 = vmatmul.mubr.bf16.gmra.mrb[0].mxu0 %v817
      %v1309 = vpop.f32.mrb[0].mxu0
      %v1310 = vadd.f32 0.0, %v1309
      %v1311 = vpop.f32.mrb[0].mxu0
      %v1312 = vpop.f32.mrb[0].mxu0
      %v1313 = vadd.f32 0.0, %v1312
      %v1314 = vpop.f32.mrb[0].mxu0
      %1315 = vmatprep.mubr.bf16.mxu0 0
      %1316 = vmatmul.mubr.bf16.gmra.mrb[0].mxu0 %v820
      %v1317 = vpop.f32.mrb[0].mxu0
      %v1318 = vadd.f32 0.0, %v1317
      %v1319 = vpop.f32.mrb[0].mxu0
      %v1320 = vpop.f32.mrb[0].mxu0
      %v1321 = vadd.f32 0.0, %v1320
      %v1322 = vpop.f32.mrb[0].mxu0
      %1323 = vmatprep.mubr.bf16.mxu0 0
      %1324 = vmatmul.mubr.bf16.gmra.mrb[0].mxu0 %v823
      %v1325 = vpop.f32.mrb[0].mxu0
      %v1326 = vadd.f32 0.0, %v1325
      %v1327 = vpop.f32.mrb[0].mxu0
      %v1328 = vpop.f32.mrb[0].mxu0
      %v1329 = vadd.f32 0.0, %v1328
      %v1330 = vpop.f32.mrb[0].mxu0
      %1331 = vmatprep.mubr.bf16.mxu0 0
      %1332 = vmatmul.mubr.bf16.gmra.mrb[0].mxu0 %v826
      %v1333 = vpop.f32.mrb[0].mxu0
      %v1334 = vadd.f32 0.0, %v1333
      %v1335 = vpop.f32.mrb[0].mxu0
      %v1336 = vpop.f32.mrb[0].mxu0
      %v1337 = vadd.f32 0.0, %v1336
      %v1338 = vpop.f32.mrb[0].mxu0
      %1339 = vmatprep.mubr.bf16.mxu0 0
      %1340 = vmatmul.mubr.bf16.gmra.mrb[0].mxu0 %v829
      %v1341 = vpop.f32.mrb[0].mxu0
      %v1342 = vadd.f32 0.0, %v1341
      %v1343 = vpop.f32.mrb[0].mxu0
      %v1344 = vpop.f32.mrb[0].mxu0
      %v1345 = vadd.f32 0.0, %v1344
      %v1346 = vpop.f32.mrb[0].mxu0
      %1347 = vmatprep.mubr.bf16.mxu0 0
      %1348 = vmatmul.mubr.bf16.gmra.mrb[0].mxu0 %v832
      %v1349 = vpop.f32.mrb[0].mxu0
      %v1350 = vadd.f32 0.0, %v1349
      %v1351 = vpop.f32.mrb[0].mxu0
      %v1352 = vpop.f32.mrb[0].mxu0
      %v1353 = vadd.f32 0.0, %v1352
      %v1354 = vpop.f32.mrb[0].mxu0
      %1355 = vmatprep.mubr.bf16.mxu0 0
      %1356 = vmatmul.mubr.bf16.gmra.mrb[0].mxu0 %v835
      %v1357 = vpop.f32.mrb[0].mxu0
      %v1358 = vadd.f32 0.0, %v1357
      %v1359 = vpop.f32.mrb[0].mxu0
      %v1360 = vpop.f32.mrb[0].mxu0
      %v1361 = vadd.f32 0.0, %v1360
      %v1362 = vpop.f32.mrb[0].mxu0
      %1363 = vmatprep.mubr.bf16.mxu0 0
      %1364 = vmatmul.mubr.bf16.gmra.mrb[0].mxu0 %v838
      %v1365 = vpop.f32.mrb[0].mxu0
      %v1366 = vadd.f32 0.0, %v1365
      %v1367 = vpop.f32.mrb[0].mxu0
      %v1368 = vpop.f32.mrb[0].mxu0
      %v1369 = vadd.f32 0.0, %v1368
      %v1370 = vpop.f32.mrb[0].mxu0
      %1371 = vmatprep.mubr.bf16.mxu0 0
      %1372 = vmatmul.mubr.bf16.gmra.mrb[0].mxu0 %v841
      %v1373 = vpop.f32.mrb[0].mxu0
      %v1374 = vadd.f32 0.0, %v1373
      %v1375 = vpop.f32.mrb[0].mxu0
      %v1376 = vpop.f32.mrb[0].mxu0
      %v1377 = vadd.f32 0.0, %v1376
      %v1378 = vpop.f32.mrb[0].mxu0
      %1379 = vmatprep.mubr.bf16.mxu0 0
      %1380 = vmatmul.mubr.bf16.gmra.mrb[0].mxu0 %v844
      %v1381 = vpop.f32.mrb[0].mxu0
      %v1382 = vadd.f32 0.0, %v1381
      %v1383 = vpop.f32.mrb[0].mxu0
      %v1384 = vpop.f32.mrb[0].mxu0
      %v1385 = vadd.f32 0.0, %v1384
      %v1386 = vpop.f32.mrb[0].mxu0
      %1387 = vmatprep.mubr.bf16.mxu0 0
      %1388 = vmatmul.mubr.bf16.gmra.mrb[0].mxu0 %v847
      %v1389 = vpop.f32.mrb[0].mxu0
      %v1390 = vadd.f32 0.0, %v1389
      %v1391 = vpop.f32.mrb[0].mxu0
      %v1392 = vpop.f32.mrb[0].mxu0
      %v1393 = vadd.f32 0.0, %v1392
      %v1394 = vpop.f32.mrb[0].mxu0
      %1395 = vmatprep.mubr.bf16.mxu0 0
      %1396 = vmatmul.mubr.bf16.gmra.mrb[0].mxu0 %v850
      %v1397 = vpop.f32.mrb[0].mxu0
      %v1398 = vadd.f32 0.0, %v1397
      %v1399 = vpop.f32.mrb[0].mxu0
      %v1400 = vpop.f32.mrb[0].mxu0
      %v1401 = vadd.f32 0.0, %v1400
      %v1402 = vpop.f32.mrb[0].mxu0
      %1403 = vdwg.mxu0
      %v1404 = vmax.f32 %v894, %v910
      %v1405 = vmax.f32 %v897, %v913
      %v1406 = vmax.f32 %v902, %v918
      %v1407 = vmax.f32 %v905, %v921
      %v1408 = vmax.f32 %v926, %v942
      %v1409 = vmax.f32 %v929, %v945
      %v1410 = vmax.f32 %v934, %v950
      %v1411 = vmax.f32 %v937, %v953
      %v1412 = vmax.f32 %v958, %v974
      %v1413 = vmax.f32 %v961, %v977
      %v1414 = vmax.f32 %v966, %v982
      %v1415 = vmax.f32 %v969, %v985
      %v1416 = vmax.f32 %v990, %v1006
      %v1417 = vmax.f32 %v993, %v1009
      %v1418 = vmax.f32 %v998, %v1014
      %v1419 = vmax.f32 %v1001, %v1017
      %v1420 = vmax.f32 %v1022, %v1038
      %v1421 = vmax.f32 %v1025, %v1041
      %v1422 = vmax.f32 %v1030, %v1046
      %v1423 = vmax.f32 %v1033, %v1049
      %v1424 = vmax.f32 %v1054, %v1070
      %v1425 = vmax.f32 %v1057, %v1073
      %v1426 = vmax.f32 %v1062, %v1078
      %v1427 = vmax.f32 %v1065, %v1081
      %v1428 = vmax.f32 %v1086, %v1102
      %v1429 = vmax.f32 %v1089, %v1105
      %v1430 = vmax.f32 %v1094, %v1110
      %v1431 = vmax.f32 %v1097, %v1113
      %v1432 = vmax.f32 %v1118, %v1134
      %v1433 = vmax.f32 %v1121, %v1137
      %v1434 = vmax.f32 %v1126, %v1142
      %v1435 = vmax.f32 %v1129, %v1145
      %v1436 = vmax.f32 %v1150, %v1166
      %v1437 = vmax.f32 %v1153, %v1169
      %v1438 = vmax.f32 %v1158, %v1174
      %v1439 = vmax.f32 %v1161, %v1177
      %v1440 = vmax.f32 %v1182, %v1198
      %v1441 = vmax.f32 %v1185, %v1201
      %v1442 = vmax.f32 %v1190, %v1206
      %v1443 = vmax.f32 %v1193, %v1209
      %v1444 = vmax.f32 %v1214, %v1230
      %v1445 = vmax.f32 %v1217, %v1233
      %v1446 = vmax.f32 %v1222, %v1238
      %v1447 = vmax.f32 %v1225, %v1241
      %v1448 = vmax.f32 %v1246, %v1262
      %v1449 = vmax.f32 %v1249, %v1265
      %v1450 = vmax.f32 %v1254, %v1270
      %v1451 = vmax.f32 %v1257, %v1273
      %v1452 = vmax.f32 %v1278, %v1294
      %v1453 = vmax.f32 %v1281, %v1297
      %v1454 = vmax.f32 %v1286, %v1302
      %v1455 = vmax.f32 %v1289, %v1305
      %v1456 = vmax.f32 %v1310, %v1326
      %v1457 = vmax.f32 %v1313, %v1329
      %v1458 = vmax.f32 %v1318, %v1334
      %v1459 = vmax.f32 %v1321, %v1337
      %v1460 = vmax.f32 %v1342, %v1358
      %v1461 = vmax.f32 %v1345, %v1361
      %v1462 = vmax.f32 %v1350, %v1366
      %v1463 = vmax.f32 %v1353, %v1369
      %v1464 = vmax.f32 %v1374, %v1390
      %v1465 = vmax.f32 %v1377, %v1393
      %v1466 = vmax.f32 %v1382, %v1398
      %v1467 = vmax.f32 %v1385, %v1401
      %vm1468 = vcmask 261120
      %1469 = vst.msk [vmem:[#allocation2] sm:$0xff] %vm1468, %v1404
      %1470 = vst.msk [vmem:[#allocation2 + $0x8] sm:$0xff] %vm1468, %v1405
      %1471 = vst.msk [vmem:[#allocation2 + $0x10] sm:$0xff] %vm1468, %v1406
      %1472 = vst.msk [vmem:[#allocation2 + $0x18] sm:$0xff] %vm1468, %v1407
      %1473 = vst.msk [vmem:[#allocation2 + $0x20] sm:$0xff] %vm1468, %v1408
      %1474 = vst.msk [vmem:[#allocation2 + $0x28] sm:$0xff] %vm1468, %v1409
      %1475 = vst.msk [vmem:[#allocation2 + $0x30] sm:$0xff] %vm1468, %v1410
      %1476 = vst.msk [vmem:[#allocation2 + $0x38] sm:$0xff] %vm1468, %v1411
      %1477 = vst.msk [vmem:[#allocation2 + $0x40] sm:$0xff] %vm1468, %v1412
      %1478 = vst.msk [vmem:[#allocation2 + $0x48] sm:$0xff] %vm1468, %v1413
      %1479 = vst.msk [vmem:[#allocation2 + $0x50] sm:$0xff] %vm1468, %v1414
      %1480 = vst.msk [vmem:[#allocation2 + $0x58] sm:$0xff] %vm1468, %v1415
      %1481 = vst.msk [vmem:[#allocation2 + $0x60] sm:$0xff] %vm1468, %v1416
      %1482 = vst.msk [vmem:[#allocation2 + $0x68] sm:$0xff] %vm1468, %v1417
      %1483 = vst.msk [vmem:[#allocation2 + $0x70] sm:$0xff] %vm1468, %v1418
      %1484 = vst.msk [vmem:[#allocation2 + $0x78] sm:$0xff] %vm1468, %v1419
      %1485 = vst.msk [vmem:[#allocation2 + $0x80] sm:$0xff] %vm1468, %v1420
      %1486 = vst.msk [vmem:[#allocation2 + $0x88] sm:$0xff] %vm1468, %v1421
      %1487 = vst.msk [vmem:[#allocation2 + $0x90] sm:$0xff] %vm1468, %v1422
      %1488 = vst.msk [vmem:[#allocation2 + $0x98] sm:$0xff] %vm1468, %v1423
      %1489 = vst.msk [vmem:[#allocation2 + $0xa0] sm:$0xff] %vm1468, %v1424
      %1490 = vst.msk [vmem:[#allocation2 + $0xa8] sm:$0xff] %vm1468, %v1425
      %1491 = vst.msk [vmem:[#allocation2 + $0xb0] sm:$0xff] %vm1468, %v1426
      %1492 = vst.msk [vmem:[#allocation2 + $0xb8] sm:$0xff] %vm1468, %v1427
      %1493 = vst.msk [vmem:[#allocation2 + $0xc0] sm:$0xff] %vm1468, %v1428
      %1494 = vst.msk [vmem:[#allocation2 + $0xc8] sm:$0xff] %vm1468, %v1429
      %1495 = vst.msk [vmem:[#allocation2 + $0xd0] sm:$0xff] %vm1468, %v1430
      %1496 = vst.msk [vmem:[#allocation2 + $0xd8] sm:$0xff] %vm1468, %v1431
      %1497 = vst.msk [vmem:[#allocation2 + $0xe0] sm:$0xff] %vm1468, %v1432
      %1498 = vst.msk [vmem:[#allocation2 + $0xe8] sm:$0xff] %vm1468, %v1433
      %1499 = vst.msk [vmem:[#allocation2 + $0xf0] sm:$0xff] %vm1468, %v1434
      %1500 = vst.msk [vmem:[#allocation2 + $0xf8] sm:$0xff] %vm1468, %v1435
      %1501 = vst.msk [vmem:[#allocation2 + $0x100] sm:$0xff] %vm1468, %v1436
      %1502 = vst.msk [vmem:[#allocation2 + $0x108] sm:$0xff] %vm1468, %v1437
      %1503 = vst.msk [vmem:[#allocation2 + $0x110] sm:$0xff] %vm1468, %v1438
      %1504 = vst.msk [vmem:[#allocation2 + $0x118] sm:$0xff] %vm1468, %v1439
      %1505 = vst.msk [vmem:[#allocation2 + $0x120] sm:$0xff] %vm1468, %v1440
      %1506 = vst.msk [vmem:[#allocation2 + $0x128] sm:$0xff] %vm1468, %v1441
      %1507 = vst.msk [vmem:[#allocation2 + $0x130] sm:$0xff] %vm1468, %v1442
      %1508 = vst.msk [vmem:[#allocation2 + $0x138] sm:$0xff] %vm1468, %v1443
      %1509 = vst.msk [vmem:[#allocation2 + $0x140] sm:$0xff] %vm1468, %v1444
      %1510 = vst.msk [vmem:[#allocation2 + $0x148] sm:$0xff] %vm1468, %v1445
      %1511 = vst.msk [vmem:[#allocation2 + $0x150] sm:$0xff] %vm1468, %v1446
      %1512 = vst.msk [vmem:[#allocation2 + $0x158] sm:$0xff] %vm1468, %v1447
      %1513 = vst.msk [vmem:[#allocation2 + $0x160] sm:$0xff] %vm1468, %v1448
      %1514 = vst.msk [vmem:[#allocation2 + $0x168] sm:$0xff] %vm1468, %v1449
      %1515 = vst.msk [vmem:[#allocation2 + $0x170] sm:$0xff] %vm1468, %v1450
      %1516 = vst.msk [vmem:[#allocation2 + $0x178] sm:$0xff] %vm1468, %v1451
      %1517 = vst.msk [vmem:[#allocation2 + $0x180] sm:$0xff] %vm1468, %v1452
      %1518 = vst.msk [vmem:[#allocation2 + $0x188] sm:$0xff] %vm1468, %v1453
      %1519 = vst.msk [vmem:[#allocation2 + $0x190] sm:$0xff] %vm1468, %v1454
      %1520 = vst.msk [vmem:[#allocation2 + $0x198] sm:$0xff] %vm1468, %v1455
      %1521 = vst.msk [vmem:[#allocation2 + $0x1a0] sm:$0xff] %vm1468, %v1456
      %1522 = vst.msk [vmem:[#allocation2 + $0x1a8] sm:$0xff] %vm1468, %v1457
      %1523 = vst.msk [vmem:[#allocation2 + $0x1b0] sm:$0xff] %vm1468, %v1458
      %1524 = vst.msk [vmem:[#allocation2 + $0x1b8] sm:$0xff] %vm1468, %v1459
      %1525 = vst.msk [vmem:[#allocation2 + $0x1c0] sm:$0xff] %vm1468, %v1460
      %1526 = vst.msk [vmem:[#allocation2 + $0x1c8] sm:$0xff] %vm1468, %v1461
      %1527 = vst.msk [vmem:[#allocation2 + $0x1d0] sm:$0xff] %vm1468, %v1462
      %1528 = vst.msk [vmem:[#allocation2 + $0x1d8] sm:$0xff] %vm1468, %v1463
      %1529 = vst.msk [vmem:[#allocation2 + $0x1e0] sm:$0xff] %vm1468, %v1464
      %1530 = vst.msk [vmem:[#allocation2 + $0x1e8] sm:$0xff] %vm1468, %v1465
      %1531 = vst.msk [vmem:[#allocation2 + $0x1f0] sm:$0xff] %vm1468, %v1466
      %1532 = vst.msk [vmem:[#allocation2 + $0x1f8] sm:$0xff] %vm1468, %v1467
      %v1533 = vld [vmem:[#allocation2] ss:$2 sm:$0xff]
      %s1534 = scalar_lea.vmem [#allocation2], 16
      %v1535 = vld [vmem:[%s1534] ss:$2 sm:$0xff]
      %s1536 = scalar_lea.vmem [#allocation2], 32
      %v1537 = vld [vmem:[%s1536] ss:$2 sm:$0xff]
      %s1538 = scalar_lea.vmem [#allocation2], 48
      %v1539 = vld [vmem:[%s1538] ss:$2 sm:$0xff]
      %s1540 = scalar_lea.vmem [#allocation2], 64
      %v1541 = vld [vmem:[%s1540] ss:$2 sm:$0xff]
      %s1542 = scalar_lea.vmem [#allocation2], 80
      %v1543 = vld [vmem:[%s1542] ss:$2 sm:$0xff]
      %s1544 = scalar_lea.vmem [#allocation2], 96
      %v1545 = vld [vmem:[%s1544] ss:$2 sm:$0xff]
      %s1546 = scalar_lea.vmem [#allocation2], 112
      %v1547 = vld [vmem:[%s1546] ss:$2 sm:$0xff]
      %s1548 = scalar_lea.vmem [#allocation2], 128
      %v1549 = vld [vmem:[%s1548] ss:$2 sm:$0xff]
      %s1550 = scalar_lea.vmem [#allocation2], 144
      %v1551 = vld [vmem:[%s1550] ss:$2 sm:$0xff]
      %s1552 = scalar_lea.vmem [#allocation2], 160
      %v1553 = vld [vmem:[%s1552] ss:$2 sm:$0xff]
      %s1554 = scalar_lea.vmem [#allocation2], 176
      %v1555 = vld [vmem:[%s1554] ss:$2 sm:$0xff]
      %s1556 = scalar_lea.vmem [#allocation2], 192
      %v1557 = vld [vmem:[%s1556] ss:$2 sm:$0xff]
      %s1558 = scalar_lea.vmem [#allocation2], 208
      %v1559 = vld [vmem:[%s1558] ss:$2 sm:$0xff]
      %s1560 = scalar_lea.vmem [#allocation2], 224
      %v1561 = vld [vmem:[%s1560] ss:$2 sm:$0xff]
      %s1562 = scalar_lea.vmem [#allocation2], 240
      %v1563 = vld [vmem:[%s1562] ss:$2 sm:$0xff]
      %s1564 = scalar_lea.vmem [#allocation2], 256
      %v1565 = vld [vmem:[%s1564] ss:$2 sm:$0xff]
      %s1566 = scalar_lea.vmem [#allocation2], 272
      %v1567 = vld [vmem:[%s1566] ss:$2 sm:$0xff]
      %s1568 = scalar_lea.vmem [#allocation2], 288
      %v1569 = vld [vmem:[%s1568] ss:$2 sm:$0xff]
      %s1570 = scalar_lea.vmem [#allocation2], 304
      %v1571 = vld [vmem:[%s1570] ss:$2 sm:$0xff]
      %s1572 = scalar_lea.vmem [#allocation2], 320
      %v1573 = vld [vmem:[%s1572] ss:$2 sm:$0xff]
      %s1574 = scalar_lea.vmem [#allocation2], 336
      %v1575 = vld [vmem:[%s1574] ss:$2 sm:$0xff]
      %s1576 = scalar_lea.vmem [#allocation2], 352
      %v1577 = vld [vmem:[%s1576] ss:$2 sm:$0xff]
      %s1578 = scalar_lea.vmem [#allocation2], 368
      %v1579 = vld [vmem:[%s1578] ss:$2 sm:$0xff]
      %s1580 = scalar_lea.vmem [#allocation2], 384
      %v1581 = vld [vmem:[%s1580] ss:$2 sm:$0xff]
      %s1582 = scalar_lea.vmem [#allocation2], 400
      %v1583 = vld [vmem:[%s1582] ss:$2 sm:$0xff]
      %s1584 = scalar_lea.vmem [#allocation2], 416
      %v1585 = vld [vmem:[%s1584] ss:$2 sm:$0xff]
      %s1586 = scalar_lea.vmem [#allocation2], 432
      %v1587 = vld [vmem:[%s1586] ss:$2 sm:$0xff]
      %s1588 = scalar_lea.vmem [#allocation2], 448
      %v1589 = vld [vmem:[%s1588] ss:$2 sm:$0xff]
      %s1590 = scalar_lea.vmem [#allocation2], 464
      %v1591 = vld [vmem:[%s1590] ss:$2 sm:$0xff]
      %s1592 = scalar_lea.vmem [#allocation2], 480
      %v1593 = vld [vmem:[%s1592] ss:$2 sm:$0xff]
      %s1594 = scalar_lea.vmem [#allocation2], 496
      %v1595 = vld [vmem:[%s1594] ss:$2 sm:$0xff]
      %s1596 = scalar_lea.vmem [#allocation2], 1
      %v1597 = vld [vmem:[%s1596] ss:$2 sm:$0xff]
      %s1598 = scalar_lea.vmem [#allocation2], 17
      %v1599 = vld [vmem:[%s1598] ss:$2 sm:$0xff]
      %s1600 = scalar_lea.vmem [#allocation2], 33
      %v1601 = vld [vmem:[%s1600] ss:$2 sm:$0xff]
      %s1602 = scalar_lea.vmem [#allocation2], 49
      %v1603 = vld [vmem:[%s1602] ss:$2 sm:$0xff]
      %s1604 = scalar_lea.vmem [#allocation2], 65
      %v1605 = vld [vmem:[%s1604] ss:$2 sm:$0xff]
      %s1606 = scalar_lea.vmem [#allocation2], 81
      %v1607 = vld [vmem:[%s1606] ss:$2 sm:$0xff]
      %s1608 = scalar_lea.vmem [#allocation2], 97
      %v1609 = vld [vmem:[%s1608] ss:$2 sm:$0xff]
      %s1610 = scalar_lea.vmem [#allocation2], 113
      %v1611 = vld [vmem:[%s1610] ss:$2 sm:$0xff]
      %s1612 = scalar_lea.vmem [#allocation2], 129
      %v1613 = vld [vmem:[%s1612] ss:$2 sm:$0xff]
      %s1614 = scalar_lea.vmem [#allocation2], 145
      %v1615 = vld [vmem:[%s1614] ss:$2 sm:$0xff]
      %s1616 = scalar_lea.vmem [#allocation2], 161
      %v1617 = vld [vmem:[%s1616] ss:$2 sm:$0xff]
      %s1618 = scalar_lea.vmem [#allocation2], 177
      %v1619 = vld [vmem:[%s1618] ss:$2 sm:$0xff]
      %s1620 = scalar_lea.vmem [#allocation2], 193
      %v1621 = vld [vmem:[%s1620] ss:$2 sm:$0xff]
      %s1622 = scalar_lea.vmem [#allocation2], 209
      %v1623 = vld [vmem:[%s1622] ss:$2 sm:$0xff]
      %s1624 = scalar_lea.vmem [#allocation2], 225
      %v1625 = vld [vmem:[%s1624] ss:$2 sm:$0xff]
      %s1626 = scalar_lea.vmem [#allocation2], 241
      %v1627 = vld [vmem:[%s1626] ss:$2 sm:$0xff]
      %s1628 = scalar_lea.vmem [#allocation2], 257
      %v1629 = vld [vmem:[%s1628] ss:$2 sm:$0xff]
      %s1630 = scalar_lea.vmem [#allocation2], 273
      %v1631 = vld [vmem:[%s1630] ss:$2 sm:$0xff]
      %s1632 = scalar_lea.vmem [#allocation2], 289
      %v1633 = vld [vmem:[%s1632] ss:$2 sm:$0xff]
      %s1634 = scalar_lea.vmem [#allocation2], 305
      %v1635 = vld [vmem:[%s1634] ss:$2 sm:$0xff]
      %s1636 = scalar_lea.vmem [#allocation2], 321
      %v1637 = vld [vmem:[%s1636] ss:$2 sm:$0xff]
      %s1638 = scalar_lea.vmem [#allocation2], 337
      %v1639 = vld [vmem:[%s1638] ss:$2 sm:$0xff]
      %s1640 = scalar_lea.vmem [#allocation2], 353
      %v1641 = vld [vmem:[%s1640] ss:$2 sm:$0xff]
      %s1642 = scalar_lea.vmem [#allocation2], 369
      %v1643 = vld [vmem:[%s1642] ss:$2 sm:$0xff]
      %s1644 = scalar_lea.vmem [#allocation2], 385
      %v1645 = vld [vmem:[%s1644] ss:$2 sm:$0xff]
      %s1646 = scalar_lea.vmem [#allocation2], 401
      %v1647 = vld [vmem:[%s1646] ss:$2 sm:$0xff]
      %s1648 = scalar_lea.vmem [#allocation2], 417
      %v1649 = vld [vmem:[%s1648] ss:$2 sm:$0xff]
      %s1650 = scalar_lea.vmem [#allocation2], 433
      %v1651 = vld [vmem:[%s1650] ss:$2 sm:$0xff]
      %s1652 = scalar_lea.vmem [#allocation2], 449
      %v1653 = vld [vmem:[%s1652] ss:$2 sm:$0xff]
      %s1654 = scalar_lea.vmem [#allocation2], 465
      %v1655 = vld [vmem:[%s1654] ss:$2 sm:$0xff]
      %s1656 = scalar_lea.vmem [#allocation2], 481
      %v1657 = vld [vmem:[%s1656] ss:$2 sm:$0xff]
      %s1658 = scalar_lea.vmem [#allocation2], 497
      %v1659 = vld [vmem:[%s1658] ss:$2 sm:$0xff]
      %v1660 = vmax.f32 %v1533, %v1597
      %v1661 = vmax.f32 %v1535, %v1599
      %v1662 = vmax.f32 %v1537, %v1601
      %v1663 = vmax.f32 %v1539, %v1603
      %v1664 = vmax.f32 %v1541, %v1605
      %v1665 = vmax.f32 %v1543, %v1607
      %v1666 = vmax.f32 %v1545, %v1609
      %v1667 = vmax.f32 %v1547, %v1611
      %v1668 = vmax.f32 %v1549, %v1613
      %v1669 = vmax.f32 %v1551, %v1615
      %v1670 = vmax.f32 %v1553, %v1617
      %v1671 = vmax.f32 %v1555, %v1619
      %v1672 = vmax.f32 %v1557, %v1621
      %v1673 = vmax.f32 %v1559, %v1623
      %v1674 = vmax.f32 %v1561, %v1625
      %v1675 = vmax.f32 %v1563, %v1627
      %v1676 = vmax.f32 %v1565, %v1629
      %v1677 = vmax.f32 %v1567, %v1631
      %v1678 = vmax.f32 %v1569, %v1633
      %v1679 = vmax.f32 %v1571, %v1635
      %v1680 = vmax.f32 %v1573, %v1637
      %v1681 = vmax.f32 %v1575, %v1639
      %v1682 = vmax.f32 %v1577, %v1641
      %v1683 = vmax.f32 %v1579, %v1643
      %v1684 = vmax.f32 %v1581, %v1645
      %v1685 = vmax.f32 %v1583, %v1647
      %v1686 = vmax.f32 %v1585, %v1649
      %v1687 = vmax.f32 %v1587, %v1651
      %v1688 = vmax.f32 %v1589, %v1653
      %v1689 = vmax.f32 %v1591, %v1655
      %v1690 = vmax.f32 %v1593, %v1657
      %v1691 = vmax.f32 %v1595, %v1659
      %v1692 = vld [vmem:[%s2] sm:$0x1]
      %v1694 = vlaneseq
      %v1695 = vshrl.u32 %v1694, 7
      %v1696 = vsub.s32 0, %v1695
      %v1697 = vrot.slane %v1692, %v1696
      %v1699 = vadd.f32 %v1660, %v1697
      %v1700 = vadd.f32 %v1661, %v1697
      %v1701 = vadd.f32 %v1662, %v1697
      %v1702 = vadd.f32 %v1663, %v1697
      %v1703 = vadd.f32 %v1664, %v1697
      %v1704 = vadd.f32 %v1665, %v1697
      %v1705 = vadd.f32 %v1666, %v1697
      %v1706 = vadd.f32 %v1667, %v1697
      %v1707 = vadd.f32 %v1668, %v1697
      %v1708 = vadd.f32 %v1669, %v1697
      %v1709 = vadd.f32 %v1670, %v1697
      %v1710 = vadd.f32 %v1671, %v1697
      %v1711 = vadd.f32 %v1672, %v1697
      %v1712 = vadd.f32 %v1673, %v1697
      %v1713 = vadd.f32 %v1674, %v1697
      %v1714 = vadd.f32 %v1675, %v1697
      %v1715 = vadd.f32 %v1676, %v1697
      %v1716 = vadd.f32 %v1677, %v1697
      %v1717 = vadd.f32 %v1678, %v1697
      %v1718 = vadd.f32 %v1679, %v1697
      %v1719 = vadd.f32 %v1680, %v1697
      %v1720 = vadd.f32 %v1681, %v1697
      %v1721 = vadd.f32 %v1682, %v1697
      %v1722 = vadd.f32 %v1683, %v1697
      %v1723 = vadd.f32 %v1684, %v1697
      %v1724 = vadd.f32 %v1685, %v1697
      %v1725 = vadd.f32 %v1686, %v1697
      %v1726 = vadd.f32 %v1687, %v1697
      %v1727 = vadd.f32 %v1688, %v1697
      %v1728 = vadd.f32 %v1689, %v1697
      %v1729 = vadd.f32 %v1690, %v1697
      %v1730 = vadd.f32 %v1691, %v1697
      %v1731 = vpack.c.bf16 %v1700, %v1699
      %v1732 = vpack.c.bf16 %v1702, %v1701
      %v1733 = vpack.c.bf16 %v1704, %v1703
      %v1734 = vpack.c.bf16 %v1706, %v1705
      %v1735 = vpack.c.bf16 %v1708, %v1707
      %v1736 = vpack.c.bf16 %v1710, %v1709
      %v1737 = vpack.c.bf16 %v1712, %v1711
      %v1738 = vpack.c.bf16 %v1714, %v1713
      %v1739 = vpack.c.bf16 %v1716, %v1715
      %v1740 = vpack.c.bf16 %v1718, %v1717
      %v1741 = vpack.c.bf16 %v1720, %v1719
      %v1742 = vpack.c.bf16 %v1722, %v1721
      %v1743 = vpack.c.bf16 %v1724, %v1723
      %v1744 = vpack.c.bf16 %v1726, %v1725
      %v1745 = vpack.c.bf16 %v1728, %v1727
      %v1746 = vpack.c.bf16 %v1730, %v1729
      %v1763 = vunpack.c.l.b16 %v1731
      %v1764 = vunpack.c.h.b16 %v1731
      %v1765 = vunpack.c.l.b16 %v1732
      %v1766 = vunpack.c.h.b16 %v1732
      %v1767 = vunpack.c.l.b16 %v1733
      %v1768 = vunpack.c.h.b16 %v1733
      %v1769 = vunpack.c.l.b16 %v1734
      %v1770 = vunpack.c.h.b16 %v1734
      %v1771 = vunpack.c.l.b16 %v1735
      %v1772 = vunpack.c.h.b16 %v1735
      %v1773 = vunpack.c.l.b16 %v1736
      %v1774 = vunpack.c.h.b16 %v1736
      %v1775 = vunpack.c.l.b16 %v1737
      %v1776 = vunpack.c.h.b16 %v1737
      %v1777 = vunpack.c.l.b16 %v1738
      %v1778 = vunpack.c.h.b16 %v1738
      %v1779 = vunpack.c.l.b16 %v1739
      %v1780 = vunpack.c.h.b16 %v1739
      %v1781 = vunpack.c.l.b16 %v1740
      %v1782 = vunpack.c.h.b16 %v1740
      %v1783 = vunpack.c.l.b16 %v1741
      %v1784 = vunpack.c.h.b16 %v1741
      %v1785 = vunpack.c.l.b16 %v1742
      %v1786 = vunpack.c.h.b16 %v1742
      %v1787 = vunpack.c.l.b16 %v1743
      %v1788 = vunpack.c.h.b16 %v1743
      %v1789 = vunpack.c.l.b16 %v1744
      %v1790 = vunpack.c.h.b16 %v1744
      %v1791 = vunpack.c.l.b16 %v1745
      %v1792 = vunpack.c.h.b16 %v1745
      %v1793 = vunpack.c.l.b16 %v1746
      %v1794 = vunpack.c.h.b16 %v1746
      %v1795 = vpack.c.b16 %v1763, %v1763
      %v1796 = vpack.c.b16 %v1764, %v1764
      %v1797 = vpack.c.b16 %v1765, %v1765
      %v1798 = vpack.c.b16 %v1766, %v1766
      %v1799 = vpack.c.b16 %v1767, %v1767
      %v1800 = vpack.c.b16 %v1768, %v1768
      %v1801 = vpack.c.b16 %v1769, %v1769
      %v1802 = vpack.c.b16 %v1770, %v1770
      %v1803 = vpack.c.b16 %v1771, %v1771
      %v1804 = vpack.c.b16 %v1772, %v1772
      %v1805 = vpack.c.b16 %v1773, %v1773
      %v1806 = vpack.c.b16 %v1774, %v1774
      %v1807 = vpack.c.b16 %v1775, %v1775
      %v1808 = vpack.c.b16 %v1776, %v1776
      %v1809 = vpack.c.b16 %v1777, %v1777
      %v1810 = vpack.c.b16 %v1778, %v1778
      %v1811 = vpack.c.b16 %v1779, %v1779
      %v1812 = vpack.c.b16 %v1780, %v1780
      %v1813 = vpack.c.b16 %v1781, %v1781
      %v1814 = vpack.c.b16 %v1782, %v1782
      %v1815 = vpack.c.b16 %v1783, %v1783
      %v1816 = vpack.c.b16 %v1784, %v1784
      %v1817 = vpack.c.b16 %v1785, %v1785
      %v1818 = vpack.c.b16 %v1786, %v1786
      %v1819 = vpack.c.b16 %v1787, %v1787
      %v1820 = vpack.c.b16 %v1788, %v1788
      %v1821 = vpack.c.b16 %v1789, %v1789
      %v1822 = vpack.c.b16 %v1790, %v1790
      %v1823 = vpack.c.b16 %v1791, %v1791
      %v1824 = vpack.c.b16 %v1792, %v1792
      %v1825 = vpack.c.b16 %v1793, %v1793
      %v1826 = vpack.c.b16 %v1794, %v1794
      %vm1859 = vcmask 257024
      %1860 = vst.msk [vmem:[%s170] sm:$0xf] %vm1859, %v1795
      %1861 = vst.msk [vmem:[%s170 + $0x4] sm:$0xf] %vm1859, %v1796
      %1862 = vst.msk [vmem:[%s170 + $0x8] sm:$0xf] %vm1859, %v1797
      %1863 = vst.msk [vmem:[%s170 + $0xc] sm:$0xf] %vm1859, %v1798
      %1864 = vst.msk [vmem:[%s170 + $0x10] sm:$0xf] %vm1859, %v1799
      %1865 = vst.msk [vmem:[%s170 + $0x14] sm:$0xf] %vm1859, %v1800
      %1866 = vst.msk [vmem:[%s170 + $0x18] sm:$0xf] %vm1859, %v1801
      %1867 = vst.msk [vmem:[%s170 + $0x1c] sm:$0xf] %vm1859, %v1802
      %1868 = vst.msk [vmem:[%s170 + $0x20] sm:$0xf] %vm1859, %v1803
      %1869 = vst.msk [vmem:[%s170 + $0x24] sm:$0xf] %vm1859, %v1804
      %1870 = vst.msk [vmem:[%s170 + $0x28] sm:$0xf] %vm1859, %v1805
      %1871 = vst.msk [vmem:[%s170 + $0x2c] sm:$0xf] %vm1859, %v1806
      %1872 = vst.msk [vmem:[%s170 + $0x30] sm:$0xf] %vm1859, %v1807
      %1873 = vst.msk [vmem:[%s170 + $0x34] sm:$0xf] %vm1859, %v1808
      %1874 = vst.msk [vmem:[%s170 + $0x38] sm:$0xf] %vm1859, %v1809
      %1875 = vst.msk [vmem:[%s170 + $0x3c] sm:$0xf] %vm1859, %v1810
      %1876 = vst.msk [vmem:[%s170 + $0x40] sm:$0xf] %vm1859, %v1811
      %1877 = vst.msk [vmem:[%s170 + $0x44] sm:$0xf] %vm1859, %v1812
      %1878 = vst.msk [vmem:[%s170 + $0x48] sm:$0xf] %vm1859, %v1813
      %1879 = vst.msk [vmem:[%s170 + $0x4c] sm:$0xf] %vm1859, %v1814
      %1880 = vst.msk [vmem:[%s170 + $0x50] sm:$0xf] %vm1859, %v1815
      %1881 = vst.msk [vmem:[%s170 + $0x54] sm:$0xf] %vm1859, %v1816
      %1882 = vst.msk [vmem:[%s170 + $0x58] sm:$0xf] %vm1859, %v1817
      %1883 = vst.msk [vmem:[%s170 + $0x5c] sm:$0xf] %vm1859, %v1818
      %1884 = vst.msk [vmem:[%s170 + $0x60] sm:$0xf] %vm1859, %v1819
      %1885 = vst.msk [vmem:[%s170 + $0x64] sm:$0xf] %vm1859, %v1820
      %1886 = vst.msk [vmem:[%s170 + $0x68] sm:$0xf] %vm1859, %v1821
      %1887 = vst.msk [vmem:[%s170 + $0x6c] sm:$0xf] %vm1859, %v1822
      %1888 = vst.msk [vmem:[%s170 + $0x70] sm:$0xf] %vm1859, %v1823
      %1889 = vst.msk [vmem:[%s170 + $0x74] sm:$0xf] %vm1859, %v1824
      %1890 = vst.msk [vmem:[%s170 + $0x78] sm:$0xf] %vm1859, %v1825
      %1891 = vst.msk [vmem:[%s170 + $0x7c] sm:$0xf] %vm1859, %v1826
      %p1892 = scmp.lt.s32.totalorder %s14, 1
      %s1893 = scalar_select %p1892, %s14, 1
      %s1894 = smul.addr %s1893, 32
      %s1895 = smul.addr %s1894, 4
      %s1896 = scalar_lea.vmem %s3, %s1895
      // Predicated region
      $region33: #{jlnet_forward.4} parent=31 // pred_check
        %p1897 = pneg %p100
      $region34: #{jlnet_forward.4} parent=31 // pred_check_branch
        %1899 = sbr.rel (%p1897) target = $region36
      $region35: #{jlnet_forward.4} parent=31 // pred_region
        _
      $region36: #{jlnet_forward.4} parent=31 // pred_fallthru
        _
    $region32: #{jlnet_forward.4} parent=5 // pred_fallthru
      _
    %p1900 = scmp.le.s32.totalorder 2, %s9
    // Predicated region
    $region37: #{jlnet_forward.4} parent=5 // pred_check
      %p1901 = pneg %p1900
    $region38: #{jlnet_forward.4} parent=5 // pred_check_branch
      %1903 = sbr.rel (%p1901) target = $region40
    $region39: #{jlnet_forward.4} parent=5 // pred_region
      %s1904 = ssub.s32 %s9, 2
      // Predicated region
      $region41: #{jlnet_forward.4} parent=39 // pred_check
        %p1905 = pneg %p106
      $region42: #{jlnet_forward.4} parent=39 // pred_check_branch
        %1907 = sbr.rel (%p1905) target = $region44
      $region43: #{jlnet_forward.4} parent=39 // pred_region
        %p1908 = scmp.lt.s32.totalorder %s15, 1
        %s1909 = scalar_select %p1908, %s15, 1
        %s1910 = smul.addr %s1909, 32
        %s1911 = smul.addr %s1910, 4
        %s1912 = scalar_lea.vmem %s3, %s1911
      $region44: #{jlnet_forward.4} parent=39 // pred_fallthru
        _
    $region40: #{jlnet_forward.4} parent=5 // pred_fallthru
      _
  $region6: #{jlnet_forward.4} parent=0 // loop_footer
    %s13 = sadd.s32 1, %s9
  $region7: #{jlnet_forward.4} parent=0 // loop_footer_branch
    %8 = sbr.rel target = $region3
  $region8: #{jlnet_forward.4} parent=0 // loop_exit
    _

// kernel: jlnet_forward.5
$region0: #{jlnet_forward.5}
  #allocation0 [shape = 'u32[]', space=smem, size = 0x4, offset = 0x4, fixed_abs, tag = 'smem constant byte address 0x4 - core index']
  #allocation1 [shape = 'u32[144,128]{1,0:T(1,128)}', space=vmem, size = 0x12000, scoped, tag = 'internal scratch']
  #allocation2 [shape = 'f32[8,16,32]{2,1,0:T(8,128)}', space=vmem, size = 0x10000, scoped, tag = 'scratch operand']
  %s0 = inlined_call_operand.vmem [shape: bf16[2,16,16,800], index: 0, kind: input, shape index: {}]
  %s1 = inlined_call_operand.vmem [shape: bf16[800,32], index: 1, kind: input, shape index: {}]
  %s2 = inlined_call_operand.vmem [shape: f32[1,32], index: 2, kind: input, shape index: {}]
  %s3 = inlined_call_operand.vmem [shape: bf16[2,8,8,32], index: 3, kind: output, shape index: {}]
  %s4 = sld [smem:[#allocation0]]
  $region45: #{jlnet_forward.5} parent=0
    _
  %s6 = ssub.s32 1, %s4
  %s7 = scalar_select 0, %s6, %s4
  loop: start=0, step=1, limit=4
  $region2: #{jlnet_forward.5} parent=0 // loop_pre_header
    _
  $region3: #{jlnet_forward.5} parent=0 // loop_header
    %s9 = sphi 0, %s13
    %p10 = scmp.ge.s32.totalorder %s9, 4
    %s19 = sphi 0, %s21
    %s22 = sphi 0, %s19
    %s23 = sphi 0, %s22
    %s39 = sphi 0, %s23
    %s43 = sphi 0, %s43
    %s45 = sphi 0, %s43
    %s46 = sphi 0, %s45
    %s60 = sphi 0, %s46
    %s64 = sphi 0, %s64
    %s66 = sphi 0, %s64
    %s67 = sphi 0, %s66
    %s81 = sphi 0, %s67
    %s87 = sphi 0, %s89
    %s90 = sphi 0, %s87
    %s91 = sphi 0, %s90
    %s107 = sphi 0, %s91
  $region4: #{jlnet_forward.5} parent=0 // loop_header_branch
    %12 = sbr.rel (%p10) target = $region8
  $region5: #{jlnet_forward.5} parent=0 // loop_body
    %s14 = ssub.s32 %s9, 1
    %s15 = ssub.s32 %s9, 2
    %s16 = sadd.s32 %s9, 1
    %s17 = ssub.s32 %s9, %s16
    %p18 = scmp.eq.s32.totalorder %s17, 0
    %s20 = sadd.s32 %s19, 1
    %s21 = scalar_select %p18, %s19, %s20
    %p24 = pneg %p18
    %p25 = scmp.eq.s32.totalorder %s9, 1
    %p26 = por %p24, %p25
    %p27 = scmp.ne.s32.totalorder %s19, %s22
    %p28 = scmp.eq.s32.totalorder %s9, 0
    %p29 = por %p27, %p28
    %p30 = scmp.ne.s32.totalorder %s19, %s22
    %p31 = scmp.eq.s32.totalorder %s14, 1
    %p32 = por %p30, %p31
    %p33 = scmp.ne.s32.totalorder %s22, %s23
    %p34 = scmp.eq.s32.totalorder %s14, 0
    %p35 = por %p33, %p34
    %p36 = scmp.ne.s32.totalorder %s22, %s23
    %p37 = scmp.eq.s32.totalorder %s15, 1
    %p38 = por %p36, %p37
    %p40 = scmp.ne.s32.totalorder %s23, %s39
    %p41 = scmp.eq.s32.totalorder %s15, 0
    %p42 = por %p40, %p41
    %s44 = sadd.s32 %s43, 1
    %p47 = scmp.eq.s32.totalorder %s9, 1
    %p48 = scmp.ne.s32.totalorder %s43, %s45
    %p49 = scmp.eq.s32.totalorder %s9, 0
    %p50 = por %p48, %p49
    %p51 = scmp.ne.s32.totalorder %s43, %s45
    %p52 = scmp.eq.s32.totalorder %s14, 1
    %p53 = por %p51, %p52
    %p54 = scmp.ne.s32.totalorder %s45, %s46
    %p55 = scmp.eq.s32.totalorder %s14, 0
    %p56 = por %p54, %p55
    %p57 = scmp.ne.s32.totalorder %s45, %s46
    %p58 = scmp.eq.s32.totalorder %s15, 1
    %p59 = por %p57, %p58
    %p61 = scmp.ne.s32.totalorder %s46, %s60
    %p62 = scmp.eq.s32.totalorder %s15, 0
    %p63 = por %p61, %p62
    %s65 = sadd.s32 %s64, 1
    %p68 = scmp.eq.s32.totalorder %s9, 1
    %p69 = scmp.ne.s32.totalorder %s64, %s66
    %p70 = scmp.eq.s32.totalorder %s9, 0
    %p71 = por %p69, %p70
    %p72 = scmp.ne.s32.totalorder %s64, %s66
    %p73 = scmp.eq.s32.totalorder %s14, 1
    %p74 = por %p72, %p73
    %p75 = scmp.ne.s32.totalorder %s66, %s67
    %p76 = scmp.eq.s32.totalorder %s14, 0
    %p77 = por %p75, %p76
    %p78 = scmp.ne.s32.totalorder %s66, %s67
    %p79 = scmp.eq.s32.totalorder %s15, 1
    %p80 = por %p78, %p79
    %p82 = scmp.ne.s32.totalorder %s67, %s81
    %p83 = scmp.eq.s32.totalorder %s15, 0
    %p84 = por %p82, %p83
    %s85 = ssub.s32 %s9, %s16
    %p86 = scmp.eq.s32.totalorder %s85, 0
    %s88 = sadd.s32 %s87, 1
    %s89 = scalar_select %p86, %s87, %s88
    %p92 = pneg %p86
    %p93 = scmp.eq.s32.totalorder %s9, 1
    %p94 = por %p92, %p93
    %p95 = scmp.ne.s32.totalorder %s87, %s90
    %p96 = scmp.eq.s32.totalorder %s9, 0
    %p97 = por %p95, %p96
    %p98 = scmp.ne.s32.totalorder %s87, %s90
    %p99 = scmp.eq.s32.totalorder %s14, 1
    %p100 = por %p98, %p99
    %p101 = scmp.ne.s32.totalorder %s90, %s91
    %p102 = scmp.eq.s32.totalorder %s14, 0
    %p103 = por %p101, %p102
    %p104 = scmp.ne.s32.totalorder %s90, %s91
    %p105 = scmp.eq.s32.totalorder %s15, 1
    %p106 = por %p104, %p105
    %p108 = scmp.ne.s32.totalorder %s91, %s107
    %p109 = scmp.eq.s32.totalorder %s15, 0
    %p110 = por %p108, %p109
    %p111 = scmp.le.s32.totalorder 1, %s9
    %p112 = scmp.lt.s32.totalorder %s9, 3
    %p113 = pnand %p111, %p112
    %p114 = pneg %p113
    // Predicated region
    $region9: #{jlnet_forward.5} parent=5 // pred_check
      _
    $region10: #{jlnet_forward.5} parent=5 // pred_check_branch
      %116 = sbr.rel (%p113) target = $region12
    $region11: #{jlnet_forward.5} parent=5 // pred_region
      %s117 = ssub.s32 %s9, 1
      // Predicated region
      $region13: #{jlnet_forward.5} parent=11 // pred_check
        %p118 = pneg %p56
      $region14: #{jlnet_forward.5} parent=11 // pred_check_branch
        %120 = sbr.rel (%p118) target = $region16
      $region15: #{jlnet_forward.5} parent=11 // pred_region
        _
      $region16: #{jlnet_forward.5} parent=11 // pred_fallthru
        _
      // Predicated region
      $region17: #{jlnet_forward.5} parent=11 // pred_check
        %p121 = pneg %p77
      $region18: #{jlnet_forward.5} parent=11 // pred_check_branch
        %123 = sbr.rel (%p121) target = $region20
      $region19: #{jlnet_forward.5} parent=11 // pred_region
        _
      $region20: #{jlnet_forward.5} parent=11 // pred_fallthru
        _
    $region12: #{jlnet_forward.5} parent=5 // pred_fallthru
      _
    %p124 = scmp.lt.s32.totalorder %s9, 2
    // Predicated region
    $region21: #{jlnet_forward.5} parent=5 // pred_check
      %p125 = pneg %p124
    $region22: #{jlnet_forward.5} parent=5 // pred_check_branch
      %127 = sbr.rel (%p125) target = $region24
    $region23: #{jlnet_forward.5} parent=5 // pred_region
      // Predicated region
      $region25: #{jlnet_forward.5} parent=23 // pred_check
        %p128 = pneg %p29
      $region26: #{jlnet_forward.5} parent=23 // pred_check_branch
        %130 = sbr.rel (%p128) target = $region28
      $region27: #{jlnet_forward.5} parent=23 // pred_region
        %p131 = scmp.lt.s32.totalorder %s9, 1
        %s132 = scalar_select %p131, %s9, 1
        %s133 = smul.addr %s132, 224
        %s134 = smul.addr %s133, 4
        %s135 = scalar_lea.vmem %s0, %s134
      $region28: #{jlnet_forward.5} parent=23 // pred_fallthru
        _
    $region24: #{jlnet_forward.5} parent=5 // pred_fallthru
      _
    %p136 = scmp.le.s32.totalorder 1, %s9
    %p137 = scmp.lt.s32.totalorder %s9, 3
    %p138 = pnand %p136, %p137
    %p139 = pneg %p138
    // Predicated region
    $region29: #{jlnet_forward.5} parent=5 // pred_check
      _
    $region30: #{jlnet_forward.5} parent=5 // pred_check_branch
      %141 = sbr.rel (%p138) target = $region32
    $region31: #{jlnet_forward.5} parent=5 // pred_region
      %s142 = ssub.s32 %s9, 1
      %p143 = scmp.lt.s32.totalorder %s14, 1
      %s144 = scalar_select %p143, %s14, 1
      %s145 = smul.addr %s144, 224
      %s146 = smul.addr %s145, 4
      %s147 = scalar_lea.vmem %s0, %s146
      %p148 = pneg %p35
      %p149 = pneg %p32
      %p150 = pneg %p56
      %p151 = pneg %p53
      %p152 = pneg %p77
      %p153 = pneg %p74
      %p154 = pneg %p103
      %p155 = pneg %p100
      %p156 = scmp.lt.s32.totalorder %s14, 1
      %s157 = scalar_select %p156, %s14, 1
      %s158 = smul.addr %s157, 8
      %s159 = smul.addr %s158, 4
      %s160 = scalar_lea.vmem %s3, %s159
      %p161 = scmp.lt.s32.totalorder %s14, 1
      %s162 = scalar_select %p161, %s14, 1
      %s163 = smul.addr %s162, 224
      %s164 = smul.addr %s163, 4
      %s165 = scalar_lea.vmem %s0, %s164
      %p166 = scmp.lt.s32.totalorder %s14, 1
      %s167 = scalar_select %p166, %s14, 1
      %s168 = smul.addr %s167, 8
      %s169 = smul.addr %s168, 4
      %s170 = scalar_lea.vmem %s3, %s169
      %v172 = vld [vmem:[%s165] sm:$0xff]
      %v173 = vld [vmem:[%s165 + $0x8] sm:$0xff]
      %v174 = vld [vmem:[%s165 + $0x10] sm:$0xff]
      %v175 = vld [vmem:[%s165 + $0x18] sm:$0xf]
      %v176 = vld [vmem:[%s165 + $0x1c] sm:$0xff]
      %v177 = vld [vmem:[%s165 + $0x24] sm:$0xff]
      %v178 = vld [vmem:[%s165 + $0x2c] sm:$0xff]
      %v179 = vld [vmem:[%s165 + $0x34] sm:$0xf]
      %v180 = vld [vmem:[%s165 + $0x38] sm:$0xff]
      %v181 = vld [vmem:[%s165 + $0x40] sm:$0xff]
      %v182 = vld [vmem:[%s165 + $0x48] sm:$0xff]
      %v183 = vld [vmem:[%s165 + $0x50] sm:$0xf]
      %v184 = vld [vmem:[%s165 + $0x54] sm:$0xff]
      %v185 = vld [vmem:[%s165 + $0x5c] sm:$0xff]
      %v186 = vld [vmem:[%s165 + $0x64] sm:$0xff]
      %v187 = vld [vmem:[%s165 + $0x6c] sm:$0xf]
      %v188 = vld [vmem:[%s165 + $0x70] sm:$0xff]
      %v189 = vld [vmem:[%s165 + $0x78] sm:$0xff]
      %v190 = vld [vmem:[%s165 + $0x80] sm:$0xff]
      %v191 = vld [vmem:[%s165 + $0x88] sm:$0xf]
      %v192 = vld [vmem:[%s165 + $0x8c] sm:$0xff]
      %v193 = vld [vmem:[%s165 + $0x94] sm:$0xff]
      %v194 = vld [vmem:[%s165 + $0x9c] sm:$0xff]
      %v195 = vld [vmem:[%s165 + $0xa4] sm:$0xf]
      %v196 = vld [vmem:[%s165 + $0xa8] sm:$0xff]
      %v197 = vld [vmem:[%s165 + $0xb0] sm:$0xff]
      %v198 = vld [vmem:[%s165 + $0xb8] sm:$0xff]
      %v199 = vld [vmem:[%s165 + $0xc0] sm:$0xf]
      %v200 = vld [vmem:[%s165 + $0xc4] sm:$0xff]
      %v201 = vld [vmem:[%s165 + $0xcc] sm:$0xff]
      %v202 = vld [vmem:[%s165 + $0xd4] sm:$0xff]
      %v203 = vld [vmem:[%s165 + $0xdc] sm:$0xf]
      %v204 = vld [vmem:[%s165 + $0xe0] sm:$0xff]
      %v205 = vld [vmem:[%s165 + $0xe8] sm:$0xff]
      %v206 = vld [vmem:[%s165 + $0xf0] sm:$0xff]
      %v207 = vld [vmem:[%s165 + $0xf8] sm:$0xf]
      %v208 = vld [vmem:[%s165 + $0xfc] sm:$0xff]
      %v209 = vld [vmem:[%s165 + $0x104] sm:$0xff]
      %v210 = vld [vmem:[%s165 + $0x10c] sm:$0xff]
      %v211 = vld [vmem:[%s165 + $0x114] sm:$0xf]
      %v212 = vld [vmem:[%s165 + $0x118] sm:$0xff]
      %v213 = vld [vmem:[%s165 + $0x120] sm:$0xff]
      %v214 = vld [vmem:[%s165 + $0x128] sm:$0xff]
      %v215 = vld [vmem:[%s165 + $0x130] sm:$0xf]
      %v216 = vld [vmem:[%s165 + $0x134] sm:$0xff]
      %v217 = vld [vmem:[%s165 + $0x13c] sm:$0xff]
      %v218 = vld [vmem:[%s165 + $0x144] sm:$0xff]
      %v219 = vld [vmem:[%s165 + $0x14c] sm:$0xf]
      %v220 = vld [vmem:[%s165 + $0x150] sm:$0xff]
      %v221 = vld [vmem:[%s165 + $0x158] sm:$0xff]
      %v222 = vld [vmem:[%s165 + $0x160] sm:$0xff]
      %v223 = vld [vmem:[%s165 + $0x168] sm:$0xf]
      %v224 = vld [vmem:[%s165 + $0x16c] sm:$0xff]
      %v225 = vld [vmem:[%s165 + $0x174] sm:$0xff]
      %v226 = vld [vmem:[%s165 + $0x17c] sm:$0xff]
      %v227 = vld [vmem:[%s165 + $0x184] sm:$0xf]
      %v228 = vld [vmem:[%s165 + $0x188] sm:$0xff]
      %v229 = vld [vmem:[%s165 + $0x190] sm:$0xff]
      %v230 = vld [vmem:[%s165 + $0x198] sm:$0xff]
      %v231 = vld [vmem:[%s165 + $0x1a0] sm:$0xf]
      %v232 = vld [vmem:[%s165 + $0x1a4] sm:$0xff]
      %v233 = vld [vmem:[%s165 + $0x1ac] sm:$0xff]
      %v234 = vld [vmem:[%s165 + $0x1b4] sm:$0xff]
      %v235 = vld [vmem:[%s165 + $0x1bc] sm:$0xf]
      %v236 = vld [vmem:[%s165 + $0x1c0] sm:$0xff]
      %v237 = vld [vmem:[%s165 + $0x1c8] sm:$0xff]
      %v238 = vld [vmem:[%s165 + $0x1d0] sm:$0xff]
      %v239 = vld [vmem:[%s165 + $0x1d8] sm:$0xf]
      %v240 = vld [vmem:[%s165 + $0x1dc] sm:$0xff]
      %v241 = vld [vmem:[%s165 + $0x1e4] sm:$0xff]
      %v242 = vld [vmem:[%s165 + $0x1ec] sm:$0xff]
      %v243 = vld [vmem:[%s165 + $0x1f4] sm:$0xf]
      %v244 = vld [vmem:[%s165 + $0x1f8] sm:$0xff]
      %v245 = vld [vmem:[%s165 + $0x200] sm:$0xff]
      %v246 = vld [vmem:[%s165 + $0x208] sm:$0xff]
      %v247 = vld [vmem:[%s165 + $0x210] sm:$0xf]
      %v248 = vld [vmem:[%s165 + $0x214] sm:$0xff]
      %v249 = vld [vmem:[%s165 + $0x21c] sm:$0xff]
      %v250 = vld [vmem:[%s165 + $0x224] sm:$0xff]
      %v251 = vld [vmem:[%s165 + $0x22c] sm:$0xf]
      %v252 = vld [vmem:[%s165 + $0x230] sm:$0xff]
      %v253 = vld [vmem:[%s165 + $0x238] sm:$0xff]
      %v254 = vld [vmem:[%s165 + $0x240] sm:$0xff]
      %v255 = vld [vmem:[%s165 + $0x248] sm:$0xf]
      %v256 = vld [vmem:[%s165 + $0x24c] sm:$0xff]
      %v257 = vld [vmem:[%s165 + $0x254] sm:$0xff]
      %v258 = vld [vmem:[%s165 + $0x25c] sm:$0xff]
      %v259 = vld [vmem:[%s165 + $0x264] sm:$0xf]
      %v260 = vld [vmem:[%s165 + $0x268] sm:$0xff]
      %v261 = vld [vmem:[%s165 + $0x270] sm:$0xff]
      %v262 = vld [vmem:[%s165 + $0x278] sm:$0xff]
      %v263 = vld [vmem:[%s165 + $0x280] sm:$0xf]
      %v264 = vld [vmem:[%s165 + $0x284] sm:$0xff]
      %v265 = vld [vmem:[%s165 + $0x28c] sm:$0xff]
      %v266 = vld [vmem:[%s165 + $0x294] sm:$0xff]
      %v267 = vld [vmem:[%s165 + $0x29c] sm:$0xf]
      %v268 = vld [vmem:[%s165 + $0x2a0] sm:$0xff]
      %v269 = vld [vmem:[%s165 + $0x2a8] sm:$0xff]
      %v270 = vld [vmem:[%s165 + $0x2b0] sm:$0xff]
      %v271 = vld [vmem:[%s165 + $0x2b8] sm:$0xf]
      %v272 = vld [vmem:[%s165 + $0x2bc] sm:$0xff]
      %v273 = vld [vmem:[%s165 + $0x2c4] sm:$0xff]
      %v274 = vld [vmem:[%s165 + $0x2cc] sm:$0xff]
      %v275 = vld [vmem:[%s165 + $0x2d4] sm:$0xf]
      %v276 = vld [vmem:[%s165 + $0x2d8] sm:$0xff]
      %v277 = vld [vmem:[%s165 + $0x2e0] sm:$0xff]
      %v278 = vld [vmem:[%s165 + $0x2e8] sm:$0xff]
      %v279 = vld [vmem:[%s165 + $0x2f0] sm:$0xf]
      %v280 = vld [vmem:[%s165 + $0x2f4] sm:$0xff]
      %v281 = vld [vmem:[%s165 + $0x2fc] sm:$0xff]
      %v282 = vld [vmem:[%s165 + $0x304] sm:$0xff]
      %v283 = vld [vmem:[%s165 + $0x30c] sm:$0xf]
      %v284 = vld [vmem:[%s165 + $0x310] sm:$0xff]
      %v285 = vld [vmem:[%s165 + $0x318] sm:$0xff]
      %v286 = vld [vmem:[%s165 + $0x320] sm:$0xff]
      %v287 = vld [vmem:[%s165 + $0x328] sm:$0xf]
      %v288 = vld [vmem:[%s165 + $0x32c] sm:$0xff]
      %v289 = vld [vmem:[%s165 + $0x334] sm:$0xff]
      %v290 = vld [vmem:[%s165 + $0x33c] sm:$0xff]
      %v291 = vld [vmem:[%s165 + $0x344] sm:$0xf]
      %v292 = vld [vmem:[%s165 + $0x348] sm:$0xff]
      %v293 = vld [vmem:[%s165 + $0x350] sm:$0xff]
      %v294 = vld [vmem:[%s165 + $0x358] sm:$0xff]
      %v295 = vld [vmem:[%s165 + $0x360] sm:$0xf]
      %v296 = vld [vmem:[%s165 + $0x364] sm:$0xff]
      %v297 = vld [vmem:[%s165 + $0x36c] sm:$0xff]
      %v298 = vld [vmem:[%s165 + $0x374] sm:$0xff]
      %v299 = vld [vmem:[%s165 + $0x37c] sm:$0xf]
      %v300 = vld [vmem:[%s1] sm:$0xf]
      %v301 = vld [vmem:[%s1 + $0x4] sm:$0xf]
      %v302 = vld [vmem:[%s1 + $0x8] sm:$0xf]
      %v303 = vld [vmem:[%s1 + $0xc] sm:$0xf]
      %v304 = vld [vmem:[%s1 + $0x10] sm:$0xf]
      %v305 = vld [vmem:[%s1 + $0x14] sm:$0xf]
      %v306 = vld [vmem:[%s1 + $0x18] sm:$0xf]
      %v307 = vld [vmem:[%s1 + $0x1c] sm:$0xf]
      %v308 = vld [vmem:[%s1 + $0x20] sm:$0xf]
      %v309 = vld [vmem:[%s1 + $0x24] sm:$0xf]
      %v310 = vld [vmem:[%s1 + $0x28] sm:$0xf]
      %v311 = vld [vmem:[%s1 + $0x2c] sm:$0xf]
      %v312 = vld [vmem:[%s1 + $0x30] sm:$0xf]
      %v313 = vld [vmem:[%s1 + $0x34] sm:$0xf]
      %v314 = vld [vmem:[%s1 + $0x38] sm:$0xf]
      %v315 = vld [vmem:[%s1 + $0x3c] sm:$0xf]
      %v316 = vld [vmem:[%s1 + $0x40] sm:$0xf]
      %v317 = vld [vmem:[%s1 + $0x44] sm:$0xf]
      %v318 = vld [vmem:[%s1 + $0x48] sm:$0xf]
      %v319 = vld [vmem:[%s1 + $0x4c] sm:$0xf]
      %v320 = vld [vmem:[%s1 + $0x50] sm:$0xf]
      %v321 = vld [vmem:[%s1 + $0x54] sm:$0xf]
      %v322 = vld [vmem:[%s1 + $0x58] sm:$0xf]
      %v323 = vld [vmem:[%s1 + $0x5c] sm:$0xf]
      %v324 = vld [vmem:[%s1 + $0x60] sm:$0xf]
      %v325 = vld [vmem:[%s1 + $0x64] sm:$0xf]
      %v326 = vld [vmem:[%s1 + $0x68] sm:$0xf]
      %v327 = vld [vmem:[%s1 + $0x6c] sm:$0xf]
      %v328 = vld [vmem:[%s1 + $0x70] sm:$0xf]
      %v329 = vld [vmem:[%s1 + $0x74] sm:$0xf]
      %v330 = vld [vmem:[%s1 + $0x78] sm:$0xf]
      %v331 = vld [vmem:[%s1 + $0x7c] sm:$0xf]
      %v332 = vld [vmem:[%s1 + $0x80] sm:$0xf]
      %v333 = vld [vmem:[%s1 + $0x84] sm:$0xf]
      %v334 = vld [vmem:[%s1 + $0x88] sm:$0xf]
      %v335 = vld [vmem:[%s1 + $0x8c] sm:$0xf]
      %v336 = vld [vmem:[%s1 + $0x90] sm:$0xf]
      %v337 = vld [vmem:[%s1 + $0x94] sm:$0xf]
      %v338 = vld [vmem:[%s1 + $0x98] sm:$0xf]
      %v339 = vld [vmem:[%s1 + $0x9c] sm:$0xf]
      %v340 = vld [vmem:[%s1 + $0xa0] sm:$0xf]
      %v341 = vld [vmem:[%s1 + $0xa4] sm:$0xf]
      %v342 = vld [vmem:[%s1 + $0xa8] sm:$0xf]
      %v343 = vld [vmem:[%s1 + $0xac] sm:$0xf]
      %v344 = vld [vmem:[%s1 + $0xb0] sm:$0xf]
      %v345 = vld [vmem:[%s1 + $0xb4] sm:$0xf]
      %v346 = vld [vmem:[%s1 + $0xb8] sm:$0xf]
      %v347 = vld [vmem:[%s1 + $0xbc] sm:$0xf]
      %v348 = vld [vmem:[%s1 + $0xc0] sm:$0xf]
      %v349 = vld [vmem:[%s1 + $0xc4] sm:$0xf]
      %v350 = vld [vmem:[%s1 + $0xc8] sm:$0xf]
      %v351 = vld [vmem:[%s1 + $0xcc] sm:$0xf]
      %v352 = vld [vmem:[%s1 + $0xd0] sm:$0xf]
      %v353 = vld [vmem:[%s1 + $0xd4] sm:$0xf]
      %v354 = vld [vmem:[%s1 + $0xd8] sm:$0xf]
      %v355 = vld [vmem:[%s1 + $0xdc] sm:$0xf]
      %v356 = vld [vmem:[%s1 + $0xe0] sm:$0xf]
      %v357 = vld [vmem:[%s1 + $0xe4] sm:$0xf]
      %v358 = vld [vmem:[%s1 + $0xe8] sm:$0xf]
      %v359 = vld [vmem:[%s1 + $0xec] sm:$0xf]
      %v360 = vld [vmem:[%s1 + $0xf0] sm:$0xf]
      %v361 = vld [vmem:[%s1 + $0xf4] sm:$0xf]
      %v362 = vld [vmem:[%s1 + $0xf8] sm:$0xf]
      %v363 = vld [vmem:[%s1 + $0xfc] sm:$0xf]
      %v364 = vld [vmem:[%s1 + $0x100] sm:$0xf]
      %v365 = vld [vmem:[%s1 + $0x104] sm:$0xf]
      %v366 = vld [vmem:[%s1 + $0x108] sm:$0xf]
      %v367 = vld [vmem:[%s1 + $0x10c] sm:$0xf]
      %v368 = vld [vmem:[%s1 + $0x110] sm:$0xf]
      %v369 = vld [vmem:[%s1 + $0x114] sm:$0xf]
      %v370 = vld [vmem:[%s1 + $0x118] sm:$0xf]
      %v371 = vld [vmem:[%s1 + $0x11c] sm:$0xf]
      %v372 = vld [vmem:[%s1 + $0x120] sm:$0xf]
      %v373 = vld [vmem:[%s1 + $0x124] sm:$0xf]
      %v374 = vld [vmem:[%s1 + $0x128] sm:$0xf]
      %v375 = vld [vmem:[%s1 + $0x12c] sm:$0xf]
      %v376 = vld [vmem:[%s1 + $0x130] sm:$0xf]
      %v377 = vld [vmem:[%s1 + $0x134] sm:$0xf]
      %v378 = vld [vmem:[%s1 + $0x138] sm:$0xf]
      %v379 = vld [vmem:[%s1 + $0x13c] sm:$0xf]
      %v380 = vld [vmem:[%s1 + $0x140] sm:$0xf]
      %v381 = vld [vmem:[%s1 + $0x144] sm:$0xf]
      %v382 = vld [vmem:[%s1 + $0x148] sm:$0xf]
      %v383 = vld [vmem:[%s1 + $0x14c] sm:$0xf]
      %v384 = vld [vmem:[%s1 + $0x150] sm:$0xf]
      %v385 = vld [vmem:[%s1 + $0x154] sm:$0xf]
      %v386 = vld [vmem:[%s1 + $0x158] sm:$0xf]
      %v387 = vld [vmem:[%s1 + $0x15c] sm:$0xf]
      %v388 = vld [vmem:[%s1 + $0x160] sm:$0xf]
      %v389 = vld [vmem:[%s1 + $0x164] sm:$0xf]
      %v390 = vld [vmem:[%s1 + $0x168] sm:$0xf]
      %v391 = vld [vmem:[%s1 + $0x16c] sm:$0xf]
      %v392 = vld [vmem:[%s1 + $0x170] sm:$0xf]
      %v393 = vld [vmem:[%s1 + $0x174] sm:$0xf]
      %v394 = vld [vmem:[%s1 + $0x178] sm:$0xf]
      %v395 = vld [vmem:[%s1 + $0x17c] sm:$0xf]
      %v396 = vld [vmem:[%s1 + $0x180] sm:$0xf]
      %v397 = vld [vmem:[%s1 + $0x184] sm:$0xf]
      %v398 = vld [vmem:[%s1 + $0x188] sm:$0xf]
      %v399 = vld [vmem:[%s1 + $0x18c] sm:$0xf]
      %v528 = vunpack.c.l.b16 %v172
      %v529 = vunpack.c.h.b16 %v172
      %v530 = vunpack.c.l.b16 %v173
      %v531 = vunpack.c.h.b16 %v173
      %v532 = vunpack.c.l.b16 %v174
      %v533 = vunpack.c.h.b16 %v174
      %v534 = vunpack.c.l.b16 %v175
      %v535 = vunpack.c.l.b16 %v176
      %v536 = vunpack.c.h.b16 %v176
      %v537 = vunpack.c.l.b16 %v177
      %v538 = vunpack.c.h.b16 %v177
      %v539 = vunpack.c.l.b16 %v178
      %v540 = vunpack.c.h.b16 %v178
      %v541 = vunpack.c.l.b16 %v179
      %v542 = vunpack.c.l.b16 %v180
      %v543 = vunpack.c.h.b16 %v180
      %v544 = vunpack.c.l.b16 %v181
      %v545 = vunpack.c.h.b16 %v181
      %v546 = vunpack.c.l.b16 %v182
      %v547 = vunpack.c.h.b16 %v182
      %v548 = vunpack.c.l.b16 %v183
      %v549 = vunpack.c.l.b16 %v184
      %v550 = vunpack.c.h.b16 %v184
      %v551 = vunpack.c.l.b16 %v185
      %v552 = vunpack.c.h.b16 %v185
      %v553 = vunpack.c.l.b16 %v186
      %v554 = vunpack.c.h.b16 %v186
      %v555 = vunpack.c.l.b16 %v187
      %v556 = vunpack.c.l.b16 %v188
      %v557 = vunpack.c.h.b16 %v188
      %v558 = vunpack.c.l.b16 %v189
      %v559 = vunpack.c.h.b16 %v189
      %v560 = vunpack.c.l.b16 %v190
      %v561 = vunpack.c.h.b16 %v190
      %v562 = vunpack.c.l.b16 %v191
      %v563 = vunpack.c.l.b16 %v192
      %v564 = vunpack.c.h.b16 %v192
      %v565 = vunpack.c.l.b16 %v193
      %v566 = vunpack.c.h.b16 %v193
      %v567 = vunpack.c.l.b16 %v194
      %v568 = vunpack.c.h.b16 %v194
      %v569 = vunpack.c.l.b16 %v195
      %v570 = vunpack.c.l.b16 %v196
      %v571 = vunpack.c.h.b16 %v196
      %v572 = vunpack.c.l.b16 %v197
      %v573 = vunpack.c.h.b16 %v197
      %v574 = vunpack.c.l.b16 %v198
      %v575 = vunpack.c.h.b16 %v198
      %v576 = vunpack.c.l.b16 %v199
      %v577 = vunpack.c.l.b16 %v200
      %v578 = vunpack.c.h.b16 %v200
      %v579 = vunpack.c.l.b16 %v201
      %v580 = vunpack.c.h.b16 %v201
      %v581 = vunpack.c.l.b16 %v202
      %v582 = vunpack.c.h.b16 %v202
      %v583 = vunpack.c.l.b16 %v203
      %v584 = vunpack.c.l.b16 %v204
      %v585 = vunpack.c.h.b16 %v204
      %v586 = vunpack.c.l.b16 %v205
      %v587 = vunpack.c.h.b16 %v205
      %v588 = vunpack.c.l.b16 %v206
      %v589 = vunpack.c.h.b16 %v206
      %v590 = vunpack.c.l.b16 %v207
      %v591 = vunpack.c.l.b16 %v208
      %v592 = vunpack.c.h.b16 %v208
      %v593 = vunpack.c.l.b16 %v209
      %v594 = vunpack.c.h.b16 %v209
      %v595 = vunpack.c.l.b16 %v210
      %v596 = vunpack.c.h.b16 %v210
      %v597 = vunpack.c.l.b16 %v211
      %v598 = vunpack.c.l.b16 %v212
      %v599 = vunpack.c.h.b16 %v212
      %v600 = vunpack.c.l.b16 %v213
      %v601 = vunpack.c.h.b16 %v213
      %v602 = vunpack.c.l.b16 %v214
      %v603 = vunpack.c.h.b16 %v214
      %v604 = vunpack.c.l.b16 %v215
      %v605 = vunpack.c.l.b16 %v216
      %v606 = vunpack.c.h.b16 %v216
      %v607 = vunpack.c.l.b16 %v217
      %v608 = vunpack.c.h.b16 %v217
      %v609 = vunpack.c.l.b16 %v218
      %v610 = vunpack.c.h.b16 %v218
      %v611 = vunpack.c.l.b16 %v219
      %v612 = vunpack.c.l.b16 %v220
      %v613 = vunpack.c.h.b16 %v220
      %v614 = vunpack.c.l.b16 %v221
      %v615 = vunpack.c.h.b16 %v221
      %v616 = vunpack.c.l.b16 %v222
      %v617 = vunpack.c.h.b16 %v222
      %v618 = vunpack.c.l.b16 %v223
      %v619 = vunpack.c.l.b16 %v224
      %v620 = vunpack.c.h.b16 %v224
      %v621 = vunpack.c.l.b16 %v225
      %v622 = vunpack.c.h.b16 %v225
      %v623 = vunpack.c.l.b16 %v226
      %v624 = vunpack.c.h.b16 %v226
      %v625 = vunpack.c.l.b16 %v227
      %v626 = vunpack.c.l.b16 %v228
      %v627 = vunpack.c.h.b16 %v228
      %v628 = vunpack.c.l.b16 %v229
      %v629 = vunpack.c.h.b16 %v229
      %v630 = vunpack.c.l.b16 %v230
      %v631 = vunpack.c.h.b16 %v230
      %v632 = vunpack.c.l.b16 %v231
      %v633 = vunpack.c.l.b16 %v232
      %v634 = vunpack.c.h.b16 %v232
      %v635 = vunpack.c.l.b16 %v233
      %v636 = vunpack.c.h.b16 %v233
      %v637 = vunpack.c.l.b16 %v234
      %v638 = vunpack.c.h.b16 %v234
      %v639 = vunpack.c.l.b16 %v235
      %v640 = vunpack.c.l.b16 %v236
      %v641 = vunpack.c.h.b16 %v236
      %v642 = vunpack.c.l.b16 %v237
      %v643 = vunpack.c.h.b16 %v237
      %v644 = vunpack.c.l.b16 %v238
      %v645 = vunpack.c.h.b16 %v238
      %v646 = vunpack.c.l.b16 %v239
      %v647 = vunpack.c.l.b16 %v240
      %v648 = vunpack.c.h.b16 %v240
      %v649 = vunpack.c.l.b16 %v241
      %v650 = vunpack.c.h.b16 %v241
      %v651 = vunpack.c.l.b16 %v242
      %v652 = vunpack.c.h.b16 %v242
      %v653 = vunpack.c.l.b16 %v243
      %v654 = vunpack.c.l.b16 %v244
      %v655 = vunpack.c.h.b16 %v244
      %v656 = vunpack.c.l.b16 %v245
      %v657 = vunpack.c.h.b16 %v245
      %v658 = vunpack.c.l.b16 %v246
      %v659 = vunpack.c.h.b16 %v246
      %v660 = vunpack.c.l.b16 %v247
      %v661 = vunpack.c.l.b16 %v248
      %v662 = vunpack.c.h.b16 %v248
      %v663 = vunpack.c.l.b16 %v249
      %v664 = vunpack.c.h.b16 %v249
      %v665 = vunpack.c.l.b16 %v250
      %v666 = vunpack.c.h.b16 %v250
      %v667 = vunpack.c.l.b16 %v251
      %v668 = vunpack.c.l.b16 %v252
      %v669 = vunpack.c.h.b16 %v252
      %v670 = vunpack.c.l.b16 %v253
      %v671 = vunpack.c.h.b16 %v253
      %v672 = vunpack.c.l.b16 %v254
      %v673 = vunpack.c.h.b16 %v254
      %v674 = vunpack.c.l.b16 %v255
      %v675 = vunpack.c.l.b16 %v256
      %v676 = vunpack.c.h.b16 %v256
      %v677 = vunpack.c.l.b16 %v257
      %v678 = vunpack.c.h.b16 %v257
      %v679 = vunpack.c.l.b16 %v258
      %v680 = vunpack.c.h.b16 %v258
      %v681 = vunpack.c.l.b16 %v259
      %v682 = vunpack.c.l.b16 %v260
      %v683 = vunpack.c.h.b16 %v260
      %v684 = vunpack.c.l.b16 %v261
      %v685 = vunpack.c.h.b16 %v261
      %v686 = vunpack.c.l.b16 %v262
      %v687 = vunpack.c.h.b16 %v262
      %v688 = vunpack.c.l.b16 %v263
      %v689 = vunpack.c.l.b16 %v264
      %v690 = vunpack.c.h.b16 %v264
      %v691 = vunpack.c.l.b16 %v265
      %v692 = vunpack.c.h.b16 %v265
      %v693 = vunpack.c.l.b16 %v266
      %v694 = vunpack.c.h.b16 %v266
      %v695 = vunpack.c.l.b16 %v267
      %v696 = vunpack.c.l.b16 %v268
      %v697 = vunpack.c.h.b16 %v268
      %v698 = vunpack.c.l.b16 %v269
      %v699 = vunpack.c.h.b16 %v269
      %v700 = vunpack.c.l.b16 %v270
      %v701 = vunpack.c.h.b16 %v270
      %v702 = vunpack.c.l.b16 %v271
      %v703 = vunpack.c.l.b16 %v272
      %v704 = vunpack.c.h.b16 %v272
      %v705 = vunpack.c.l.b16 %v273
      %v706 = vunpack.c.h.b16 %v273
      %v707 = vunpack.c.l.b16 %v274
      %v708 = vunpack.c.h.b16 %v274
      %v709 = vunpack.c.l.b16 %v275
      %v710 = vunpack.c.l.b16 %v276
      %v711 = vunpack.c.h.b16 %v276
      %v712 = vunpack.c.l.b16 %v277
      %v713 = vunpack.c.h.b16 %v277
      %v714 = vunpack.c.l.b16 %v278
      %v715 = vunpack.c.h.b16 %v278
      %v716 = vunpack.c.l.b16 %v279
      %v717 = vunpack.c.l.b16 %v280
      %v718 = vunpack.c.h.b16 %v280
      %v719 = vunpack.c.l.b16 %v281
      %v720 = vunpack.c.h.b16 %v281
      %v721 = vunpack.c.l.b16 %v282
      %v722 = vunpack.c.h.b16 %v282
      %v723 = vunpack.c.l.b16 %v283
      %v724 = vunpack.c.l.b16 %v284
      %v725 = vunpack.c.h.b16 %v284
      %v726 = vunpack.c.l.b16 %v285
      %v727 = vunpack.c.h.b16 %v285
      %v728 = vunpack.c.l.b16 %v286
      %v729 = vunpack.c.h.b16 %v286
      %v730 = vunpack.c.l.b16 %v287
      %v731 = vunpack.c.l.b16 %v288
      %v732 = vunpack.c.h.b16 %v288
      %v733 = vunpack.c.l.b16 %v289
      %v734 = vunpack.c.h.b16 %v289
      %v735 = vunpack.c.l.b16 %v290
      %v736 = vunpack.c.h.b16 %v290
      %v737 = vunpack.c.l.b16 %v291
      %v738 = vunpack.c.l.b16 %v292
      %v739 = vunpack.c.h.b16 %v292
      %v740 = vunpack.c.l.b16 %v293
      %v741 = vunpack.c.h.b16 %v293
      %v742 = vunpack.c.l.b16 %v294
      %v743 = vunpack.c.h.b16 %v294
      %v744 = vunpack.c.l.b16 %v295
      %v745 = vunpack.c.l.b16 %v296
      %v746 = vunpack.c.h.b16 %v296
      %v747 = vunpack.c.l.b16 %v297
      %v748 = vunpack.c.h.b16 %v297
      %v749 = vunpack.c.l.b16 %v298
      %v750 = vunpack.c.h.b16 %v298
      %v751 = vunpack.c.l.b16 %v299
      %v752 = vpack.c.b16 %v535, %v528
      %v753 = vpack.c.b16 %v536, %v529
      %v754 = vpack.c.b16 %v537, %v530
      %v755 = vpack.c.b16 %v538, %v531
      %v756 = vpack.c.b16 %v539, %v532
      %v757 = vpack.c.b16 %v540, %v533
      %v758 = vpack.c.b16 %v541, %v534
      %v759 = vpack.c.b16 %v549, %v542
      %v760 = vpack.c.b16 %v550, %v543
      %v761 = vpack.c.b16 %v551, %v544
      %v762 = vpack.c.b16 %v552, %v545
      %v763 = vpack.c.b16 %v553, %v546
      %v764 = vpack.c.b16 %v554, %v547
      %v765 = vpack.c.b16 %v555, %v548
      %v766 = vpack.c.b16 %v563, %v556
      %v767 = vpack.c.b16 %v564, %v557
      %v768 = vpack.c.b16 %v565, %v558
      %v769 = vpack.c.b16 %v566, %v559
      %v770 = vpack.c.b16 %v567, %v560
      %v771 = vpack.c.b16 %v568, %v561
      %v772 = vpack.c.b16 %v569, %v562
      %v773 = vpack.c.b16 %v577, %v570
      %v774 = vpack.c.b16 %v578, %v571
      %v775 = vpack.c.b16 %v579, %v572
      %v776 = vpack.c.b16 %v580, %v573
      %v777 = vpack.c.b16 %v581, %v574
      %v778 = vpack.c.b16 %v582, %v575
      %v779 = vpack.c.b16 %v583, %v576
      %v780 = vpack.c.b16 %v591, %v584
      %v781 = vpack.c.b16 %v592, %v585
      %v782 = vpack.c.b16 %v593, %v586
      %v783 = vpack.c.b16 %v594, %v587
      %v784 = vpack.c.b16 %v595, %v588
      %v785 = vpack.c.b16 %v596, %v589
      %v786 = vpack.c.b16 %v597, %v590
      %v787 = vpack.c.b16 %v605, %v598
      %v788 = vpack.c.b16 %v606, %v599
      %v789 = vpack.c.b16 %v607, %v600
      %v790 = vpack.c.b16 %v608, %v601
      %v791 = vpack.c.b16 %v609, %v602
      %v792 = vpack.c.b16 %v610, %v603
      %v793 = vpack.c.b16 %v611, %v604
      %v794 = vpack.c.b16 %v619, %v612
      %v795 = vpack.c.b16 %v620, %v613
      %v796 = vpack.c.b16 %v621, %v614
      %v797 = vpack.c.b16 %v622, %v615
      %v798 = vpack.c.b16 %v623, %v616
      %v799 = vpack.c.b16 %v624, %v617
      %v800 = vpack.c.b16 %v625, %v618
      %v801 = vpack.c.b16 %v633, %v626
      %v802 = vpack.c.b16 %v634, %v627
      %v803 = vpack.c.b16 %v635, %v628
      %v804 = vpack.c.b16 %v636, %v629
      %v805 = vpack.c.b16 %v637, %v630
      %v806 = vpack.c.b16 %v638, %v631
      %v807 = vpack.c.b16 %v639, %v632
      %v808 = vpack.c.b16 %v647, %v640
      %v809 = vpack.c.b16 %v648, %v641
      %v810 = vpack.c.b16 %v649, %v642
      %v811 = vpack.c.b16 %v650, %v643
      %v812 = vpack.c.b16 %v651, %v644
      %v813 = vpack.c.b16 %v652, %v645
      %v814 = vpack.c.b16 %v653, %v646
      %v815 = vpack.c.b16 %v661, %v654
      %v816 = vpack.c.b16 %v662, %v655
      %v817 = vpack.c.b16 %v663, %v656
      %v818 = vpack.c.b16 %v664, %v657
      %v819 = vpack.c.b16 %v665, %v658
      %v820 = vpack.c.b16 %v666, %v659
      %v821 = vpack.c.b16 %v667, %v660
      %v822 = vpack.c.b16 %v675, %v668
      %v823 = vpack.c.b16 %v676, %v669
      %v824 = vpack.c.b16 %v677, %v670
      %v825 = vpack.c.b16 %v678, %v671
      %v826 = vpack.c.b16 %v679, %v672
      %v827 = vpack.c.b16 %v680, %v673
      %v828 = vpack.c.b16 %v681, %v674
      %v829 = vpack.c.b16 %v689, %v682
      %v830 = vpack.c.b16 %v690, %v683
      %v831 = vpack.c.b16 %v691, %v684
      %v832 = vpack.c.b16 %v692, %v685
      %v833 = vpack.c.b16 %v693, %v686
      %v834 = vpack.c.b16 %v694, %v687
      %v835 = vpack.c.b16 %v695, %v688
      %v836 = vpack.c.b16 %v703, %v696
      %v837 = vpack.c.b16 %v704, %v697
      %v838 = vpack.c.b16 %v705, %v698
      %v839 = vpack.c.b16 %v706, %v699
      %v840 = vpack.c.b16 %v707, %v700
      %v841 = vpack.c.b16 %v708, %v701
      %v842 = vpack.c.b16 %v709, %v702
      %v843 = vpack.c.b16 %v717, %v710
      %v844 = vpack.c.b16 %v718, %v711
      %v845 = vpack.c.b16 %v719, %v712
      %v846 = vpack.c.b16 %v720, %v713
      %v847 = vpack.c.b16 %v721, %v714
      %v848 = vpack.c.b16 %v722, %v715
      %v849 = vpack.c.b16 %v723, %v716
      %v850 = vpack.c.b16 %v731, %v724
      %v851 = vpack.c.b16 %v732, %v725
      %v852 = vpack.c.b16 %v733, %v726
      %v853 = vpack.c.b16 %v734, %v727
      %v854 = vpack.c.b16 %v735, %v728
      %v855 = vpack.c.b16 %v736, %v729
      %v856 = vpack.c.b16 %v737, %v730
      %v857 = vpack.c.b16 %v745, %v738
      %v858 = vpack.c.b16 %v746, %v739
      %v859 = vpack.c.b16 %v747, %v740
      %v860 = vpack.c.b16 %v748, %v741
      %v861 = vpack.c.b16 %v749, %v742
      %v862 = vpack.c.b16 %v750, %v743
      %v863 = vpack.c.b16 %v751, %v744
      %v1060 = vunpack.c.l.b16 %v300
      %v1061 = vunpack.c.l.b16 %v301
      %v1062 = vunpack.c.l.b16 %v302
      %v1063 = vunpack.c.l.b16 %v303
      %v1064 = vunpack.c.l.b16 %v304
      %v1065 = vunpack.c.l.b16 %v305
      %v1066 = vunpack.c.l.b16 %v306
      %v1067 = vunpack.c.l.b16 %v307
      %v1068 = vunpack.c.l.b16 %v308
      %v1069 = vunpack.c.l.b16 %v309
      %v1070 = vunpack.c.l.b16 %v310
      %v1071 = vunpack.c.l.b16 %v311
      %v1072 = vunpack.c.l.b16 %v312
      %v1073 = vunpack.c.l.b16 %v313
      %v1074 = vunpack.c.l.b16 %v314
      %v1075 = vunpack.c.l.b16 %v315
      %v1076 = vunpack.c.l.b16 %v316
      %v1077 = vunpack.c.l.b16 %v317
      %v1078 = vunpack.c.l.b16 %v318
      %v1079 = vunpack.c.l.b16 %v319
      %v1080 = vunpack.c.l.b16 %v320
      %v1081 = vunpack.c.l.b16 %v321
      %v1082 = vunpack.c.l.b16 %v322
      %v1083 = vunpack.c.l.b16 %v323
      %v1084 = vunpack.c.l.b16 %v324
      %v1085 = vunpack.c.l.b16 %v325
      %v1086 = vunpack.c.l.b16 %v326
      %v1087 = vunpack.c.l.b16 %v327
      %v1088 = vunpack.c.l.b16 %v328
      %v1089 = vunpack.c.l.b16 %v329
      %v1090 = vunpack.c.l.b16 %v330
      %v1091 = vunpack.c.l.b16 %v331
      %v1092 = vunpack.c.l.b16 %v332
      %v1093 = vunpack.c.l.b16 %v333
      %v1094 = vunpack.c.l.b16 %v334
      %v1095 = vunpack.c.l.b16 %v335
      %v1096 = vunpack.c.l.b16 %v336
      %v1097 = vunpack.c.l.b16 %v337
      %v1098 = vunpack.c.l.b16 %v338
      %v1099 = vunpack.c.l.b16 %v339
      %v1100 = vunpack.c.l.b16 %v340
      %v1101 = vunpack.c.l.b16 %v341
      %v1102 = vunpack.c.l.b16 %v342
      %v1103 = vunpack.c.l.b16 %v343
      %v1104 = vunpack.c.l.b16 %v344
      %v1105 = vunpack.c.l.b16 %v345
      %v1106 = vunpack.c.l.b16 %v346
      %v1107 = vunpack.c.l.b16 %v347
      %v1108 = vunpack.c.l.b16 %v348
      %v1109 = vunpack.c.l.b16 %v349
      %v1110 = vunpack.c.l.b16 %v350
      %v1111 = vunpack.c.l.b16 %v351
      %v1112 = vunpack.c.l.b16 %v352
      %v1113 = vunpack.c.l.b16 %v353
      %v1114 = vunpack.c.l.b16 %v354
      %v1115 = vunpack.c.l.b16 %v355
      %v1116 = vunpack.c.l.b16 %v356
      %v1117 = vunpack.c.l.b16 %v357
      %v1118 = vunpack.c.l.b16 %v358
      %v1119 = vunpack.c.l.b16 %v359
      %v1120 = vunpack.c.l.b16 %v360
      %v1121 = vunpack.c.l.b16 %v361
      %v1122 = vunpack.c.l.b16 %v362
      %v1123 = vunpack.c.l.b16 %v363
      %v1124 = vunpack.c.l.b16 %v364
      %v1125 = vunpack.c.l.b16 %v365
      %v1126 = vunpack.c.l.b16 %v366
      %v1127 = vunpack.c.l.b16 %v367
      %v1128 = vunpack.c.l.b16 %v368
      %v1129 = vunpack.c.l.b16 %v369
      %v1130 = vunpack.c.l.b16 %v370
      %v1131 = vunpack.c.l.b16 %v371
      %v1132 = vunpack.c.l.b16 %v372
      %v1133 = vunpack.c.l.b16 %v373
      %v1134 = vunpack.c.l.b16 %v374
      %v1135 = vunpack.c.l.b16 %v375
      %v1136 = vunpack.c.l.b16 %v376
      %v1137 = vunpack.c.l.b16 %v377
      %v1138 = vunpack.c.l.b16 %v378
      %v1139 = vunpack.c.l.b16 %v379
      %v1140 = vunpack.c.l.b16 %v380
      %v1141 = vunpack.c.l.b16 %v381
      %v1142 = vunpack.c.l.b16 %v382
      %v1143 = vunpack.c.l.b16 %v383
      %v1144 = vunpack.c.l.b16 %v384
      %v1145 = vunpack.c.l.b16 %v385
      %v1146 = vunpack.c.l.b16 %v386
      %v1147 = vunpack.c.l.b16 %v387
      %v1148 = vunpack.c.l.b16 %v388
      %v1149 = vunpack.c.l.b16 %v389
      %v1150 = vunpack.c.l.b16 %v390
      %v1151 = vunpack.c.l.b16 %v391
      %v1152 = vunpack.c.l.b16 %v392
      %v1153 = vunpack.c.l.b16 %v393
      %v1154 = vunpack.c.l.b16 %v394
      %v1155 = vunpack.c.l.b16 %v395
      %v1156 = vunpack.c.l.b16 %v396
      %v1157 = vunpack.c.l.b16 %v397
      %v1158 = vunpack.c.l.b16 %v398
      %v1159 = vunpack.c.l.b16 %v399
      %v1160 = vpack.c.b16 %v1061, %v1060
      %v1161 = vpack.c.b16 %v1063, %v1062
      %v1162 = vpack.c.b16 %v1065, %v1064
      %v1163 = vpack.c.b16 %v1067, %v1066
      %v1164 = vpack.c.b16 %v1069, %v1068
      %v1165 = vpack.c.b16 %v1071, %v1070
      %v1166 = vpack.c.b16 %v1073, %v1072
      %v1167 = vpack.c.b16 %v1075, %v1074
      %v1168 = vpack.c.b16 %v1077, %v1076
      %v1169 = vpack.c.b16 %v1079, %v1078
      %v1170 = vpack.c.b16 %v1081, %v1080
      %v1171 = vpack.c.b16 %v1083, %v1082
      %v1172 = vpack.c.b16 %v1085, %v1084
      %v1173 = vpack.c.b16 %v1087, %v1086
      %v1174 = vpack.c.b16 %v1089, %v1088
      %v1175 = vpack.c.b16 %v1091, %v1090
      %v1176 = vpack.c.b16 %v1093, %v1092
      %v1177 = vpack.c.b16 %v1095, %v1094
      %v1178 = vpack.c.b16 %v1097, %v1096
      %v1179 = vpack.c.b16 %v1099, %v1098
      %v1180 = vpack.c.b16 %v1101, %v1100
      %v1181 = vpack.c.b16 %v1103, %v1102
      %v1182 = vpack.c.b16 %v1105, %v1104
      %v1183 = vpack.c.b16 %v1107, %v1106
      %v1184 = vpack.c.b16 %v1109, %v1108
      %v1185 = vpack.c.b16 %v1111, %v1110
      %v1186 = vpack.c.b16 %v1113, %v1112
      %v1187 = vpack.c.b16 %v1115, %v1114
      %v1188 = vpack.c.b16 %v1117, %v1116
      %v1189 = vpack.c.b16 %v1119, %v1118
      %v1190 = vpack.c.b16 %v1121, %v1120
      %v1191 = vpack.c.b16 %v1123, %v1122
      %v1192 = vpack.c.b16 %v1125, %v1124
      %v1193 = vpack.c.b16 %v1127, %v1126
      %v1194 = vpack.c.b16 %v1129, %v1128
      %v1195 = vpack.c.b16 %v1131, %v1130
      %v1196 = vpack.c.b16 %v1133, %v1132
      %v1197 = vpack.c.b16 %v1135, %v1134
      %v1198 = vpack.c.b16 %v1137, %v1136
      %v1199 = vpack.c.b16 %v1139, %v1138
      %v1200 = vpack.c.b16 %v1141, %v1140
      %v1201 = vpack.c.b16 %v1143, %v1142
      %v1202 = vpack.c.b16 %v1145, %v1144
      %v1203 = vpack.c.b16 %v1147, %v1146
      %v1204 = vpack.c.b16 %v1149, %v1148
      %v1205 = vpack.c.b16 %v1151, %v1150
      %v1206 = vpack.c.b16 %v1153, %v1152
      %v1207 = vpack.c.b16 %v1155, %v1154
      %v1208 = vpack.c.b16 %v1157, %v1156
      %v1209 = vpack.c.b16 %v1159, %v1158
      %vm1260 = vcmask 261120
      %v1262 = vsel %vm1260, %v758, 0
      %v1265 = vsel %vm1260, %v765, 0
      %v1268 = vsel %vm1260, %v772, 0
      %v1271 = vsel %vm1260, %v779, 0
      %v1274 = vsel %vm1260, %v786, 0
      %v1277 = vsel %vm1260, %v793, 0
      %v1280 = vsel %vm1260, %v800, 0
      %v1283 = vsel %vm1260, %v807, 0
      %v1286 = vsel %vm1260, %v814, 0
      %v1289 = vsel %vm1260, %v821, 0
      %v1292 = vsel %vm1260, %v828, 0
      %v1295 = vsel %vm1260, %v835, 0
      %v1298 = vsel %vm1260, %v842, 0
      %v1301 = vsel %vm1260, %v849, 0
      %v1304 = vsel %vm1260, %v856, 0
      %v1307 = vsel %vm1260, %v863, 0
      %1309 = vmatprep.subr.bf16.mxu0 0
      %1310 = vmatpush1.bf16.msra.mxu0 %v1160
      %1311 = vmatprep.subr.bf16.mxu0 0
      %1312 = vmatpush1.bf16.msra.mxu0 %v1161
      %1313 = vmatprep.subr.bf16.mxu0 0
      %1314 = vmatpush1.bf16.msra.mxu0 %v1162
      %1315 = vmatprep.subr.bf16.mxu0 0
      %1316 = vmatpush1.bf16.msra.mxu0 %v1163
      %1317 = vmatprep.subr.bf16.mxu0 0
      %1318 = vmatpush1.bf16.msra.mxu0 %v1164
      %1319 = vmatprep.subr.bf16.mxu0 0
      %1320 = vmatpush1.bf16.msra.mxu0 %v1165
      %1321 = vmatprep.subr.bf16.mxu0 0
      %1322 = vmatpush1.bf16.msra.mxu0 %v1166
      %1323 = vmatprep.subr.bf16.mxu0 0
      %1324 = vmatpush1.bf16.msra.mxu0 %v1167
      %1325 = vmatprep.subr.bf16.mxu0 0
      %1326 = vmatpush1.bf16.msra.mxu0 %v1168
      %1327 = vmatprep.subr.bf16.mxu0 0
      %1328 = vmatpush1.bf16.msra.mxu0 %v1169
      %1329 = vmatprep.subr.bf16.mxu0 0
      %1330 = vmatpush1.bf16.msra.mxu0 %v1170
      %1331 = vmatprep.subr.bf16.mxu0 0
      %1332 = vmatpush1.bf16.msra.mxu0 %v1171
      %1333 = vmatprep.subr.bf16.mxu0 0
      %1334 = vmatpush1.bf16.msra.mxu0 %v1172
      %1335 = vmatprep.subr.bf16.mxu0 0
      %1336 = vmatpush1.bf16.msra.mxu0 %v1173
      %1337 = vmatprep.subr.bf16.mxu0 0
      %1338 = vmatpush1.bf16.msra.mxu0 %v1174
      %1339 = vmatprep.subr.bf16.mxu0 0
      %1340 = vmatpush1.bf16.msra.mxu0 %v1175
      %1341 = vmatprep.mubr.bf16.mxu0 %v753
      %1342 = vmatmul.mubr.bf16.gmra.mrb[0].mxu0 %v752
      %v1343 = vpop.f32.mrb[0].mxu0
      %v1344 = vadd.f32 0.0, %v1343
      %v1345 = vpop.f32.mrb[0].mxu0
      %v1346 = vpop.f32.mrb[0].mxu0
      %v1347 = vadd.f32 0.0, %v1346
      %v1348 = vpop.f32.mrb[0].mxu0
      %1349 = vmatprep.mubr.bf16.mxu0 %v760
      %1350 = vmatmul.mubr.bf16.gmra.mrb[0].mxu0 %v759
      %v1351 = vpop.f32.mrb[0].mxu0
      %v1352 = vadd.f32 0.0, %v1351
      %v1353 = vpop.f32.mrb[0].mxu0
      %v1354 = vpop.f32.mrb[0].mxu0
      %v1355 = vadd.f32 0.0, %v1354
      %v1356 = vpop.f32.mrb[0].mxu0
      %1357 = vmatprep.mubr.bf16.mxu0 %v767
      %1358 = vmatmul.mubr.bf16.gmra.mrb[0].mxu0 %v766
      %v1359 = vpop.f32.mrb[0].mxu0
      %v1360 = vadd.f32 0.0, %v1359
      %v1361 = vpop.f32.mrb[0].mxu0
      %v1362 = vpop.f32.mrb[0].mxu0
      %v1363 = vadd.f32 0.0, %v1362
      %v1364 = vpop.f32.mrb[0].mxu0
      %1365 = vmatprep.mubr.bf16.mxu0 %v774
      %1366 = vmatmul.mubr.bf16.gmra.mrb[0].mxu0 %v773
      %v1367 = vpop.f32.mrb[0].mxu0
      %v1368 = vadd.f32 0.0, %v1367
      %v1369 = vpop.f32.mrb[0].mxu0
      %v1370 = vpop.f32.mrb[0].mxu0
      %v1371 = vadd.f32 0.0, %v1370
      %v1372 = vpop.f32.mrb[0].mxu0
      %1373 = vmatprep.mubr.bf16.mxu0 %v781
      %1374 = vmatmul.mubr.bf16.gmra.mrb[0].mxu0 %v780
      %v1375 = vpop.f32.mrb[0].mxu0
      %v1376 = vadd.f32 0.0, %v1375
      %v1377 = vpop.f32.mrb[0].mxu0
      %v1378 = vpop.f32.mrb[0].mxu0
      %v1379 = vadd.f32 0.0, %v1378
      %v1380 = vpop.f32.mrb[0].mxu0
      %1381 = vmatprep.mubr.bf16.mxu0 %v788
      %1382 = vmatmul.mubr.bf16.gmra.mrb[0].mxu0 %v787
      %v1383 = vpop.f32.mrb[0].mxu0
      %v1384 = vadd.f32 0.0, %v1383
      %v1385 = vpop.f32.mrb[0].mxu0
      %v1386 = vpop.f32.mrb[0].mxu0
      %v1387 = vadd.f32 0.0, %v1386
      %v1388 = vpop.f32.mrb[0].mxu0
      %1389 = vmatprep.mubr.bf16.mxu0 %v795
      %1390 = vmatmul.mubr.bf16.gmra.mrb[0].mxu0 %v794
      %v1391 = vpop.f32.mrb[0].mxu0
      %v1392 = vadd.f32 0.0, %v1391
      %v1393 = vpop.f32.mrb[0].mxu0
      %v1394 = vpop.f32.mrb[0].mxu0
      %v1395 = vadd.f32 0.0, %v1394
      %v1396 = vpop.f32.mrb[0].mxu0
      %1397 = vmatprep.mubr.bf16.mxu0 %v802
      %1398 = vmatmul.mubr.bf16.gmra.mrb[0].mxu0 %v801
      %v1399 = vpop.f32.mrb[0].mxu0
      %v1400 = vadd.f32 0.0, %v1399
      %v1401 = vpop.f32.mrb[0].mxu0
      %v1402 = vpop.f32.mrb[0].mxu0
      %v1403 = vadd.f32 0.0, %v1402
      %v1404 = vpop.f32.mrb[0].mxu0
      %1405 = vmatprep.mubr.bf16.mxu0 %v809
      %1406 = vmatmul.mubr.bf16.gmra.mrb[0].mxu0 %v808
      %v1407 = vpop.f32.mrb[0].mxu0
      %v1408 = vadd.f32 0.0, %v1407
      %v1409 = vpop.f32.mrb[0].mxu0
      %v1410 = vpop.f32.mrb[0].mxu0
      %v1411 = vadd.f32 0.0, %v1410
      %v1412 = vpop.f32.mrb[0].mxu0
      %1413 = vmatprep.mubr.bf16.mxu0 %v816
      %1414 = vmatmul.mubr.bf16.gmra.mrb[0].mxu0 %v815
      %v1415 = vpop.f32.mrb[0].mxu0
      %v1416 = vadd.f32 0.0, %v1415
      %v1417 = vpop.f32.mrb[0].mxu0
      %v1418 = vpop.f32.mrb[0].mxu0
      %v1419 = vadd.f32 0.0, %v1418
      %v1420 = vpop.f32.mrb[0].mxu0
      %1421 = vmatprep.mubr.bf16.mxu0 %v823
      %1422 = vmatmul.mubr.bf16.gmra.mrb[0].mxu0 %v822
      %v1423 = vpop.f32.mrb[0].mxu0
      %v1424 = vadd.f32 0.0, %v1423
      %v1425 = vpop.f32.mrb[0].mxu0
      %v1426 = vpop.f32.mrb[0].mxu0
      %v1427 = vadd.f32 0.0, %v1426
      %v1428 = vpop.f32.mrb[0].mxu0
      %1429 = vmatprep.mubr.bf16.mxu0 %v830
      %1430 = vmatmul.mubr.bf16.gmra.mrb[0].mxu0 %v829
      %v1431 = vpop.f32.mrb[0].mxu0
      %v1432 = vadd.f32 0.0, %v1431
      %v1433 = vpop.f32.mrb[0].mxu0
      %v1434 = vpop.f32.mrb[0].mxu0
      %v1435 = vadd.f32 0.0, %v1434
      %v1436 = vpop.f32.mrb[0].mxu0
      %1437 = vmatprep.mubr.bf16.mxu0 %v837
      %1438 = vmatmul.mubr.bf16.gmra.mrb[0].mxu0 %v836
      %v1439 = vpop.f32.mrb[0].mxu0
      %v1440 = vadd.f32 0.0, %v1439
      %v1441 = vpop.f32.mrb[0].mxu0
      %v1442 = vpop.f32.mrb[0].mxu0
      %v1443 = vadd.f32 0.0, %v1442
      %v1444 = vpop.f32.mrb[0].mxu0
      %1445 = vmatprep.mubr.bf16.mxu0 %v844
      %1446 = vmatmul.mubr.bf16.gmra.mrb[0].mxu0 %v843
      %v1447 = vpop.f32.mrb[0].mxu0
      %v1448 = vadd.f32 0.0, %v1447
      %v1449 = vpop.f32.mrb[0].mxu0
      %v1450 = vpop.f32.mrb[0].mxu0
      %v1451 = vadd.f32 0.0, %v1450
      %v1452 = vpop.f32.mrb[0].mxu0
      %1453 = vmatprep.mubr.bf16.mxu0 %v851
      %1454 = vmatmul.mubr.bf16.gmra.mrb[0].mxu0 %v850
      %v1455 = vpop.f32.mrb[0].mxu0
      %v1456 = vadd.f32 0.0, %v1455
      %v1457 = vpop.f32.mrb[0].mxu0
      %v1458 = vpop.f32.mrb[0].mxu0
      %v1459 = vadd.f32 0.0, %v1458
      %v1460 = vpop.f32.mrb[0].mxu0
      %1461 = vmatprep.mubr.bf16.mxu0 %v858
      %1462 = vmatmul.mubr.bf16.gmra.mrb[0].mxu0 %v857
      %v1463 = vpop.f32.mrb[0].mxu0
      %v1464 = vadd.f32 0.0, %v1463
      %v1465 = vpop.f32.mrb[0].mxu0
      %v1466 = vpop.f32.mrb[0].mxu0
      %v1467 = vadd.f32 0.0, %v1466
      %v1468 = vpop.f32.mrb[0].mxu0
      %1469 = vdwg.mxu0
      %1470 = vmatprep.subr.bf16.mxu0 0
      %1471 = vmatpush1.bf16.msra.mxu0 %v1176
      %1472 = vmatprep.subr.bf16.mxu0 0
      %1473 = vmatpush1.bf16.msra.mxu0 %v1177
      %1474 = vmatprep.subr.bf16.mxu0 0
      %1475 = vmatpush1.bf16.msra.mxu0 %v1178
      %1476 = vmatprep.subr.bf16.mxu0 0
      %1477 = vmatpush1.bf16.msra.mxu0 %v1179
      %1478 = vmatprep.subr.bf16.mxu0 0
      %1479 = vmatpush1.bf16.msra.mxu0 %v1180
      %1480 = vmatprep.subr.bf16.mxu0 0
      %1481 = vmatpush1.bf16.msra.mxu0 %v1181
      %1482 = vmatprep.subr.bf16.mxu0 0
      %1483 = vmatpush1.bf16.msra.mxu0 %v1182
      %1484 = vmatprep.subr.bf16.mxu0 0
      %1485 = vmatpush1.bf16.msra.mxu0 %v1183
      %1486 = vmatprep.subr.bf16.mxu0 0
      %1487 = vmatpush1.bf16.msra.mxu0 %v1184
      %1488 = vmatprep.subr.bf16.mxu0 0
      %1489 = vmatpush1.bf16.msra.mxu0 %v1185
      %1490 = vmatprep.subr.bf16.mxu0 0
      %1491 = vmatpush1.bf16.msra.mxu0 %v1186
      %1492 = vmatprep.subr.bf16.mxu0 0
      %1493 = vmatpush1.bf16.msra.mxu0 %v1187
      %1494 = vmatprep.subr.bf16.mxu0 0
      %1495 = vmatpush1.bf16.msra.mxu0 %v1188
      %1496 = vmatprep.subr.bf16.mxu0 0
      %1497 = vmatpush1.bf16.msra.mxu0 %v1189
      %1498 = vmatprep.subr.bf16.mxu0 0
      %1499 = vmatpush1.bf16.msra.mxu0 %v1190
      %1500 = vmatprep.subr.bf16.mxu0 0
      %1501 = vmatpush1.bf16.msra.mxu0 %v1191
      %1502 = vmatprep.mubr.bf16.mxu0 %v755
      %1503 = vmatmul.mubr.bf16.gmra.mrb[0].mxu0 %v754
      %v1504 = vpop.f32.mrb[0].mxu0
      %v1505 = vadd.f32 %v1344, %v1504
      %v1506 = vpop.f32.mrb[0].mxu0
      %v1507 = vpop.f32.mrb[0].mxu0
      %v1508 = vadd.f32 %v1347, %v1507
      %v1509 = vpop.f32.mrb[0].mxu0
      %1510 = vmatprep.mubr.bf16.mxu0 %v762
      %1511 = vmatmul.mubr.bf16.gmra.mrb[0].mxu0 %v761
      %v1512 = vpop.f32.mrb[0].mxu0
      %v1513 = vadd.f32 %v1352, %v1512
      %v1514 = vpop.f32.mrb[0].mxu0
      %v1515 = vpop.f32.mrb[0].mxu0
      %v1516 = vadd.f32 %v1355, %v1515
      %v1517 = vpop.f32.mrb[0].mxu0
      %1518 = vmatprep.mubr.bf16.mxu0 %v769
      %1519 = vmatmul.mubr.bf16.gmra.mrb[0].mxu0 %v768
      %v1520 = vpop.f32.mrb[0].mxu0
      %v1521 = vadd.f32 %v1360, %v1520
      %v1522 = vpop.f32.mrb[0].mxu0
      %v1523 = vpop.f32.mrb[0].mxu0
      %v1524 = vadd.f32 %v1363, %v1523
      %v1525 = vpop.f32.mrb[0].mxu0
      %1526 = vmatprep.mubr.bf16.mxu0 %v776
      %1527 = vmatmul.mubr.bf16.gmra.mrb[0].mxu0 %v775
      %v1528 = vpop.f32.mrb[0].mxu0
      %v1529 = vadd.f32 %v1368, %v1528
      %v1530 = vpop.f32.mrb[0].mxu0
      %v1531 = vpop.f32.mrb[0].mxu0
      %v1532 = vadd.f32 %v1371, %v1531
      %v1533 = vpop.f32.mrb[0].mxu0
      %1534 = vmatprep.mubr.bf16.mxu0 %v783
      %1535 = vmatmul.mubr.bf16.gmra.mrb[0].mxu0 %v782
      %v1536 = vpop.f32.mrb[0].mxu0
      %v1537 = vadd.f32 %v1376, %v1536
      %v1538 = vpop.f32.mrb[0].mxu0
      %v1539 = vpop.f32.mrb[0].mxu0
      %v1540 = vadd.f32 %v1379, %v1539
      %v1541 = vpop.f32.mrb[0].mxu0
      %1542 = vmatprep.mubr.bf16.mxu0 %v790
      %1543 = vmatmul.mubr.bf16.gmra.mrb[0].mxu0 %v789
      %v1544 = vpop.f32.mrb[0].mxu0
      %v1545 = vadd.f32 %v1384, %v1544
      %v1546 = vpop.f32.mrb[0].mxu0
      %v1547 = vpop.f32.mrb[0].mxu0
      %v1548 = vadd.f32 %v1387, %v1547
      %v1549 = vpop.f32.mrb[0].mxu0
      %1550 = vmatprep.mubr.bf16.mxu0 %v797
      %1551 = vmatmul.mubr.bf16.gmra.mrb[0].mxu0 %v796
      %v1552 = vpop.f32.mrb[0].mxu0
      %v1553 = vadd.f32 %v1392, %v1552
      %v1554 = vpop.f32.mrb[0].mxu0
      %v1555 = vpop.f32.mrb[0].mxu0
      %v1556 = vadd.f32 %v1395, %v1555
      %v1557 = vpop.f32.mrb[0].mxu0
      %1558 = vmatprep.mubr.bf16.mxu0 %v804
      %1559 = vmatmul.mubr.bf16.gmra.mrb[0].mxu0 %v803
      %v1560 = vpop.f32.mrb[0].mxu0
      %v1561 = vadd.f32 %v1400, %v1560
      %v1562 = vpop.f32.mrb[0].mxu0
      %v1563 = vpop.f32.mrb[0].mxu0
      %v1564 = vadd.f32 %v1403, %v1563
      %v1565 = vpop.f32.mrb[0].mxu0
      %1566 = vmatprep.mubr.bf16.mxu0 %v811
      %1567 = vmatmul.mubr.bf16.gmra.mrb[0].mxu0 %v810
      %v1568 = vpop.f32.mrb[0].mxu0
      %v1569 = vadd.f32 %v1408, %v1568
      %v1570 = vpop.f32.mrb[0].mxu0
      %v1571 = vpop.f32.mrb[0].mxu0
      %v1572 = vadd.f32 %v1411, %v1571
      %v1573 = vpop.f32.mrb[0].mxu0
      %1574 = vmatprep.mubr.bf16.mxu0 %v818
      %1575 = vmatmul.mubr.bf16.gmra.mrb[0].mxu0 %v817
      %v1576 = vpop.f32.mrb[0].mxu0
      %v1577 = vadd.f32 %v1416, %v1576
      %v1578 = vpop.f32.mrb[0].mxu0
      %v1579 = vpop.f32.mrb[0].mxu0
      %v1580 = vadd.f32 %v1419, %v1579
      %v1581 = vpop.f32.mrb[0].mxu0
      %1582 = vmatprep.mubr.bf16.mxu0 %v825
      %1583 = vmatmul.mubr.bf16.gmra.mrb[0].mxu0 %v824
      %v1584 = vpop.f32.mrb[0].mxu0
      %v1585 = vadd.f32 %v1424, %v1584
      %v1586 = vpop.f32.mrb[0].mxu0
      %v1587 = vpop.f32.mrb[0].mxu0
      %v1588 = vadd.f32 %v1427, %v1587
      %v1589 = vpop.f32.mrb[0].mxu0
      %1590 = vmatprep.mubr.bf16.mxu0 %v832
      %1591 = vmatmul.mubr.bf16.gmra.mrb[0].mxu0 %v831
      %v1592 = vpop.f32.mrb[0].mxu0
      %v1593 = vadd.f32 %v1432, %v1592
      %v1594 = vpop.f32.mrb[0].mxu0
      %v1595 = vpop.f32.mrb[0].mxu0
      %v1596 = vadd.f32 %v1435, %v1595
      %v1597 = vpop.f32.mrb[0].mxu0
      %1598 = vmatprep.mubr.bf16.mxu0 %v839
      %1599 = vmatmul.mubr.bf16.gmra.mrb[0].mxu0 %v838
      %v1600 = vpop.f32.mrb[0].mxu0
      %v1601 = vadd.f32 %v1440, %v1600
      %v1602 = vpop.f32.mrb[0].mxu0
      %v1603 = vpop.f32.mrb[0].mxu0
      %v1604 = vadd.f32 %v1443, %v1603
      %v1605 = vpop.f32.mrb[0].mxu0
      %1606 = vmatprep.mubr.bf16.mxu0 %v846
      %1607 = vmatmul.mubr.bf16.gmra.mrb[0].mxu0 %v845
      %v1608 = vpop.f32.mrb[0].mxu0
      %v1609 = vadd.f32 %v1448, %v1608
      %v1610 = vpop.f32.mrb[0].mxu0
      %v1611 = vpop.f32.mrb[0].mxu0
      %v1612 = vadd.f32 %v1451, %v1611
      %v1613 = vpop.f32.mrb[0].mxu0
      %1614 = vmatprep.mubr.bf16.mxu0 %v853
      %1615 = vmatmul.mubr.bf16.gmra.mrb[0].mxu0 %v852
      %v1616 = vpop.f32.mrb[0].mxu0
      %v1617 = vadd.f32 %v1456, %v1616
      %v1618 = vpop.f32.mrb[0].mxu0
      %v1619 = vpop.f32.mrb[0].mxu0
      %v1620 = vadd.f32 %v1459, %v1619
      %v1621 = vpop.f32.mrb[0].mxu0
      %1622 = vmatprep.mubr.bf16.mxu0 %v860
      %1623 = vmatmul.mubr.bf16.gmra.mrb[0].mxu0 %v859
      %v1624 = vpop.f32.mrb[0].mxu0
      %v1625 = vadd.f32 %v1464, %v1624
      %v1626 = vpop.f32.mrb[0].mxu0
      %v1627 = vpop.f32.mrb[0].mxu0
      %v1628 = vadd.f32 %v1467, %v1627
      %v1629 = vpop.f32.mrb[0].mxu0
      %1630 = vdwg.mxu0
      %1631 = vmatprep.subr.bf16.mxu0 0
      %1632 = vmatpush1.bf16.msra.mxu0 %v1192
      %1633 = vmatprep.subr.bf16.mxu0 0
      %1634 = vmatpush1.bf16.msra.mxu0 %v1193
      %1635 = vmatprep.subr.bf16.mxu0 0
      %1636 = vmatpush1.bf16.msra.mxu0 %v1194
      %1637 = vmatprep.subr.bf16.mxu0 0
      %1638 = vmatpush1.bf16.msra.mxu0 %v1195
      %1639 = vmatprep.subr.bf16.mxu0 0
      %1640 = vmatpush1.bf16.msra.mxu0 %v1196
      %1641 = vmatprep.subr.bf16.mxu0 0
      %1642 = vmatpush1.bf16.msra.mxu0 %v1197
      %1643 = vmatprep.subr.bf16.mxu0 0
      %1644 = vmatpush1.bf16.msra.mxu0 %v1198
      %1645 = vmatprep.subr.bf16.mxu0 0
      %1646 = vmatpush1.bf16.msra.mxu0 %v1199
      %1647 = vmatprep.subr.bf16.mxu0 0
      %1648 = vmatpush1.bf16.msra.mxu0 %v1200
      %1649 = vmatprep.subr.bf16.mxu0 0
      %1650 = vmatpush1.bf16.msra.mxu0 %v1201
      %1651 = vmatprep.subr.bf16.mxu0 0
      %1652 = vmatpush1.bf16.msra.mxu0 %v1202
      %1653 = vmatprep.subr.bf16.mxu0 0
      %1654 = vmatpush1.bf16.msra.mxu0 %v1203
      %1655 = vmatprep.subr.bf16.mxu0 0
      %1656 = vmatpush1.bf16.msra.mxu0 %v1204
      %1657 = vmatprep.subr.bf16.mxu0 0
      %1658 = vmatpush1.bf16.msra.mxu0 %v1205
      %1659 = vmatprep.subr.bf16.mxu0 0
      %1660 = vmatpush1.bf16.msra.mxu0 %v1206
      %1661 = vmatprep.subr.bf16.mxu0 0
      %1662 = vmatpush1.bf16.msra.mxu0 %v1207
      %1663 = vmatprep.mubr.bf16.mxu0 %v757
      %1664 = vmatmul.mubr.bf16.gmra.mrb[0].mxu0 %v756
      %v1665 = vpop.f32.mrb[0].mxu0
      %v1666 = vadd.f32 %v1505, %v1665
      %v1667 = vpop.f32.mrb[0].mxu0
      %v1668 = vpop.f32.mrb[0].mxu0
      %v1669 = vadd.f32 %v1508, %v1668
      %v1670 = vpop.f32.mrb[0].mxu0
      %1671 = vmatprep.mubr.bf16.mxu0 %v764
      %1672 = vmatmul.mubr.bf16.gmra.mrb[0].mxu0 %v763
      %v1673 = vpop.f32.mrb[0].mxu0
      %v1674 = vadd.f32 %v1513, %v1673
      %v1675 = vpop.f32.mrb[0].mxu0
      %v1676 = vpop.f32.mrb[0].mxu0
      %v1677 = vadd.f32 %v1516, %v1676
      %v1678 = vpop.f32.mrb[0].mxu0
      %1679 = vmatprep.mubr.bf16.mxu0 %v771
      %1680 = vmatmul.mubr.bf16.gmra.mrb[0].mxu0 %v770
      %v1681 = vpop.f32.mrb[0].mxu0
      %v1682 = vadd.f32 %v1521, %v1681
      %v1683 = vpop.f32.mrb[0].mxu0
      %v1684 = vpop.f32.mrb[0].mxu0
      %v1685 = vadd.f32 %v1524, %v1684
      %v1686 = vpop.f32.mrb[0].mxu0
      %1687 = vmatprep.mubr.bf16.mxu0 %v778
      %1688 = vmatmul.mubr.bf16.gmra.mrb[0].mxu0 %v777
      %v1689 = vpop.f32.mrb[0].mxu0
      %v1690 = vadd.f32 %v1529, %v1689
      %v1691 = vpop.f32.mrb[0].mxu0
      %v1692 = vpop.f32.mrb[0].mxu0
      %v1693 = vadd.f32 %v1532, %v1692
      %v1694 = vpop.f32.mrb[0].mxu0
      %1695 = vmatprep.mubr.bf16.mxu0 %v785
      %1696 = vmatmul.mubr.bf16.gmra.mrb[0].mxu0 %v784
      %v1697 = vpop.f32.mrb[0].mxu0
      %v1698 = vadd.f32 %v1537, %v1697
      %v1699 = vpop.f32.mrb[0].mxu0
      %v1700 = vpop.f32.mrb[0].mxu0
      %v1701 = vadd.f32 %v1540, %v1700
      %v1702 = vpop.f32.mrb[0].mxu0
      %1703 = vmatprep.mubr.bf16.mxu0 %v792
      %1704 = vmatmul.mubr.bf16.gmra.mrb[0].mxu0 %v791
      %v1705 = vpop.f32.mrb[0].mxu0
      %v1706 = vadd.f32 %v1545, %v1705
      %v1707 = vpop.f32.mrb[0].mxu0
      %v1708 = vpop.f32.mrb[0].mxu0
      %v1709 = vadd.f32 %v1548, %v1708
      %v1710 = vpop.f32.mrb[0].mxu0
      %1711 = vmatprep.mubr.bf16.mxu0 %v799
      %1712 = vmatmul.mubr.bf16.gmra.mrb[0].mxu0 %v798
      %v1713 = vpop.f32.mrb[0].mxu0
      %v1714 = vadd.f32 %v1553, %v1713
      %v1715 = vpop.f32.mrb[0].mxu0
      %v1716 = vpop.f32.mrb[0].mxu0
      %v1717 = vadd.f32 %v1556, %v1716
      %v1718 = vpop.f32.mrb[0].mxu0
      %1719 = vmatprep.mubr.bf16.mxu0 %v806
      %1720 = vmatmul.mubr.bf16.gmra.mrb[0].mxu0 %v805
      %v1721 = vpop.f32.mrb[0].mxu0
      %v1722 = vadd.f32 %v1561, %v1721
      %v1723 = vpop.f32.mrb[0].mxu0
      %v1724 = vpop.f32.mrb[0].mxu0
      %v1725 = vadd.f32 %v1564, %v1724
      %v1726 = vpop.f32.mrb[0].mxu0
      %1727 = vmatprep.mubr.bf16.mxu0 %v813
      %1728 = vmatmul.mubr.bf16.gmra.mrb[0].mxu0 %v812
      %v1729 = vpop.f32.mrb[0].mxu0
      %v1730 = vadd.f32 %v1569, %v1729
      %v1731 = vpop.f32.mrb[0].mxu0
      %v1732 = vpop.f32.mrb[0].mxu0
      %v1733 = vadd.f32 %v1572, %v1732
      %v1734 = vpop.f32.mrb[0].mxu0
      %1735 = vmatprep.mubr.bf16.mxu0 %v820
      %1736 = vmatmul.mubr.bf16.gmra.mrb[0].mxu0 %v819
      %v1737 = vpop.f32.mrb[0].mxu0
      %v1738 = vadd.f32 %v1577, %v1737
      %v1739 = vpop.f32.mrb[0].mxu0
      %v1740 = vpop.f32.mrb[0].mxu0
      %v1741 = vadd.f32 %v1580, %v1740
      %v1742 = vpop.f32.mrb[0].mxu0
      %1743 = vmatprep.mubr.bf16.mxu0 %v827
      %1744 = vmatmul.mubr.bf16.gmra.mrb[0].mxu0 %v826
      %v1745 = vpop.f32.mrb[0].mxu0
      %v1746 = vadd.f32 %v1585, %v1745
      %v1747 = vpop.f32.mrb[0].mxu0
      %v1748 = vpop.f32.mrb[0].mxu0
      %v1749 = vadd.f32 %v1588, %v1748
      %v1750 = vpop.f32.mrb[0].mxu0
      %1751 = vmatprep.mubr.bf16.mxu0 %v834
      %1752 = vmatmul.mubr.bf16.gmra.mrb[0].mxu0 %v833
      %v1753 = vpop.f32.mrb[0].mxu0
      %v1754 = vadd.f32 %v1593, %v1753
      %v1755 = vpop.f32.mrb[0].mxu0
      %v1756 = vpop.f32.mrb[0].mxu0
      %v1757 = vadd.f32 %v1596, %v1756
      %v1758 = vpop.f32.mrb[0].mxu0
      %1759 = vmatprep.mubr.bf16.mxu0 %v841
      %1760 = vmatmul.mubr.bf16.gmra.mrb[0].mxu0 %v840
      %v1761 = vpop.f32.mrb[0].mxu0
      %v1762 = vadd.f32 %v1601, %v1761
      %v1763 = vpop.f32.mrb[0].mxu0
      %v1764 = vpop.f32.mrb[0].mxu0
      %v1765 = vadd.f32 %v1604, %v1764
      %v1766 = vpop.f32.mrb[0].mxu0
      %1767 = vmatprep.mubr.bf16.mxu0 %v848
      %1768 = vmatmul.mubr.bf16.gmra.mrb[0].mxu0 %v847
      %v1769 = vpop.f32.mrb[0].mxu0
      %v1770 = vadd.f32 %v1609, %v1769
      %v1771 = vpop.f32.mrb[0].mxu0
      %v1772 = vpop.f32.mrb[0].mxu0
      %v1773 = vadd.f32 %v1612, %v1772
      %v1774 = vpop.f32.mrb[0].mxu0
      %1775 = vmatprep.mubr.bf16.mxu0 %v855
      %1776 = vmatmul.mubr.bf16.gmra.mrb[0].mxu0 %v854
      %v1777 = vpop.f32.mrb[0].mxu0
      %v1778 = vadd.f32 %v1617, %v1777
      %v1779 = vpop.f32.mrb[0].mxu0
      %v1780 = vpop.f32.mrb[0].mxu0
      %v1781 = vadd.f32 %v1620, %v1780
      %v1782 = vpop.f32.mrb[0].mxu0
      %1783 = vmatprep.mubr.bf16.mxu0 %v862
      %1784 = vmatmul.mubr.bf16.gmra.mrb[0].mxu0 %v861
      %v1785 = vpop.f32.mrb[0].mxu0
      %v1786 = vadd.f32 %v1625, %v1785
      %v1787 = vpop.f32.mrb[0].mxu0
      %v1788 = vpop.f32.mrb[0].mxu0
      %v1789 = vadd.f32 %v1628, %v1788
      %v1790 = vpop.f32.mrb[0].mxu0
      %1791 = vdwg.mxu0
      %1792 = vmatprep.subr.bf16.mxu0 0
      %1793 = vmatpush1.bf16.msra.mxu0 %v1208
      %1794 = vmatprep.subr.bf16.mxu0 0
      %1795 = vmatpush1.bf16.msra.mxu0 %v1209
      %1796 = vmatprep.subr.bf16.mxu0 0
      %1797 = vmatpush1.bf16.msra.mxu0 0
      %1798 = vmatprep.subr.bf16.mxu0 0
      %1799 = vmatpush1.bf16.msra.mxu0 0
      %1800 = vmatprep.subr.bf16.mxu0 0
      %1801 = vmatpush1.bf16.msra.mxu0 0
      %1802 = vmatprep.subr.bf16.mxu0 0
      %1803 = vmatpush1.bf16.msra.mxu0 0
      %1804 = vmatprep.subr.bf16.mxu0 0
      %1805 = vmatpush1.bf16.msra.mxu0 0
      %1806 = vmatprep.subr.bf16.mxu0 0
      %1807 = vmatpush1.bf16.msra.mxu0 0
      %1808 = vmatprep.subr.bf16.mxu0 0
      %1809 = vmatpush1.bf16.msra.mxu0 0
      %1810 = vmatprep.subr.bf16.mxu0 0
      %1811 = vmatpush1.bf16.msra.mxu0 0
      %1812 = vmatprep.subr.bf16.mxu0 0
      %1813 = vmatpush1.bf16.msra.mxu0 0
      %1814 = vmatprep.subr.bf16.mxu0 0
      %1815 = vmatpush1.bf16.msra.mxu0 0
      %1816 = vmatprep.subr.bf16.mxu0 0
      %1817 = vmatpush1.bf16.msra.mxu0 0
      %1818 = vmatprep.subr.bf16.mxu0 0
      %1819 = vmatpush1.bf16.msra.mxu0 0
      %1820 = vmatprep.subr.bf16.mxu0 0
      %1821 = vmatpush1.bf16.msra.mxu0 0
      %1822 = vmatprep.subr.bf16.mxu0 0
      %1823 = vmatpush1.bf16.msra.mxu0 0
      %1824 = vmatprep.mubr.bf16.mxu0 0
      %1825 = vmatmul.mubr.bf16.gmra.mrb[0].mxu0 %v1262
      %v1826 = vpop.f32.mrb[0].mxu0
      %v1827 = vadd.f32 %v1666, %v1826
      %v1828 = vpop.f32.mrb[0].mxu0
      %v1829 = vpop.f32.mrb[0].mxu0
      %v1830 = vadd.f32 %v1669, %v1829
      %v1831 = vpop.f32.mrb[0].mxu0
      %1832 = vmatprep.mubr.bf16.mxu0 0
      %1833 = vmatmul.mubr.bf16.gmra.mrb[0].mxu0 %v1265
      %v1834 = vpop.f32.mrb[0].mxu0
      %v1835 = vadd.f32 %v1674, %v1834
      %v1836 = vpop.f32.mrb[0].mxu0
      %v1837 = vpop.f32.mrb[0].mxu0
      %v1838 = vadd.f32 %v1677, %v1837
      %v1839 = vpop.f32.mrb[0].mxu0
      %1840 = vmatprep.mubr.bf16.mxu0 0
      %1841 = vmatmul.mubr.bf16.gmra.mrb[0].mxu0 %v1268
      %v1842 = vpop.f32.mrb[0].mxu0
      %v1843 = vadd.f32 %v1682, %v1842
      %v1844 = vpop.f32.mrb[0].mxu0
      %v1845 = vpop.f32.mrb[0].mxu0
      %v1846 = vadd.f32 %v1685, %v1845
      %v1847 = vpop.f32.mrb[0].mxu0
      %1848 = vmatprep.mubr.bf16.mxu0 0
      %1849 = vmatmul.mubr.bf16.gmra.mrb[0].mxu0 %v1271
      %v1850 = vpop.f32.mrb[0].mxu0
      %v1851 = vadd.f32 %v1690, %v1850
      %v1852 = vpop.f32.mrb[0].mxu0
      %v1853 = vpop.f32.mrb[0].mxu0
      %v1854 = vadd.f32 %v1693, %v1853
      %v1855 = vpop.f32.mrb[0].mxu0
      %1856 = vmatprep.mubr.bf16.mxu0 0
      %1857 = vmatmul.mubr.bf16.gmra.mrb[0].mxu0 %v1274
      %v1858 = vpop.f32.mrb[0].mxu0
      %v1859 = vadd.f32 %v1698, %v1858
      %v1860 = vpop.f32.mrb[0].mxu0
      %v1861 = vpop.f32.mrb[0].mxu0
      %v1862 = vadd.f32 %v1701, %v1861
      %v1863 = vpop.f32.mrb[0].mxu0
      %1864 = vmatprep.mubr.bf16.mxu0 0
      %1865 = vmatmul.mubr.bf16.gmra.mrb[0].mxu0 %v1277
      %v1866 = vpop.f32.mrb[0].mxu0
      %v1867 = vadd.f32 %v1706, %v1866
      %v1868 = vpop.f32.mrb[0].mxu0
      %v1869 = vpop.f32.mrb[0].mxu0
      %v1870 = vadd.f32 %v1709, %v1869
      %v1871 = vpop.f32.mrb[0].mxu0
      %1872 = vmatprep.mubr.bf16.mxu0 0
      %1873 = vmatmul.mubr.bf16.gmra.mrb[0].mxu0 %v1280
      %v1874 = vpop.f32.mrb[0].mxu0
      %v1875 = vadd.f32 %v1714, %v1874
      %v1876 = vpop.f32.mrb[0].mxu0
      %v1877 = vpop.f32.mrb[0].mxu0
      %v1878 = vadd.f32 %v1717, %v1877
      %v1879 = vpop.f32.mrb[0].mxu0
      %1880 = vmatprep.mubr.bf16.mxu0 0
      %1881 = vmatmul.mubr.bf16.gmra.mrb[0].mxu0 %v1283
      %v1882 = vpop.f32.mrb[0].mxu0
      %v1883 = vadd.f32 %v1722, %v1882
      %v1884 = vpop.f32.mrb[0].mxu0
      %v1885 = vpop.f32.mrb[0].mxu0
      %v1886 = vadd.f32 %v1725, %v1885
      %v1887 = vpop.f32.mrb[0].mxu0
      %1888 = vmatprep.mubr.bf16.mxu0 0
      %1889 = vmatmul.mubr.bf16.gmra.mrb[0].mxu0 %v1286
      %v1890 = vpop.f32.mrb[0].mxu0
      %v1891 = vadd.f32 %v1730, %v1890
      %v1892 = vpop.f32.mrb[0].mxu0
      %v1893 = vpop.f32.mrb[0].mxu0
      %v1894 = vadd.f32 %v1733, %v1893
      %v1895 = vpop.f32.mrb[0].mxu0
      %1896 = vmatprep.mubr.bf16.mxu0 0
      %1897 = vmatmul.mubr.bf16.gmra.mrb[0].mxu0 %v1289
      %v1898 = vpop.f32.mrb[0].mxu0
      %v1899 = vadd.f32 %v1738, %v1898
      %v1900 = vpop.f32.mrb[0].mxu0
      %v1901 = vpop.f32.mrb[0].mxu0
      %v1902 = vadd.f32 %v1741, %v1901
      %v1903 = vpop.f32.mrb[0].mxu0
      %1904 = vmatprep.mubr.bf16.mxu0 0
      %1905 = vmatmul.mubr.bf16.gmra.mrb[0].mxu0 %v1292
      %v1906 = vpop.f32.mrb[0].mxu0
      %v1907 = vadd.f32 %v1746, %v1906
      %v1908 = vpop.f32.mrb[0].mxu0
      %v1909 = vpop.f32.mrb[0].mxu0
      %v1910 = vadd.f32 %v1749, %v1909
      %v1911 = vpop.f32.mrb[0].mxu0
      %1912 = vmatprep.mubr.bf16.mxu0 0
      %1913 = vmatmul.mubr.bf16.gmra.mrb[0].mxu0 %v1295
      %v1914 = vpop.f32.mrb[0].mxu0
      %v1915 = vadd.f32 %v1754, %v1914
      %v1916 = vpop.f32.mrb[0].mxu0
      %v1917 = vpop.f32.mrb[0].mxu0
      %v1918 = vadd.f32 %v1757, %v1917
      %v1919 = vpop.f32.mrb[0].mxu0
      %1920 = vmatprep.mubr.bf16.mxu0 0
      %1921 = vmatmul.mubr.bf16.gmra.mrb[0].mxu0 %v1298
      %v1922 = vpop.f32.mrb[0].mxu0
      %v1923 = vadd.f32 %v1762, %v1922
      %v1924 = vpop.f32.mrb[0].mxu0
      %v1925 = vpop.f32.mrb[0].mxu0
      %v1926 = vadd.f32 %v1765, %v1925
      %v1927 = vpop.f32.mrb[0].mxu0
      %1928 = vmatprep.mubr.bf16.mxu0 0
      %1929 = vmatmul.mubr.bf16.gmra.mrb[0].mxu0 %v1301
      %v1930 = vpop.f32.mrb[0].mxu0
      %v1931 = vadd.f32 %v1770, %v1930
      %v1932 = vpop.f32.mrb[0].mxu0
      %v1933 = vpop.f32.mrb[0].mxu0
      %v1934 = vadd.f32 %v1773, %v1933
      %v1935 = vpop.f32.mrb[0].mxu0
      %1936 = vmatprep.mubr.bf16.mxu0 0
      %1937 = vmatmul.mubr.bf16.gmra.mrb[0].mxu0 %v1304
      %v1938 = vpop.f32.mrb[0].mxu0
      %v1939 = vadd.f32 %v1778, %v1938
      %v1940 = vpop.f32.mrb[0].mxu0
      %v1941 = vpop.f32.mrb[0].mxu0
      %v1942 = vadd.f32 %v1781, %v1941
      %v1943 = vpop.f32.mrb[0].mxu0
      %1944 = vmatprep.mubr.bf16.mxu0 0
      %1945 = vmatmul.mubr.bf16.gmra.mrb[0].mxu0 %v1307
      %v1946 = vpop.f32.mrb[0].mxu0
      %v1947 = vadd.f32 %v1786, %v1946
      %v1948 = vpop.f32.mrb[0].mxu0
      %v1949 = vpop.f32.mrb[0].mxu0
      %v1950 = vadd.f32 %v1789, %v1949
      %v1951 = vpop.f32.mrb[0].mxu0
      %1952 = vdwg.mxu0
      %v1953 = vmax.f32 %v1827, %v1835
      %v1954 = vmax.f32 %v1830, %v1838
      %v1955 = vmax.f32 %v1843, %v1851
      %v1956 = vmax.f32 %v1846, %v1854
      %v1957 = vmax.f32 %v1859, %v1867
      %v1958 = vmax.f32 %v1862, %v1870
      %v1959 = vmax.f32 %v1875, %v1883
      %v1960 = vmax.f32 %v1878, %v1886
      %v1961 = vmax.f32 %v1891, %v1899
      %v1962 = vmax.f32 %v1894, %v1902
      %v1963 = vmax.f32 %v1907, %v1915
      %v1964 = vmax.f32 %v1910, %v1918
      %v1965 = vmax.f32 %v1923, %v1931
      %v1966 = vmax.f32 %v1926, %v1934
      %v1967 = vmax.f32 %v1939, %v1947
      %v1968 = vmax.f32 %v1942, %v1950
      %1969 = vst.msk [vmem:[#allocation2] sm:$0xff] %vm1260, %v1953
      %1970 = vst.msk [vmem:[#allocation2 + $0x8] sm:$0xff] %vm1260, %v1954
      %1971 = vst.msk [vmem:[#allocation2 + $0x10] sm:$0xff] %vm1260, %v1955
      %1972 = vst.msk [vmem:[#allocation2 + $0x18] sm:$0xff] %vm1260, %v1956
      %1973 = vst.msk [vmem:[#allocation2 + $0x20] sm:$0xff] %vm1260, %v1957
      %1974 = vst.msk [vmem:[#allocation2 + $0x28] sm:$0xff] %vm1260, %v1958
      %1975 = vst.msk [vmem:[#allocation2 + $0x30] sm:$0xff] %vm1260, %v1959
      %1976 = vst.msk [vmem:[#allocation2 + $0x38] sm:$0xff] %vm1260, %v1960
      %1977 = vst.msk [vmem:[#allocation2 + $0x40] sm:$0xff] %vm1260, %v1961
      %1978 = vst.msk [vmem:[#allocation2 + $0x48] sm:$0xff] %vm1260, %v1962
      %1979 = vst.msk [vmem:[#allocation2 + $0x50] sm:$0xff] %vm1260, %v1963
      %1980 = vst.msk [vmem:[#allocation2 + $0x58] sm:$0xff] %vm1260, %v1964
      %1981 = vst.msk [vmem:[#allocation2 + $0x60] sm:$0xff] %vm1260, %v1965
      %1982 = vst.msk [vmem:[#allocation2 + $0x68] sm:$0xff] %vm1260, %v1966
      %1983 = vst.msk [vmem:[#allocation2 + $0x70] sm:$0xff] %vm1260, %v1967
      %1984 = vst.msk [vmem:[#allocation2 + $0x78] sm:$0xff] %vm1260, %v1968
      %v1985 = vld [vmem:[#allocation2] ss:$2 sm:$0xff]
      %s1986 = scalar_lea.vmem [#allocation2], 16
      %v1987 = vld [vmem:[%s1986] ss:$2 sm:$0xff]
      %s1988 = scalar_lea.vmem [#allocation2], 32
      %v1989 = vld [vmem:[%s1988] ss:$2 sm:$0xff]
      %s1990 = scalar_lea.vmem [#allocation2], 48
      %v1991 = vld [vmem:[%s1990] ss:$2 sm:$0xff]
      %s1992 = scalar_lea.vmem [#allocation2], 64
      %v1993 = vld [vmem:[%s1992] ss:$2 sm:$0xff]
      %s1994 = scalar_lea.vmem [#allocation2], 80
      %v1995 = vld [vmem:[%s1994] ss:$2 sm:$0xff]
      %s1996 = scalar_lea.vmem [#allocation2], 96
      %v1997 = vld [vmem:[%s1996] ss:$2 sm:$0xff]
      %s1998 = scalar_lea.vmem [#allocation2], 112
      %v1999 = vld [vmem:[%s1998] ss:$2 sm:$0xff]
      %s2000 = scalar_lea.vmem [#allocation2], 1
      %v2001 = vld [vmem:[%s2000] ss:$2 sm:$0xff]
      %s2002 = scalar_lea.vmem [#allocation2], 17
      %v2003 = vld [vmem:[%s2002] ss:$2 sm:$0xff]
      %s2004 = scalar_lea.vmem [#allocation2], 33
      %v2005 = vld [vmem:[%s2004] ss:$2 sm:$0xff]
      %s2006 = scalar_lea.vmem [#allocation2], 49
      %v2007 = vld [vmem:[%s2006] ss:$2 sm:$0xff]
      %s2008 = scalar_lea.vmem [#allocation2], 65
      %v2009 = vld [vmem:[%s2008] ss:$2 sm:$0xff]
      %s2010 = scalar_lea.vmem [#allocation2], 81
      %v2011 = vld [vmem:[%s2010] ss:$2 sm:$0xff]
      %s2012 = scalar_lea.vmem [#allocation2], 97
      %v2013 = vld [vmem:[%s2012] ss:$2 sm:$0xff]
      %s2014 = scalar_lea.vmem [#allocation2], 113
      %v2015 = vld [vmem:[%s2014] ss:$2 sm:$0xff]
      %v2016 = vmax.f32 %v1985, %v2001
      %v2017 = vmax.f32 %v1987, %v2003
      %v2018 = vmax.f32 %v1989, %v2005
      %v2019 = vmax.f32 %v1991, %v2007
      %v2020 = vmax.f32 %v1993, %v2009
      %v2021 = vmax.f32 %v1995, %v2011
      %v2022 = vmax.f32 %v1997, %v2013
      %v2023 = vmax.f32 %v1999, %v2015
      %v2024 = vld [vmem:[%s2] sm:$0x1]
      %v2026 = vlaneseq
      %v2027 = vshrl.u32 %v2026, 7
      %v2028 = vsub.s32 0, %v2027
      %v2029 = vrot.slane %v2024, %v2028
      %v2031 = vadd.f32 %v2016, %v2029
      %v2032 = vadd.f32 %v2017, %v2029
      %v2033 = vadd.f32 %v2018, %v2029
      %v2034 = vadd.f32 %v2019, %v2029
      %v2035 = vadd.f32 %v2020, %v2029
      %v2036 = vadd.f32 %v2021, %v2029
      %v2037 = vadd.f32 %v2022, %v2029
      %v2038 = vadd.f32 %v2023, %v2029
      %v2039 = vpack.c.bf16 %v2031, %v2031
      %v2040 = vpack.c.bf16 %v2032, %v2032
      %v2041 = vpack.c.bf16 %v2033, %v2033
      %v2042 = vpack.c.bf16 %v2034, %v2034
      %v2043 = vpack.c.bf16 %v2035, %v2035
      %v2044 = vpack.c.bf16 %v2036, %v2036
      %v2045 = vpack.c.bf16 %v2037, %v2037
      %v2046 = vpack.c.bf16 %v2038, %v2038
      %vm2047 = vcmask 257024
      %2048 = vst.msk [vmem:[%s170] sm:$0xf] %vm2047, %v2039
      %2049 = vst.msk [vmem:[%s170 + $0x4] sm:$0xf] %vm2047, %v2040
      %2050 = vst.msk [vmem:[%s170 + $0x8] sm:$0xf] %vm2047, %v2041
      %2051 = vst.msk [vmem:[%s170 + $0xc] sm:$0xf] %vm2047, %v2042
      %2052 = vst.msk [vmem:[%s170 + $0x10] sm:$0xf] %vm2047, %v2043
      %2053 = vst.msk [vmem:[%s170 + $0x14] sm:$0xf] %vm2047, %v2044
      %2054 = vst.msk [vmem:[%s170 + $0x18] sm:$0xf] %vm2047, %v2045
      %2055 = vst.msk [vmem:[%s170 + $0x1c] sm:$0xf] %vm2047, %v2046
      %p2056 = scmp.lt.s32.totalorder %s14, 1
      %s2057 = scalar_select %p2056, %s14, 1
      %s2058 = smul.addr %s2057, 8
      %s2059 = smul.addr %s2058, 4
      %s2060 = scalar_lea.vmem %s3, %s2059
      // Predicated region
      $region33: #{jlnet_forward.5} parent=31 // pred_check
        %p2061 = pneg %p100
      $region34: #{jlnet_forward.5} parent=31 // pred_check_branch
        %2063 = sbr.rel (%p2061) target = $region36
      $region35: #{jlnet_forward.5} parent=31 // pred_region
        _
      $region36: #{jlnet_forward.5} parent=31 // pred_fallthru
        _
    $region32: #{jlnet_forward.5} parent=5 // pred_fallthru
      _
    %p2064 = scmp.le.s32.totalorder 2, %s9
    // Predicated region
    $region37: #{jlnet_forward.5} parent=5 // pred_check
      %p2065 = pneg %p2064
    $region38: #{jlnet_forward.5} parent=5 // pred_check_branch
      %2067 = sbr.rel (%p2065) target = $region40
    $region39: #{jlnet_forward.5} parent=5 // pred_region
      %s2068 = ssub.s32 %s9, 2
      // Predicated region
      $region41: #{jlnet_forward.5} parent=39 // pred_check
        %p2069 = pneg %p106
      $region42: #{jlnet_forward.5} parent=39 // pred_check_branch
        %2071 = sbr.rel (%p2069) target = $region44
      $region43: #{jlnet_forward.5} parent=39 // pred_region
        %p2072 = scmp.lt.s32.totalorder %s15, 1
        %s2073 = scalar_select %p2072, %s15, 1
        %s2074 = smul.addr %s2073, 8
        %s2075 = smul.addr %s2074, 4
        %s2076 = scalar_lea.vmem %s3, %s2075
      $region44: #{jlnet_forward.5} parent=39 // pred_fallthru
        _
    $region40: #{jlnet_forward.5} parent=5 // pred_fallthru
      _
  $region6: #{jlnet_forward.5} parent=0 // loop_footer
    %s13 = sadd.s32 1, %s9
  $region7: #{jlnet_forward.5} parent=0 // loop_footer_branch
    %8 = sbr.rel target = $region3
  $region8: #{jlnet_forward.5} parent=0 // loop_exit
    _

// kernel: jlnet_forward.6
$region0: #{jlnet_forward.6}
  #allocation0 [shape = 'u32[]', space=smem, size = 0x4, offset = 0x4, fixed_abs, tag = 'smem constant byte address 0x4 - core index']
  #allocation1 [shape = 'u32[144,128]{1,0:T(1,128)}', space=vmem, size = 0x12000, scoped, tag = 'internal scratch']
  #allocation2 [shape = 'f32[4,8,64]{2,1,0:T(8,128)}', space=vmem, size = 0x4000, scoped, tag = 'scratch operand']
  %s0 = inlined_call_operand.vmem [shape: bf16[2,8,8,800], index: 0, kind: input, shape index: {}]
  %s1 = inlined_call_operand.vmem [shape: bf16[800,64], index: 1, kind: input, shape index: {}]
  %s2 = inlined_call_operand.vmem [shape: f32[1,64], index: 2, kind: input, shape index: {}]
  %s3 = inlined_call_operand.vmem [shape: bf16[2,4,4,64], index: 3, kind: output, shape index: {}]
  %s4 = sld [smem:[#allocation0]]
  $region45: #{jlnet_forward.6} parent=0
    _
  %s6 = ssub.s32 1, %s4
  %s7 = scalar_select 0, %s6, %s4
  loop: start=0, step=1, limit=4
  $region2: #{jlnet_forward.6} parent=0 // loop_pre_header
    _
  $region3: #{jlnet_forward.6} parent=0 // loop_header
    %s9 = sphi 0, %s13
    %p10 = scmp.ge.s32.totalorder %s9, 4
    %s19 = sphi 0, %s21
    %s22 = sphi 0, %s19
    %s23 = sphi 0, %s22
    %s39 = sphi 0, %s23
    %s43 = sphi 0, %s43
    %s45 = sphi 0, %s43
    %s46 = sphi 0, %s45
    %s60 = sphi 0, %s46
    %s64 = sphi 0, %s64
    %s66 = sphi 0, %s64
    %s67 = sphi 0, %s66
    %s81 = sphi 0, %s67
    %s87 = sphi 0, %s89
    %s90 = sphi 0, %s87
    %s91 = sphi 0, %s90
    %s107 = sphi 0, %s91
  $region4: #{jlnet_forward.6} parent=0 // loop_header_branch
    %12 = sbr.rel (%p10) target = $region8
  $region5: #{jlnet_forward.6} parent=0 // loop_body
    %s14 = ssub.s32 %s9, 1
    %s15 = ssub.s32 %s9, 2
    %s16 = sadd.s32 %s9, 1
    %s17 = ssub.s32 %s9, %s16
    %p18 = scmp.eq.s32.totalorder %s17, 0
    %s20 = sadd.s32 %s19, 1
    %s21 = scalar_select %p18, %s19, %s20
    %p24 = pneg %p18
    %p25 = scmp.eq.s32.totalorder %s9, 1
    %p26 = por %p24, %p25
    %p27 = scmp.ne.s32.totalorder %s19, %s22
    %p28 = scmp.eq.s32.totalorder %s9, 0
    %p29 = por %p27, %p28
    %p30 = scmp.ne.s32.totalorder %s19, %s22
    %p31 = scmp.eq.s32.totalorder %s14, 1
    %p32 = por %p30, %p31
    %p33 = scmp.ne.s32.totalorder %s22, %s23
    %p34 = scmp.eq.s32.totalorder %s14, 0
    %p35 = por %p33, %p34
    %p36 = scmp.ne.s32.totalorder %s22, %s23
    %p37 = scmp.eq.s32.totalorder %s15, 1
    %p38 = por %p36, %p37
    %p40 = scmp.ne.s32.totalorder %s23, %s39
    %p41 = scmp.eq.s32.totalorder %s15, 0
    %p42 = por %p40, %p41
    %s44 = sadd.s32 %s43, 1
    %p47 = scmp.eq.s32.totalorder %s9, 1
    %p48 = scmp.ne.s32.totalorder %s43, %s45
    %p49 = scmp.eq.s32.totalorder %s9, 0
    %p50 = por %p48, %p49
    %p51 = scmp.ne.s32.totalorder %s43, %s45
    %p52 = scmp.eq.s32.totalorder %s14, 1
    %p53 = por %p51, %p52
    %p54 = scmp.ne.s32.totalorder %s45, %s46
    %p55 = scmp.eq.s32.totalorder %s14, 0
    %p56 = por %p54, %p55
    %p57 = scmp.ne.s32.totalorder %s45, %s46
    %p58 = scmp.eq.s32.totalorder %s15, 1
    %p59 = por %p57, %p58
    %p61 = scmp.ne.s32.totalorder %s46, %s60
    %p62 = scmp.eq.s32.totalorder %s15, 0
    %p63 = por %p61, %p62
    %s65 = sadd.s32 %s64, 1
    %p68 = scmp.eq.s32.totalorder %s9, 1
    %p69 = scmp.ne.s32.totalorder %s64, %s66
    %p70 = scmp.eq.s32.totalorder %s9, 0
    %p71 = por %p69, %p70
    %p72 = scmp.ne.s32.totalorder %s64, %s66
    %p73 = scmp.eq.s32.totalorder %s14, 1
    %p74 = por %p72, %p73
    %p75 = scmp.ne.s32.totalorder %s66, %s67
    %p76 = scmp.eq.s32.totalorder %s14, 0
    %p77 = por %p75, %p76
    %p78 = scmp.ne.s32.totalorder %s66, %s67
    %p79 = scmp.eq.s32.totalorder %s15, 1
    %p80 = por %p78, %p79
    %p82 = scmp.ne.s32.totalorder %s67, %s81
    %p83 = scmp.eq.s32.totalorder %s15, 0
    %p84 = por %p82, %p83
    %s85 = ssub.s32 %s9, %s16
    %p86 = scmp.eq.s32.totalorder %s85, 0
    %s88 = sadd.s32 %s87, 1
    %s89 = scalar_select %p86, %s87, %s88
    %p92 = pneg %p86
    %p93 = scmp.eq.s32.totalorder %s9, 1
    %p94 = por %p92, %p93
    %p95 = scmp.ne.s32.totalorder %s87, %s90
    %p96 = scmp.eq.s32.totalorder %s9, 0
    %p97 = por %p95, %p96
    %p98 = scmp.ne.s32.totalorder %s87, %s90
    %p99 = scmp.eq.s32.totalorder %s14, 1
    %p100 = por %p98, %p99
    %p101 = scmp.ne.s32.totalorder %s90, %s91
    %p102 = scmp.eq.s32.totalorder %s14, 0
    %p103 = por %p101, %p102
    %p104 = scmp.ne.s32.totalorder %s90, %s91
    %p105 = scmp.eq.s32.totalorder %s15, 1
    %p106 = por %p104, %p105
    %p108 = scmp.ne.s32.totalorder %s91, %s107
    %p109 = scmp.eq.s32.totalorder %s15, 0
    %p110 = por %p108, %p109
    %p111 = scmp.le.s32.totalorder 1, %s9
    %p112 = scmp.lt.s32.totalorder %s9, 3
    %p113 = pnand %p111, %p112
    %p114 = pneg %p113
    // Predicated region
    $region9: #{jlnet_forward.6} parent=5 // pred_check
      _
    $region10: #{jlnet_forward.6} parent=5 // pred_check_branch
      %116 = sbr.rel (%p113) target = $region12
    $region11: #{jlnet_forward.6} parent=5 // pred_region
      %s117 = ssub.s32 %s9, 1
      // Predicated region
      $region13: #{jlnet_forward.6} parent=11 // pred_check
        %p118 = pneg %p56
      $region14: #{jlnet_forward.6} parent=11 // pred_check_branch
        %120 = sbr.rel (%p118) target = $region16
      $region15: #{jlnet_forward.6} parent=11 // pred_region
        _
      $region16: #{jlnet_forward.6} parent=11 // pred_fallthru
        _
      // Predicated region
      $region17: #{jlnet_forward.6} parent=11 // pred_check
        %p121 = pneg %p77
      $region18: #{jlnet_forward.6} parent=11 // pred_check_branch
        %123 = sbr.rel (%p121) target = $region20
      $region19: #{jlnet_forward.6} parent=11 // pred_region
        _
      $region20: #{jlnet_forward.6} parent=11 // pred_fallthru
        _
    $region12: #{jlnet_forward.6} parent=5 // pred_fallthru
      _
    %p124 = scmp.lt.s32.totalorder %s9, 2
    // Predicated region
    $region21: #{jlnet_forward.6} parent=5 // pred_check
      %p125 = pneg %p124
    $region22: #{jlnet_forward.6} parent=5 // pred_check_branch
      %127 = sbr.rel (%p125) target = $region24
    $region23: #{jlnet_forward.6} parent=5 // pred_region
      // Predicated region
      $region25: #{jlnet_forward.6} parent=23 // pred_check
        %p128 = pneg %p29
      $region26: #{jlnet_forward.6} parent=23 // pred_check_branch
        %130 = sbr.rel (%p128) target = $region28
      $region27: #{jlnet_forward.6} parent=23 // pred_region
        %p131 = scmp.lt.s32.totalorder %s9, 1
        %s132 = scalar_select %p131, %s9, 1
        %s133 = smul.addr %s132, 56
        %s134 = smul.addr %s133, 4
        %s135 = scalar_lea.vmem %s0, %s134
      $region28: #{jlnet_forward.6} parent=23 // pred_fallthru
        _
    $region24: #{jlnet_forward.6} parent=5 // pred_fallthru
      _
    %p136 = scmp.le.s32.totalorder 1, %s9
    %p137 = scmp.lt.s32.totalorder %s9, 3
    %p138 = pnand %p136, %p137
    %p139 = pneg %p138
    // Predicated region
    $region29: #{jlnet_forward.6} parent=5 // pred_check
      _
    $region30: #{jlnet_forward.6} parent=5 // pred_check_branch
      %141 = sbr.rel (%p138) target = $region32
    $region31: #{jlnet_forward.6} parent=5 // pred_region
      %s142 = ssub.s32 %s9, 1
      %p143 = scmp.lt.s32.totalorder %s14, 1
      %s144 = scalar_select %p143, %s14, 1
      %s145 = smul.addr %s144, 56
      %s146 = smul.addr %s145, 4
      %s147 = scalar_lea.vmem %s0, %s146
      %p148 = pneg %p35
      %p149 = pneg %p32
      %p150 = pneg %p56
      %p151 = pneg %p53
      %p152 = pneg %p77
      %p153 = pneg %p74
      %p154 = pneg %p103
      %p155 = pneg %p100
      %p156 = scmp.lt.s32.totalorder %s14, 1
      %s157 = scalar_select %p156, %s14, 1
      %s158 = smul.addr %s157, 4
      %s159 = smul.addr %s158, 2
      %s160 = scalar_lea.vmem %s3, %s159
      %p161 = scmp.lt.s32.totalorder %s14, 1
      %s162 = scalar_select %p161, %s14, 1
      %s163 = smul.addr %s162, 56
      %s164 = smul.addr %s163, 4
      %s165 = scalar_lea.vmem %s0, %s164
      %p166 = scmp.lt.s32.totalorder %s14, 1
      %s167 = scalar_select %p166, %s14, 1
      %s168 = smul.addr %s167, 4
      %s169 = smul.addr %s168, 2
      %s170 = scalar_lea.vmem %s3, %s169
      %v172 = vld [vmem:[%s165] sm:$0xff]
      %v173 = vld [vmem:[%s165 + $0x8] sm:$0xff]
      %v174 = vld [vmem:[%s165 + $0x10] sm:$0xff]
      %v175 = vld [vmem:[%s165 + $0x18] sm:$0xf]
      %v176 = vld [vmem:[%s165 + $0x1c] sm:$0xff]
      %v177 = vld [vmem:[%s165 + $0x24] sm:$0xff]
      %v178 = vld [vmem:[%s165 + $0x2c] sm:$0xff]
      %v179 = vld [vmem:[%s165 + $0x34] sm:$0xf]
      %v180 = vld [vmem:[%s165 + $0x38] sm:$0xff]
      %v181 = vld [vmem:[%s165 + $0x40] sm:$0xff]
      %v182 = vld [vmem:[%s165 + $0x48] sm:$0xff]
      %v183 = vld [vmem:[%s165 + $0x50] sm:$0xf]
      %v184 = vld [vmem:[%s165 + $0x54] sm:$0xff]
      %v185 = vld [vmem:[%s165 + $0x5c] sm:$0xff]
      %v186 = vld [vmem:[%s165 + $0x64] sm:$0xff]
      %v187 = vld [vmem:[%s165 + $0x6c] sm:$0xf]
      %v188 = vld [vmem:[%s165 + $0x70] sm:$0xff]
      %v189 = vld [vmem:[%s165 + $0x78] sm:$0xff]
      %v190 = vld [vmem:[%s165 + $0x80] sm:$0xff]
      %v191 = vld [vmem:[%s165 + $0x88] sm:$0xf]
      %v192 = vld [vmem:[%s165 + $0x8c] sm:$0xff]
      %v193 = vld [vmem:[%s165 + $0x94] sm:$0xff]
      %v194 = vld [vmem:[%s165 + $0x9c] sm:$0xff]
      %v195 = vld [vmem:[%s165 + $0xa4] sm:$0xf]
      %v196 = vld [vmem:[%s165 + $0xa8] sm:$0xff]
      %v197 = vld [vmem:[%s165 + $0xb0] sm:$0xff]
      %v198 = vld [vmem:[%s165 + $0xb8] sm:$0xff]
      %v199 = vld [vmem:[%s165 + $0xc0] sm:$0xf]
      %v200 = vld [vmem:[%s165 + $0xc4] sm:$0xff]
      %v201 = vld [vmem:[%s165 + $0xcc] sm:$0xff]
      %v202 = vld [vmem:[%s165 + $0xd4] sm:$0xff]
      %v203 = vld [vmem:[%s165 + $0xdc] sm:$0xf]
      %v204 = vld [vmem:[%s1] sm:$0xf]
      %v205 = vld [vmem:[%s1 + $0x4] sm:$0xf]
      %v206 = vld [vmem:[%s1 + $0x8] sm:$0xf]
      %v207 = vld [vmem:[%s1 + $0xc] sm:$0xf]
      %v208 = vld [vmem:[%s1 + $0x10] sm:$0xf]
      %v209 = vld [vmem:[%s1 + $0x14] sm:$0xf]
      %v210 = vld [vmem:[%s1 + $0x18] sm:$0xf]
      %v211 = vld [vmem:[%s1 + $0x1c] sm:$0xf]
      %v212 = vld [vmem:[%s1 + $0x20] sm:$0xf]
      %v213 = vld [vmem:[%s1 + $0x24] sm:$0xf]
      %v214 = vld [vmem:[%s1 + $0x28] sm:$0xf]
      %v215 = vld [vmem:[%s1 + $0x2c] sm:$0xf]
      %v216 = vld [vmem:[%s1 + $0x30] sm:$0xf]
      %v217 = vld [vmem:[%s1 + $0x34] sm:$0xf]
      %v218 = vld [vmem:[%s1 + $0x38] sm:$0xf]
      %v219 = vld [vmem:[%s1 + $0x3c] sm:$0xf]
      %v220 = vld [vmem:[%s1 + $0x40] sm:$0xf]
      %v221 = vld [vmem:[%s1 + $0x44] sm:$0xf]
      %v222 = vld [vmem:[%s1 + $0x48] sm:$0xf]
      %v223 = vld [vmem:[%s1 + $0x4c] sm:$0xf]
      %v224 = vld [vmem:[%s1 + $0x50] sm:$0xf]
      %v225 = vld [vmem:[%s1 + $0x54] sm:$0xf]
      %v226 = vld [vmem:[%s1 + $0x58] sm:$0xf]
      %v227 = vld [vmem:[%s1 + $0x5c] sm:$0xf]
      %v228 = vld [vmem:[%s1 + $0x60] sm:$0xf]
      %v229 = vld [vmem:[%s1 + $0x64] sm:$0xf]
      %v230 = vld [vmem:[%s1 + $0x68] sm:$0xf]
      %v231 = vld [vmem:[%s1 + $0x6c] sm:$0xf]
      %v232 = vld [vmem:[%s1 + $0x70] sm:$0xf]
      %v233 = vld [vmem:[%s1 + $0x74] sm:$0xf]
      %v234 = vld [vmem:[%s1 + $0x78] sm:$0xf]
      %v235 = vld [vmem:[%s1 + $0x7c] sm:$0xf]
      %v236 = vld [vmem:[%s1 + $0x80] sm:$0xf]
      %v237 = vld [vmem:[%s1 + $0x84] sm:$0xf]
      %v238 = vld [vmem:[%s1 + $0x88] sm:$0xf]
      %v239 = vld [vmem:[%s1 + $0x8c] sm:$0xf]
      %v240 = vld [vmem:[%s1 + $0x90] sm:$0xf]
      %v241 = vld [vmem:[%s1 + $0x94] sm:$0xf]
      %v242 = vld [vmem:[%s1 + $0x98] sm:$0xf]
      %v243 = vld [vmem:[%s1 + $0x9c] sm:$0xf]
      %v244 = vld [vmem:[%s1 + $0xa0] sm:$0xf]
      %v245 = vld [vmem:[%s1 + $0xa4] sm:$0xf]
      %v246 = vld [vmem:[%s1 + $0xa8] sm:$0xf]
      %v247 = vld [vmem:[%s1 + $0xac] sm:$0xf]
      %v248 = vld [vmem:[%s1 + $0xb0] sm:$0xf]
      %v249 = vld [vmem:[%s1 + $0xb4] sm:$0xf]
      %v250 = vld [vmem:[%s1 + $0xb8] sm:$0xf]
      %v251 = vld [vmem:[%s1 + $0xbc] sm:$0xf]
      %v252 = vld [vmem:[%s1 + $0xc0] sm:$0xf]
      %v253 = vld [vmem:[%s1 + $0xc4] sm:$0xf]
      %v254 = vld [vmem:[%s1 + $0xc8] sm:$0xf]
      %v255 = vld [vmem:[%s1 + $0xcc] sm:$0xf]
      %v256 = vld [vmem:[%s1 + $0xd0] sm:$0xf]
      %v257 = vld [vmem:[%s1 + $0xd4] sm:$0xf]
      %v258 = vld [vmem:[%s1 + $0xd8] sm:$0xf]
      %v259 = vld [vmem:[%s1 + $0xdc] sm:$0xf]
      %v260 = vld [vmem:[%s1 + $0xe0] sm:$0xf]
      %v261 = vld [vmem:[%s1 + $0xe4] sm:$0xf]
      %v262 = vld [vmem:[%s1 + $0xe8] sm:$0xf]
      %v263 = vld [vmem:[%s1 + $0xec] sm:$0xf]
      %v264 = vld [vmem:[%s1 + $0xf0] sm:$0xf]
      %v265 = vld [vmem:[%s1 + $0xf4] sm:$0xf]
      %v266 = vld [vmem:[%s1 + $0xf8] sm:$0xf]
      %v267 = vld [vmem:[%s1 + $0xfc] sm:$0xf]
      %v268 = vld [vmem:[%s1 + $0x100] sm:$0xf]
      %v269 = vld [vmem:[%s1 + $0x104] sm:$0xf]
      %v270 = vld [vmem:[%s1 + $0x108] sm:$0xf]
      %v271 = vld [vmem:[%s1 + $0x10c] sm:$0xf]
      %v272 = vld [vmem:[%s1 + $0x110] sm:$0xf]
      %v273 = vld [vmem:[%s1 + $0x114] sm:$0xf]
      %v274 = vld [vmem:[%s1 + $0x118] sm:$0xf]
      %v275 = vld [vmem:[%s1 + $0x11c] sm:$0xf]
      %v276 = vld [vmem:[%s1 + $0x120] sm:$0xf]
      %v277 = vld [vmem:[%s1 + $0x124] sm:$0xf]
      %v278 = vld [vmem:[%s1 + $0x128] sm:$0xf]
      %v279 = vld [vmem:[%s1 + $0x12c] sm:$0xf]
      %v280 = vld [vmem:[%s1 + $0x130] sm:$0xf]
      %v281 = vld [vmem:[%s1 + $0x134] sm:$0xf]
      %v282 = vld [vmem:[%s1 + $0x138] sm:$0xf]
      %v283 = vld [vmem:[%s1 + $0x13c] sm:$0xf]
      %v284 = vld [vmem:[%s1 + $0x140] sm:$0xf]
      %v285 = vld [vmem:[%s1 + $0x144] sm:$0xf]
      %v286 = vld [vmem:[%s1 + $0x148] sm:$0xf]
      %v287 = vld [vmem:[%s1 + $0x14c] sm:$0xf]
      %v288 = vld [vmem:[%s1 + $0x150] sm:$0xf]
      %v289 = vld [vmem:[%s1 + $0x154] sm:$0xf]
      %v290 = vld [vmem:[%s1 + $0x158] sm:$0xf]
      %v291 = vld [vmem:[%s1 + $0x15c] sm:$0xf]
      %v292 = vld [vmem:[%s1 + $0x160] sm:$0xf]
      %v293 = vld [vmem:[%s1 + $0x164] sm:$0xf]
      %v294 = vld [vmem:[%s1 + $0x168] sm:$0xf]
      %v295 = vld [vmem:[%s1 + $0x16c] sm:$0xf]
      %v296 = vld [vmem:[%s1 + $0x170] sm:$0xf]
      %v297 = vld [vmem:[%s1 + $0x174] sm:$0xf]
      %v298 = vld [vmem:[%s1 + $0x178] sm:$0xf]
      %v299 = vld [vmem:[%s1 + $0x17c] sm:$0xf]
      %v300 = vld [vmem:[%s1 + $0x180] sm:$0xf]
      %v301 = vld [vmem:[%s1 + $0x184] sm:$0xf]
      %v302 = vld [vmem:[%s1 + $0x188] sm:$0xf]
      %v303 = vld [vmem:[%s1 + $0x18c] sm:$0xf]
      %v336 = vunpack.c.l.b16 %v172
      %v337 = vunpack.c.h.b16 %v172
      %v338 = vunpack.c.l.b16 %v173
      %v339 = vunpack.c.h.b16 %v173
      %v340 = vunpack.c.l.b16 %v174
      %v341 = vunpack.c.h.b16 %v174
      %v342 = vunpack.c.l.b16 %v175
      %v343 = vunpack.c.l.b16 %v176
      %v344 = vunpack.c.h.b16 %v176
      %v345 = vunpack.c.l.b16 %v177
      %v346 = vunpack.c.h.b16 %v177
      %v347 = vunpack.c.l.b16 %v178
      %v348 = vunpack.c.h.b16 %v178
      %v349 = vunpack.c.l.b16 %v179
      %v350 = vunpack.c.l.b16 %v180
      %v351 = vunpack.c.h.b16 %v180
      %v352 = vunpack.c.l.b16 %v181
      %v353 = vunpack.c.h.b16 %v181
      %v354 = vunpack.c.l.b16 %v182
      %v355 = vunpack.c.h.b16 %v182
      %v356 = vunpack.c.l.b16 %v183
      %v357 = vunpack.c.l.b16 %v184
      %v358 = vunpack.c.h.b16 %v184
      %v359 = vunpack.c.l.b16 %v185
      %v360 = vunpack.c.h.b16 %v185
      %v361 = vunpack.c.l.b16 %v186
      %v362 = vunpack.c.h.b16 %v186
      %v363 = vunpack.c.l.b16 %v187
      %v364 = vunpack.c.l.b16 %v188
      %v365 = vunpack.c.h.b16 %v188
      %v366 = vunpack.c.l.b16 %v189
      %v367 = vunpack.c.h.b16 %v189
      %v368 = vunpack.c.l.b16 %v190
      %v369 = vunpack.c.h.b16 %v190
      %v370 = vunpack.c.l.b16 %v191
      %v371 = vunpack.c.l.b16 %v192
      %v372 = vunpack.c.h.b16 %v192
      %v373 = vunpack.c.l.b16 %v193
      %v374 = vunpack.c.h.b16 %v193
      %v375 = vunpack.c.l.b16 %v194
      %v376 = vunpack.c.h.b16 %v194
      %v377 = vunpack.c.l.b16 %v195
      %v378 = vunpack.c.l.b16 %v196
      %v379 = vunpack.c.h.b16 %v196
      %v380 = vunpack.c.l.b16 %v197
      %v381 = vunpack.c.h.b16 %v197
      %v382 = vunpack.c.l.b16 %v198
      %v383 = vunpack.c.h.b16 %v198
      %v384 = vunpack.c.l.b16 %v199
      %v385 = vunpack.c.l.b16 %v200
      %v386 = vunpack.c.h.b16 %v200
      %v387 = vunpack.c.l.b16 %v201
      %v388 = vunpack.c.h.b16 %v201
      %v389 = vunpack.c.l.b16 %v202
      %v390 = vunpack.c.h.b16 %v202
      %v391 = vunpack.c.l.b16 %v203
      %v392 = vpack.c.b16 %v343, %v336
      %v393 = vpack.c.b16 %v344, %v337
      %v394 = vpack.c.b16 %v345, %v338
      %v395 = vpack.c.b16 %v346, %v339
      %v396 = vpack.c.b16 %v347, %v340
      %v397 = vpack.c.b16 %v348, %v341
      %v398 = vpack.c.b16 %v349, %v342
      %v399 = vpack.c.b16 %v357, %v350
      %v400 = vpack.c.b16 %v358, %v351
      %v401 = vpack.c.b16 %v359, %v352
      %v402 = vpack.c.b16 %v360, %v353
      %v403 = vpack.c.b16 %v361, %v354
      %v404 = vpack.c.b16 %v362, %v355
      %v405 = vpack.c.b16 %v363, %v356
      %v406 = vpack.c.b16 %v371, %v364
      %v407 = vpack.c.b16 %v372, %v365
      %v408 = vpack.c.b16 %v373, %v366
      %v409 = vpack.c.b16 %v374, %v367
      %v410 = vpack.c.b16 %v375, %v368
      %v411 = vpack.c.b16 %v376, %v369
      %v412 = vpack.c.b16 %v377, %v370
      %v413 = vpack.c.b16 %v385, %v378
      %v414 = vpack.c.b16 %v386, %v379
      %v415 = vpack.c.b16 %v387, %v380
      %v416 = vpack.c.b16 %v388, %v381
      %v417 = vpack.c.b16 %v389, %v382
      %v418 = vpack.c.b16 %v390, %v383
      %v419 = vpack.c.b16 %v391, %v384
      %v544 = vunpack.c.l.b16 %v204
      %v545 = vunpack.c.l.b16 %v205
      %v546 = vunpack.c.l.b16 %v206
      %v547 = vunpack.c.l.b16 %v207
      %v548 = vunpack.c.l.b16 %v208
      %v549 = vunpack.c.l.b16 %v209
      %v550 = vunpack.c.l.b16 %v210
      %v551 = vunpack.c.l.b16 %v211
      %v552 = vunpack.c.l.b16 %v212
      %v553 = vunpack.c.l.b16 %v213
      %v554 = vunpack.c.l.b16 %v214
      %v555 = vunpack.c.l.b16 %v215
      %v556 = vunpack.c.l.b16 %v216
      %v557 = vunpack.c.l.b16 %v217
      %v558 = vunpack.c.l.b16 %v218
      %v559 = vunpack.c.l.b16 %v219
      %v560 = vunpack.c.l.b16 %v220
      %v561 = vunpack.c.l.b16 %v221
      %v562 = vunpack.c.l.b16 %v222
      %v563 = vunpack.c.l.b16 %v223
      %v564 = vunpack.c.l.b16 %v224
      %v565 = vunpack.c.l.b16 %v225
      %v566 = vunpack.c.l.b16 %v226
      %v567 = vunpack.c.l.b16 %v227
      %v568 = vunpack.c.l.b16 %v228
      %v569 = vunpack.c.l.b16 %v229
      %v570 = vunpack.c.l.b16 %v230
      %v571 = vunpack.c.l.b16 %v231
      %v572 = vunpack.c.l.b16 %v232
      %v573 = vunpack.c.l.b16 %v233
      %v574 = vunpack.c.l.b16 %v234
      %v575 = vunpack.c.l.b16 %v235
      %v576 = vunpack.c.l.b16 %v236
      %v577 = vunpack.c.l.b16 %v237
      %v578 = vunpack.c.l.b16 %v238
      %v579 = vunpack.c.l.b16 %v239
      %v580 = vunpack.c.l.b16 %v240
      %v581 = vunpack.c.l.b16 %v241
      %v582 = vunpack.c.l.b16 %v242
      %v583 = vunpack.c.l.b16 %v243
      %v584 = vunpack.c.l.b16 %v244
      %v585 = vunpack.c.l.b16 %v245
      %v586 = vunpack.c.l.b16 %v246
      %v587 = vunpack.c.l.b16 %v247
      %v588 = vunpack.c.l.b16 %v248
      %v589 = vunpack.c.l.b16 %v249
      %v590 = vunpack.c.l.b16 %v250
      %v591 = vunpack.c.l.b16 %v251
      %v592 = vunpack.c.l.b16 %v252
      %v593 = vunpack.c.l.b16 %v253
      %v594 = vunpack.c.l.b16 %v254
      %v595 = vunpack.c.l.b16 %v255
      %v596 = vunpack.c.l.b16 %v256
      %v597 = vunpack.c.l.b16 %v257
      %v598 = vunpack.c.l.b16 %v258
      %v599 = vunpack.c.l.b16 %v259
      %v600 = vunpack.c.l.b16 %v260
      %v601 = vunpack.c.l.b16 %v261
      %v602 = vunpack.c.l.b16 %v262
      %v603 = vunpack.c.l.b16 %v263
      %v604 = vunpack.c.l.b16 %v264
      %v605 = vunpack.c.l.b16 %v265
      %v606 = vunpack.c.l.b16 %v266
      %v607 = vunpack.c.l.b16 %v267
      %v608 = vunpack.c.l.b16 %v268
      %v609 = vunpack.c.l.b16 %v269
      %v610 = vunpack.c.l.b16 %v270
      %v611 = vunpack.c.l.b16 %v271
      %v612 = vunpack.c.l.b16 %v272
      %v613 = vunpack.c.l.b16 %v273
      %v614 = vunpack.c.l.b16 %v274
      %v615 = vunpack.c.l.b16 %v275
      %v616 = vunpack.c.l.b16 %v276
      %v617 = vunpack.c.l.b16 %v277
      %v618 = vunpack.c.l.b16 %v278
      %v619 = vunpack.c.l.b16 %v279
      %v620 = vunpack.c.l.b16 %v280
      %v621 = vunpack.c.l.b16 %v281
      %v622 = vunpack.c.l.b16 %v282
      %v623 = vunpack.c.l.b16 %v283
      %v624 = vunpack.c.l.b16 %v284
      %v625 = vunpack.c.l.b16 %v285
      %v626 = vunpack.c.l.b16 %v286
      %v627 = vunpack.c.l.b16 %v287
      %v628 = vunpack.c.l.b16 %v288
      %v629 = vunpack.c.l.b16 %v289
      %v630 = vunpack.c.l.b16 %v290
      %v631 = vunpack.c.l.b16 %v291
      %v632 = vunpack.c.l.b16 %v292
      %v633 = vunpack.c.l.b16 %v293
      %v634 = vunpack.c.l.b16 %v294
      %v635 = vunpack.c.l.b16 %v295
      %v636 = vunpack.c.l.b16 %v296
      %v637 = vunpack.c.l.b16 %v297
      %v638 = vunpack.c.l.b16 %v298
      %v639 = vunpack.c.l.b16 %v299
      %v640 = vunpack.c.l.b16 %v300
      %v641 = vunpack.c.l.b16 %v301
      %v642 = vunpack.c.l.b16 %v302
      %v643 = vunpack.c.l.b16 %v303
      %v644 = vpack.c.b16 %v545, %v544
      %v645 = vpack.c.b16 %v547, %v546
      %v646 = vpack.c.b16 %v549, %v548
      %v647 = vpack.c.b16 %v551, %v550
      %v648 = vpack.c.b16 %v553, %v552
      %v649 = vpack.c.b16 %v555, %v554
      %v650 = vpack.c.b16 %v557, %v556
      %v651 = vpack.c.b16 %v559, %v558
      %v652 = vpack.c.b16 %v561, %v560
      %v653 = vpack.c.b16 %v563, %v562
      %v654 = vpack.c.b16 %v565, %v564
      %v655 = vpack.c.b16 %v567, %v566
      %v656 = vpack.c.b16 %v569, %v568
      %v657 = vpack.c.b16 %v571, %v570
      %v658 = vpack.c.b16 %v573, %v572
      %v659 = vpack.c.b16 %v575, %v574
      %v660 = vpack.c.b16 %v577, %v576
      %v661 = vpack.c.b16 %v579, %v578
      %v662 = vpack.c.b16 %v581, %v580
      %v663 = vpack.c.b16 %v583, %v582
      %v664 = vpack.c.b16 %v585, %v584
      %v665 = vpack.c.b16 %v587, %v586
      %v666 = vpack.c.b16 %v589, %v588
      %v667 = vpack.c.b16 %v591, %v590
      %v668 = vpack.c.b16 %v593, %v592
      %v669 = vpack.c.b16 %v595, %v594
      %v670 = vpack.c.b16 %v597, %v596
      %v671 = vpack.c.b16 %v599, %v598
      %v672 = vpack.c.b16 %v601, %v600
      %v673 = vpack.c.b16 %v603, %v602
      %v674 = vpack.c.b16 %v605, %v604
      %v675 = vpack.c.b16 %v607, %v606
      %v676 = vpack.c.b16 %v609, %v608
      %v677 = vpack.c.b16 %v611, %v610
      %v678 = vpack.c.b16 %v613, %v612
      %v679 = vpack.c.b16 %v615, %v614
      %v680 = vpack.c.b16 %v617, %v616
      %v681 = vpack.c.b16 %v619, %v618
      %v682 = vpack.c.b16 %v621, %v620
      %v683 = vpack.c.b16 %v623, %v622
      %v684 = vpack.c.b16 %v625, %v624
      %v685 = vpack.c.b16 %v627, %v626
      %v686 = vpack.c.b16 %v629, %v628
      %v687 = vpack.c.b16 %v631, %v630
      %v688 = vpack.c.b16 %v633, %v632
      %v689 = vpack.c.b16 %v635, %v634
      %v690 = vpack.c.b16 %v637, %v636
      %v691 = vpack.c.b16 %v639, %v638
      %v692 = vpack.c.b16 %v641, %v640
      %v693 = vpack.c.b16 %v643, %v642
      %vm744 = vcmask 261120
      %v746 = vsel %vm744, %v398, 0
      %v749 = vsel %vm744, %v405, 0
      %v752 = vsel %vm744, %v412, 0
      %v755 = vsel %vm744, %v419, 0
      %757 = vmatprep.subr.bf16.mxu0 0
      %758 = vmatpush1.bf16.msra.mxu0 %v644
      %759 = vmatprep.subr.bf16.mxu0 0
      %760 = vmatpush1.bf16.msra.mxu0 %v645
      %761 = vmatprep.subr.bf16.mxu0 0
      %762 = vmatpush1.bf16.msra.mxu0 %v646
      %763 = vmatprep.subr.bf16.mxu0 0
      %764 = vmatpush1.bf16.msra.mxu0 %v647
      %765 = vmatprep.subr.bf16.mxu0 0
      %766 = vmatpush1.bf16.msra.mxu0 %v648
      %767 = vmatprep.subr.bf16.mxu0 0
      %768 = vmatpush1.bf16.msra.mxu0 %v649
      %769 = vmatprep.subr.bf16.mxu0 0
      %770 = vmatpush1.bf16.msra.mxu0 %v650
      %771 = vmatprep.subr.bf16.mxu0 0
      %772 = vmatpush1.bf16.msra.mxu0 %v651
      %773 = vmatprep.subr.bf16.mxu0 0
      %774 = vmatpush1.bf16.msra.mxu0 %v652
      %775 = vmatprep.subr.bf16.mxu0 0
      %776 = vmatpush1.bf16.msra.mxu0 %v653
      %777 = vmatprep.subr.bf16.mxu0 0
      %778 = vmatpush1.bf16.msra.mxu0 %v654
      %779 = vmatprep.subr.bf16.mxu0 0
      %780 = vmatpush1.bf16.msra.mxu0 %v655
      %781 = vmatprep.subr.bf16.mxu0 0
      %782 = vmatpush1.bf16.msra.mxu0 %v656
      %783 = vmatprep.subr.bf16.mxu0 0
      %784 = vmatpush1.bf16.msra.mxu0 %v657
      %785 = vmatprep.subr.bf16.mxu0 0
      %786 = vmatpush1.bf16.msra.mxu0 %v658
      %787 = vmatprep.subr.bf16.mxu0 0
      %788 = vmatpush1.bf16.msra.mxu0 %v659
      %789 = vmatprep.mubr.bf16.mxu0 %v393
      %790 = vmatmul.mubr.bf16.gmra.mrb[0].mxu0 %v392
      %v791 = vpop.f32.mrb[0].mxu0
      %v792 = vadd.f32 0.0, %v791
      %v793 = vpop.f32.mrb[0].mxu0
      %v794 = vpop.f32.mrb[0].mxu0
      %v795 = vadd.f32 0.0, %v794
      %v796 = vpop.f32.mrb[0].mxu0
      %797 = vmatprep.mubr.bf16.mxu0 %v400
      %798 = vmatmul.mubr.bf16.gmra.mrb[0].mxu0 %v399
      %v799 = vpop.f32.mrb[0].mxu0
      %v800 = vadd.f32 0.0, %v799
      %v801 = vpop.f32.mrb[0].mxu0
      %v802 = vpop.f32.mrb[0].mxu0
      %v803 = vadd.f32 0.0, %v802
      %v804 = vpop.f32.mrb[0].mxu0
      %805 = vmatprep.mubr.bf16.mxu0 %v407
      %806 = vmatmul.mubr.bf16.gmra.mrb[0].mxu0 %v406
      %v807 = vpop.f32.mrb[0].mxu0
      %v808 = vadd.f32 0.0, %v807
      %v809 = vpop.f32.mrb[0].mxu0
      %v810 = vpop.f32.mrb[0].mxu0
      %v811 = vadd.f32 0.0, %v810
      %v812 = vpop.f32.mrb[0].mxu0
      %813 = vmatprep.mubr.bf16.mxu0 %v414
      %814 = vmatmul.mubr.bf16.gmra.mrb[0].mxu0 %v413
      %v815 = vpop.f32.mrb[0].mxu0
      %v816 = vadd.f32 0.0, %v815
      %v817 = vpop.f32.mrb[0].mxu0
      %v818 = vpop.f32.mrb[0].mxu0
      %v819 = vadd.f32 0.0, %v818
      %v820 = vpop.f32.mrb[0].mxu0
      %821 = vdwg.mxu0
      %822 = vmatprep.subr.bf16.mxu0 0
      %823 = vmatpush1.bf16.msra.mxu0 %v660
      %824 = vmatprep.subr.bf16.mxu0 0
      %825 = vmatpush1.bf16.msra.mxu0 %v661
      %826 = vmatprep.subr.bf16.mxu0 0
      %827 = vmatpush1.bf16.msra.mxu0 %v662
      %828 = vmatprep.subr.bf16.mxu0 0
      %829 = vmatpush1.bf16.msra.mxu0 %v663
      %830 = vmatprep.subr.bf16.mxu0 0
      %831 = vmatpush1.bf16.msra.mxu0 %v664
      %832 = vmatprep.subr.bf16.mxu0 0
      %833 = vmatpush1.bf16.msra.mxu0 %v665
      %834 = vmatprep.subr.bf16.mxu0 0
      %835 = vmatpush1.bf16.msra.mxu0 %v666
      %836 = vmatprep.subr.bf16.mxu0 0
      %837 = vmatpush1.bf16.msra.mxu0 %v667
      %838 = vmatprep.subr.bf16.mxu0 0
      %839 = vmatpush1.bf16.msra.mxu0 %v668
      %840 = vmatprep.subr.bf16.mxu0 0
      %841 = vmatpush1.bf16.msra.mxu0 %v669
      %842 = vmatprep.subr.bf16.mxu0 0
      %843 = vmatpush1.bf16.msra.mxu0 %v670
      %844 = vmatprep.subr.bf16.mxu0 0
      %845 = vmatpush1.bf16.msra.mxu0 %v671
      %846 = vmatprep.subr.bf16.mxu0 0
      %847 = vmatpush1.bf16.msra.mxu0 %v672
      %848 = vmatprep.subr.bf16.mxu0 0
      %849 = vmatpush1.bf16.msra.mxu0 %v673
      %850 = vmatprep.subr.bf16.mxu0 0
      %851 = vmatpush1.bf16.msra.mxu0 %v674
      %852 = vmatprep.subr.bf16.mxu0 0
      %853 = vmatpush1.bf16.msra.mxu0 %v675
      %854 = vmatprep.mubr.bf16.mxu0 %v395
      %855 = vmatmul.mubr.bf16.gmra.mrb[0].mxu0 %v394
      %v856 = vpop.f32.mrb[0].mxu0
      %v857 = vadd.f32 %v792, %v856
      %v858 = vpop.f32.mrb[0].mxu0
      %v859 = vpop.f32.mrb[0].mxu0
      %v860 = vadd.f32 %v795, %v859
      %v861 = vpop.f32.mrb[0].mxu0
      %862 = vmatprep.mubr.bf16.mxu0 %v402
      %863 = vmatmul.mubr.bf16.gmra.mrb[0].mxu0 %v401
      %v864 = vpop.f32.mrb[0].mxu0
      %v865 = vadd.f32 %v800, %v864
      %v866 = vpop.f32.mrb[0].mxu0
      %v867 = vpop.f32.mrb[0].mxu0
      %v868 = vadd.f32 %v803, %v867
      %v869 = vpop.f32.mrb[0].mxu0
      %870 = vmatprep.mubr.bf16.mxu0 %v409
      %871 = vmatmul.mubr.bf16.gmra.mrb[0].mxu0 %v408
      %v872 = vpop.f32.mrb[0].mxu0
      %v873 = vadd.f32 %v808, %v872
      %v874 = vpop.f32.mrb[0].mxu0
      %v875 = vpop.f32.mrb[0].mxu0
      %v876 = vadd.f32 %v811, %v875
      %v877 = vpop.f32.mrb[0].mxu0
      %878 = vmatprep.mubr.bf16.mxu0 %v416
      %879 = vmatmul.mubr.bf16.gmra.mrb[0].mxu0 %v415
      %v880 = vpop.f32.mrb[0].mxu0
      %v881 = vadd.f32 %v816, %v880
      %v882 = vpop.f32.mrb[0].mxu0
      %v883 = vpop.f32.mrb[0].mxu0
      %v884 = vadd.f32 %v819, %v883
      %v885 = vpop.f32.mrb[0].mxu0
      %886 = vdwg.mxu0
      %887 = vmatprep.subr.bf16.mxu0 0
      %888 = vmatpush1.bf16.msra.mxu0 %v676
      %889 = vmatprep.subr.bf16.mxu0 0
      %890 = vmatpush1.bf16.msra.mxu0 %v677
      %891 = vmatprep.subr.bf16.mxu0 0
      %892 = vmatpush1.bf16.msra.mxu0 %v678
      %893 = vmatprep.subr.bf16.mxu0 0
      %894 = vmatpush1.bf16.msra.mxu0 %v679
      %895 = vmatprep.subr.bf16.mxu0 0
      %896 = vmatpush1.bf16.msra.mxu0 %v680
      %897 = vmatprep.subr.bf16.mxu0 0
      %898 = vmatpush1.bf16.msra.mxu0 %v681
      %899 = vmatprep.subr.bf16.mxu0 0
      %900 = vmatpush1.bf16.msra.mxu0 %v682
      %901 = vmatprep.subr.bf16.mxu0 0
      %902 = vmatpush1.bf16.msra.mxu0 %v683
      %903 = vmatprep.subr.bf16.mxu0 0
      %904 = vmatpush1.bf16.msra.mxu0 %v684
      %905 = vmatprep.subr.bf16.mxu0 0
      %906 = vmatpush1.bf16.msra.mxu0 %v685
      %907 = vmatprep.subr.bf16.mxu0 0
      %908 = vmatpush1.bf16.msra.mxu0 %v686
      %909 = vmatprep.subr.bf16.mxu0 0
      %910 = vmatpush1.bf16.msra.mxu0 %v687
      %911 = vmatprep.subr.bf16.mxu0 0
      %912 = vmatpush1.bf16.msra.mxu0 %v688
      %913 = vmatprep.subr.bf16.mxu0 0
      %914 = vmatpush1.bf16.msra.mxu0 %v689
      %915 = vmatprep.subr.bf16.mxu0 0
      %916 = vmatpush1.bf16.msra.mxu0 %v690
      %917 = vmatprep.subr.bf16.mxu0 0
      %918 = vmatpush1.bf16.msra.mxu0 %v691
      %919 = vmatprep.mubr.bf16.mxu0 %v397
      %920 = vmatmul.mubr.bf16.gmra.mrb[0].mxu0 %v396
      %v921 = vpop.f32.mrb[0].mxu0
      %v922 = vadd.f32 %v857, %v921
      %v923 = vpop.f32.mrb[0].mxu0
      %v924 = vpop.f32.mrb[0].mxu0
      %v925 = vadd.f32 %v860, %v924
      %v926 = vpop.f32.mrb[0].mxu0
      %927 = vmatprep.mubr.bf16.mxu0 %v404
      %928 = vmatmul.mubr.bf16.gmra.mrb[0].mxu0 %v403
      %v929 = vpop.f32.mrb[0].mxu0
      %v930 = vadd.f32 %v865, %v929
      %v931 = vpop.f32.mrb[0].mxu0
      %v932 = vpop.f32.mrb[0].mxu0
      %v933 = vadd.f32 %v868, %v932
      %v934 = vpop.f32.mrb[0].mxu0
      %935 = vmatprep.mubr.bf16.mxu0 %v411
      %936 = vmatmul.mubr.bf16.gmra.mrb[0].mxu0 %v410
      %v937 = vpop.f32.mrb[0].mxu0
      %v938 = vadd.f32 %v873, %v937
      %v939 = vpop.f32.mrb[0].mxu0
      %v940 = vpop.f32.mrb[0].mxu0
      %v941 = vadd.f32 %v876, %v940
      %v942 = vpop.f32.mrb[0].mxu0
      %943 = vmatprep.mubr.bf16.mxu0 %v418
      %944 = vmatmul.mubr.bf16.gmra.mrb[0].mxu0 %v417
      %v945 = vpop.f32.mrb[0].mxu0
      %v946 = vadd.f32 %v881, %v945
      %v947 = vpop.f32.mrb[0].mxu0
      %v948 = vpop.f32.mrb[0].mxu0
      %v949 = vadd.f32 %v884, %v948
      %v950 = vpop.f32.mrb[0].mxu0
      %951 = vdwg.mxu0
      %952 = vmatprep.subr.bf16.mxu0 0
      %953 = vmatpush1.bf16.msra.mxu0 %v692
      %954 = vmatprep.subr.bf16.mxu0 0
      %955 = vmatpush1.bf16.msra.mxu0 %v693
      %956 = vmatprep.subr.bf16.mxu0 0
      %957 = vmatpush1.bf16.msra.mxu0 0
      %958 = vmatprep.subr.bf16.mxu0 0
      %959 = vmatpush1.bf16.msra.mxu0 0
      %960 = vmatprep.subr.bf16.mxu0 0
      %961 = vmatpush1.bf16.msra.mxu0 0
      %962 = vmatprep.subr.bf16.mxu0 0
      %963 = vmatpush1.bf16.msra.mxu0 0
      %964 = vmatprep.subr.bf16.mxu0 0
      %965 = vmatpush1.bf16.msra.mxu0 0
      %966 = vmatprep.subr.bf16.mxu0 0
      %967 = vmatpush1.bf16.msra.mxu0 0
      %968 = vmatprep.subr.bf16.mxu0 0
      %969 = vmatpush1.bf16.msra.mxu0 0
      %970 = vmatprep.subr.bf16.mxu0 0
      %971 = vmatpush1.bf16.msra.mxu0 0
      %972 = vmatprep.subr.bf16.mxu0 0
      %973 = vmatpush1.bf16.msra.mxu0 0
      %974 = vmatprep.subr.bf16.mxu0 0
      %975 = vmatpush1.bf16.msra.mxu0 0
      %976 = vmatprep.subr.bf16.mxu0 0
      %977 = vmatpush1.bf16.msra.mxu0 0
      %978 = vmatprep.subr.bf16.mxu0 0
      %979 = vmatpush1.bf16.msra.mxu0 0
      %980 = vmatprep.subr.bf16.mxu0 0
      %981 = vmatpush1.bf16.msra.mxu0 0
      %982 = vmatprep.subr.bf16.mxu0 0
      %983 = vmatpush1.bf16.msra.mxu0 0
      %984 = vmatprep.mubr.bf16.mxu0 0
      %985 = vmatmul.mubr.bf16.gmra.mrb[0].mxu0 %v746
      %v986 = vpop.f32.mrb[0].mxu0
      %v987 = vadd.f32 %v922, %v986
      %v988 = vpop.f32.mrb[0].mxu0
      %v989 = vpop.f32.mrb[0].mxu0
      %v990 = vadd.f32 %v925, %v989
      %v991 = vpop.f32.mrb[0].mxu0
      %992 = vmatprep.mubr.bf16.mxu0 0
      %993 = vmatmul.mubr.bf16.gmra.mrb[0].mxu0 %v749
      %v994 = vpop.f32.mrb[0].mxu0
      %v995 = vadd.f32 %v930, %v994
      %v996 = vpop.f32.mrb[0].mxu0
      %v997 = vpop.f32.mrb[0].mxu0
      %v998 = vadd.f32 %v933, %v997
      %v999 = vpop.f32.mrb[0].mxu0
      %1000 = vmatprep.mubr.bf16.mxu0 0
      %1001 = vmatmul.mubr.bf16.gmra.mrb[0].mxu0 %v752
      %v1002 = vpop.f32.mrb[0].mxu0
      %v1003 = vadd.f32 %v938, %v1002
      %v1004 = vpop.f32.mrb[0].mxu0
      %v1005 = vpop.f32.mrb[0].mxu0
      %v1006 = vadd.f32 %v941, %v1005
      %v1007 = vpop.f32.mrb[0].mxu0
      %1008 = vmatprep.mubr.bf16.mxu0 0
      %1009 = vmatmul.mubr.bf16.gmra.mrb[0].mxu0 %v755
      %v1010 = vpop.f32.mrb[0].mxu0
      %v1011 = vadd.f32 %v946, %v1010
      %v1012 = vpop.f32.mrb[0].mxu0
      %v1013 = vpop.f32.mrb[0].mxu0
      %v1014 = vadd.f32 %v949, %v1013
      %v1015 = vpop.f32.mrb[0].mxu0
      %1016 = vdwg.mxu0
      %v1017 = vmax.f32 %v987, %v990
      %v1018 = vmax.f32 %v995, %v998
      %v1019 = vmax.f32 %v1003, %v1006
      %v1020 = vmax.f32 %v1011, %v1014
      %vm1021 = vcmask 523264
      %1022 = vst.msk [vmem:[#allocation2] sm:$0xff] %vm1021, %v1017
      %1023 = vst.msk [vmem:[#allocation2 + $0x8] sm:$0xff] %vm1021, %v1018
      %1024 = vst.msk [vmem:[#allocation2 + $0x10] sm:$0xff] %vm1021, %v1019
      %1025 = vst.msk [vmem:[#allocation2 + $0x18] sm:$0xff] %vm1021, %v1020
      %v1026 = vld [vmem:[#allocation2] ss:$2 sm:$0xf]
      %s1027 = scalar_lea.vmem [#allocation2], 8
      %v1028 = vld [vmem:[%s1027] ss:$2 sm:$0xf]
      %s1029 = scalar_lea.vmem [#allocation2], 16
      %v1030 = vld [vmem:[%s1029] ss:$2 sm:$0xf]
      %s1031 = scalar_lea.vmem [#allocation2], 24
      %v1032 = vld [vmem:[%s1031] ss:$2 sm:$0xf]
      %s1033 = scalar_lea.vmem [#allocation2], 1
      %v1034 = vld [vmem:[%s1033] ss:$2 sm:$0xf]
      %s1035 = scalar_lea.vmem [#allocation2], 9
      %v1036 = vld [vmem:[%s1035] ss:$2 sm:$0xf]
      %s1037 = scalar_lea.vmem [#allocation2], 17
      %v1038 = vld [vmem:[%s1037] ss:$2 sm:$0xf]
      %s1039 = scalar_lea.vmem [#allocation2], 25
      %v1040 = vld [vmem:[%s1039] ss:$2 sm:$0xf]
      %v1041 = vmax.f32 %v1026, %v1034
      %v1042 = vmax.f32 %v1028, %v1036
      %v1043 = vmax.f32 %v1030, %v1038
      %v1044 = vmax.f32 %v1032, %v1040
      %v1045 = vld [vmem:[%s2] sm:$0x1]
      %v1047 = vlaneseq
      %v1048 = vshrl.u32 %v1047, 7
      %v1049 = vsub.s32 0, %v1048
      %v1050 = vrot.slane %v1045, %v1049
      %v1052 = vadd.f32 %v1041, %v1050
      %v1053 = vadd.f32 %v1042, %v1050
      %v1054 = vadd.f32 %v1043, %v1050
      %v1055 = vadd.f32 %v1044, %v1050
      %v1056 = vpack.c.bf16 %v1052, %v1052
      %v1057 = vpack.c.bf16 %v1053, %v1053
      %v1058 = vpack.c.bf16 %v1054, %v1054
      %v1059 = vpack.c.bf16 %v1055, %v1055
      %vm1060 = vcmask 517120
      %1061 = vst.msk [vmem:[%s170] sm:$0x3] %vm1060, %v1056
      %1062 = vst.msk [vmem:[%s170 + $0x2] sm:$0x3] %vm1060, %v1057
      %1063 = vst.msk [vmem:[%s170 + $0x4] sm:$0x3] %vm1060, %v1058
      %1064 = vst.msk [vmem:[%s170 + $0x6] sm:$0x3] %vm1060, %v1059
      %p1065 = scmp.lt.s32.totalorder %s14, 1
      %s1066 = scalar_select %p1065, %s14, 1
      %s1067 = smul.addr %s1066, 4
      %s1068 = smul.addr %s1067, 2
      %s1069 = scalar_lea.vmem %s3, %s1068
      // Predicated region
      $region33: #{jlnet_forward.6} parent=31 // pred_check
        %p1070 = pneg %p100
      $region34: #{jlnet_forward.6} parent=31 // pred_check_branch
        %1072 = sbr.rel (%p1070) target = $region36
      $region35: #{jlnet_forward.6} parent=31 // pred_region
        _
      $region36: #{jlnet_forward.6} parent=31 // pred_fallthru
        _
    $region32: #{jlnet_forward.6} parent=5 // pred_fallthru
      _
    %p1073 = scmp.le.s32.totalorder 2, %s9
    // Predicated region
    $region37: #{jlnet_forward.6} parent=5 // pred_check
      %p1074 = pneg %p1073
    $region38: #{jlnet_forward.6} parent=5 // pred_check_branch
      %1076 = sbr.rel (%p1074) target = $region40
    $region39: #{jlnet_forward.6} parent=5 // pred_region
      %s1077 = ssub.s32 %s9, 2
      // Predicated region
      $region41: #{jlnet_forward.6} parent=39 // pred_check
        %p1078 = pneg %p106
      $region42: #{jlnet_forward.6} parent=39 // pred_check_branch
        %1080 = sbr.rel (%p1078) target = $region44
      $region43: #{jlnet_forward.6} parent=39 // pred_region
        %p1081 = scmp.lt.s32.totalorder %s15, 1
        %s1082 = scalar_select %p1081, %s15, 1
        %s1083 = smul.addr %s1082, 4
        %s1084 = smul.addr %s1083, 2
        %s1085 = scalar_lea.vmem %s3, %s1084
      $region44: #{jlnet_forward.6} parent=39 // pred_fallthru
        _
    $region40: #{jlnet_forward.6} parent=5 // pred_fallthru
      _
  $region6: #{jlnet_forward.6} parent=0 // loop_footer
    %s13 = sadd.s32 1, %s9
  $region7: #{jlnet_forward.6} parent=0 // loop_footer_branch
    %8 = sbr.rel target = $region3
  $region8: #{jlnet_forward.6} parent=0 // loop_exit
    _

// kernel: jlnet_forward.7
$region0: #{jlnet_forward.7}
  #allocation0 [shape = 'u32[]', space=smem, size = 0x4, offset = 0x4, fixed_abs, tag = 'smem constant byte address 0x4 - core index']
  #allocation1 [shape = 'u32[144,128]{1,0:T(1,128)}', space=vmem, size = 0x12000, scoped, tag = 'internal scratch']
  %s0 = inlined_call_operand.vmem [shape: bf16[2,1024], index: 0, kind: input, shape index: {}]
  %s1 = inlined_call_operand.vmem [shape: bf16[1024,64], index: 1, kind: input, shape index: {}]
  %s2 = inlined_call_operand.vmem [shape: f32[1,64], index: 2, kind: input, shape index: {}]
  %s3 = inlined_call_operand.vmem [shape: bf16[64,10], index: 3, kind: input, shape index: {}]
  %s4 = inlined_call_operand.vmem [shape: f32[1,10], index: 4, kind: input, shape index: {}]
  %s5 = inlined_call_operand.hbm [shape: f32[2,10], index: 5, kind: output, shape index: {}]
  %s6 = sld [smem:[#allocation0]]
  $region30: #{jlnet_forward.7} parent=0
    _
  %s8 = ssub.s32 1, %s6
  %s9 = scalar_select 0, %s8, %s6
  $region1: #{jlnet_forward.7} parent=0
    #allocation2 [shape = 'u8[1024]{0}', space=vmem, size = 0x400, scoped, tag = 'output window, operand 0, single buffered']
    #allocation3 [shape = 's32[1]{0}', space=sflag, size = 0x4, scoped, tag = 'scoped memory for jlnet_forward.7']
    %10 = vsyncpa [#allocation3], 0
    // Predicated region
    $region2: #{jlnet_forward.7} parent=1 // pred_check
      _
    $region3: #{jlnet_forward.7} parent=1 // pred_check_branch
      %12 = sbr.rel (0) target = $region5
    $region4: #{jlnet_forward.7} parent=1 // pred_region
      _
    $region5: #{jlnet_forward.7} parent=1 // pred_fallthru
      _
    // Predicated region
    $region6: #{jlnet_forward.7} parent=1 // pred_check
      _
    $region7: #{jlnet_forward.7} parent=1 // pred_check_branch
      %14 = sbr.rel (0) target = $region9
    $region8: #{jlnet_forward.7} parent=1 // pred_region
      _
    $region9: #{jlnet_forward.7} parent=1 // pred_fallthru
      _
    // Predicated region
    $region10: #{jlnet_forward.7} parent=1 // pred_check
      _
    $region11: #{jlnet_forward.7} parent=1 // pred_check_branch
      %16 = sbr.rel (0) target = $region13
    $region12: #{jlnet_forward.7} parent=1 // pred_region
      _
    $region13: #{jlnet_forward.7} parent=1 // pred_fallthru
      _
    // Predicated region
    $region14: #{jlnet_forward.7} parent=1 // pred_check
      _
    $region15: #{jlnet_forward.7} parent=1 // pred_check_branch
      %18 = sbr.rel (0) target = $region17
    $region16: #{jlnet_forward.7} parent=1 // pred_region
      _
    $region17: #{jlnet_forward.7} parent=1 // pred_fallthru
      _
    // Predicated region
    $region18: #{jlnet_forward.7} parent=1 // pred_check
      _
    $region19: #{jlnet_forward.7} parent=1 // pred_check_branch
      %20 = sbr.rel (0) target = $region21
    $region20: #{jlnet_forward.7} parent=1 // pred_region
      _
    $region21: #{jlnet_forward.7} parent=1 // pred_fallthru
      _
    %v22 = vld [vmem:[%s0] sm:$0xff]
    %v23 = vld [vmem:[%s1] sm:$0xf]
    %v24 = vld [vmem:[%s1 + $0x4] sm:$0xf]
    %v25 = vld [vmem:[%s1 + $0x8] sm:$0xf]
    %v26 = vld [vmem:[%s1 + $0xc] sm:$0xf]
    %v27 = vld [vmem:[%s1 + $0x10] sm:$0xf]
    %v28 = vld [vmem:[%s1 + $0x14] sm:$0xf]
    %v29 = vld [vmem:[%s1 + $0x18] sm:$0xf]
    %v30 = vld [vmem:[%s1 + $0x1c] sm:$0xf]
    %v31 = vld [vmem:[%s1 + $0x20] sm:$0xf]
    %v32 = vld [vmem:[%s1 + $0x24] sm:$0xf]
    %v33 = vld [vmem:[%s1 + $0x28] sm:$0xf]
    %v34 = vld [vmem:[%s1 + $0x2c] sm:$0xf]
    %v35 = vld [vmem:[%s1 + $0x30] sm:$0xf]
    %v36 = vld [vmem:[%s1 + $0x34] sm:$0xf]
    %v37 = vld [vmem:[%s1 + $0x38] sm:$0xf]
    %v38 = vld [vmem:[%s1 + $0x3c] sm:$0xf]
    %v39 = vld [vmem:[%s1 + $0x40] sm:$0xf]
    %v40 = vld [vmem:[%s1 + $0x44] sm:$0xf]
    %v41 = vld [vmem:[%s1 + $0x48] sm:$0xf]
    %v42 = vld [vmem:[%s1 + $0x4c] sm:$0xf]
    %v43 = vld [vmem:[%s1 + $0x50] sm:$0xf]
    %v44 = vld [vmem:[%s1 + $0x54] sm:$0xf]
    %v45 = vld [vmem:[%s1 + $0x58] sm:$0xf]
    %v46 = vld [vmem:[%s1 + $0x5c] sm:$0xf]
    %v47 = vld [vmem:[%s1 + $0x60] sm:$0xf]
    %v48 = vld [vmem:[%s1 + $0x64] sm:$0xf]
    %v49 = vld [vmem:[%s1 + $0x68] sm:$0xf]
    %v50 = vld [vmem:[%s1 + $0x6c] sm:$0xf]
    %v51 = vld [vmem:[%s1 + $0x70] sm:$0xf]
    %v52 = vld [vmem:[%s1 + $0x74] sm:$0xf]
    %v53 = vld [vmem:[%s1 + $0x78] sm:$0xf]
    %v54 = vld [vmem:[%s1 + $0x7c] sm:$0xf]
    %v55 = vld [vmem:[%s1 + $0x80] sm:$0xf]
    %v56 = vld [vmem:[%s1 + $0x84] sm:$0xf]
    %v57 = vld [vmem:[%s1 + $0x88] sm:$0xf]
    %v58 = vld [vmem:[%s1 + $0x8c] sm:$0xf]
    %v59 = vld [vmem:[%s1 + $0x90] sm:$0xf]
    %v60 = vld [vmem:[%s1 + $0x94] sm:$0xf]
    %v61 = vld [vmem:[%s1 + $0x98] sm:$0xf]
    %v62 = vld [vmem:[%s1 + $0x9c] sm:$0xf]
    %v63 = vld [vmem:[%s1 + $0xa0] sm:$0xf]
    %v64 = vld [vmem:[%s1 + $0xa4] sm:$0xf]
    %v65 = vld [vmem:[%s1 + $0xa8] sm:$0xf]
    %v66 = vld [vmem:[%s1 + $0xac] sm:$0xf]
    %v67 = vld [vmem:[%s1 + $0xb0] sm:$0xf]
    %v68 = vld [vmem:[%s1 + $0xb4] sm:$0xf]
    %v69 = vld [vmem:[%s1 + $0xb8] sm:$0xf]
    %v70 = vld [vmem:[%s1 + $0xbc] sm:$0xf]
    %v71 = vld [vmem:[%s1 + $0xc0] sm:$0xf]
    %v72 = vld [vmem:[%s1 + $0xc4] sm:$0xf]
    %v73 = vld [vmem:[%s1 + $0xc8] sm:$0xf]
    %v74 = vld [vmem:[%s1 + $0xcc] sm:$0xf]
    %v75 = vld [vmem:[%s1 + $0xd0] sm:$0xf]
    %v76 = vld [vmem:[%s1 + $0xd4] sm:$0xf]
    %v77 = vld [vmem:[%s1 + $0xd8] sm:$0xf]
    %v78 = vld [vmem:[%s1 + $0xdc] sm:$0xf]
    %v79 = vld [vmem:[%s1 + $0xe0] sm:$0xf]
    %v80 = vld [vmem:[%s1 + $0xe4] sm:$0xf]
    %v81 = vld [vmem:[%s1 + $0xe8] sm:$0xf]
    %v82 = vld [vmem:[%s1 + $0xec] sm:$0xf]
    %v83 = vld [vmem:[%s1 + $0xf0] sm:$0xf]
    %v84 = vld [vmem:[%s1 + $0xf4] sm:$0xf]
    %v85 = vld [vmem:[%s1 + $0xf8] sm:$0xf]
    %v86 = vld [vmem:[%s1 + $0xfc] sm:$0xf]
    %v87 = vld [vmem:[%s1 + $0x100] sm:$0xf]
    %v88 = vld [vmem:[%s1 + $0x104] sm:$0xf]
    %v89 = vld [vmem:[%s1 + $0x108] sm:$0xf]
    %v90 = vld [vmem:[%s1 + $0x10c] sm:$0xf]
    %v91 = vld [vmem:[%s1 + $0x110] sm:$0xf]
    %v92 = vld [vmem:[%s1 + $0x114] sm:$0xf]
    %v93 = vld [vmem:[%s1 + $0x118] sm:$0xf]
    %v94 = vld [vmem:[%s1 + $0x11c] sm:$0xf]
    %v95 = vld [vmem:[%s1 + $0x120] sm:$0xf]
    %v96 = vld [vmem:[%s1 + $0x124] sm:$0xf]
    %v97 = vld [vmem:[%s1 + $0x128] sm:$0xf]
    %v98 = vld [vmem:[%s1 + $0x12c] sm:$0xf]
    %v99 = vld [vmem:[%s1 + $0x130] sm:$0xf]
    %v100 = vld [vmem:[%s1 + $0x134] sm:$0xf]
    %v101 = vld [vmem:[%s1 + $0x138] sm:$0xf]
    %v102 = vld [vmem:[%s1 + $0x13c] sm:$0xf]
    %v103 = vld [vmem:[%s1 + $0x140] sm:$0xf]
    %v104 = vld [vmem:[%s1 + $0x144] sm:$0xf]
    %v105 = vld [vmem:[%s1 + $0x148] sm:$0xf]
    %v106 = vld [vmem:[%s1 + $0x14c] sm:$0xf]
    %v107 = vld [vmem:[%s1 + $0x150] sm:$0xf]
    %v108 = vld [vmem:[%s1 + $0x154] sm:$0xf]
    %v109 = vld [vmem:[%s1 + $0x158] sm:$0xf]
    %v110 = vld [vmem:[%s1 + $0x15c] sm:$0xf]
    %v111 = vld [vmem:[%s1 + $0x160] sm:$0xf]
    %v112 = vld [vmem:[%s1 + $0x164] sm:$0xf]
    %v113 = vld [vmem:[%s1 + $0x168] sm:$0xf]
    %v114 = vld [vmem:[%s1 + $0x16c] sm:$0xf]
    %v115 = vld [vmem:[%s1 + $0x170] sm:$0xf]
    %v116 = vld [vmem:[%s1 + $0x174] sm:$0xf]
    %v117 = vld [vmem:[%s1 + $0x178] sm:$0xf]
    %v118 = vld [vmem:[%s1 + $0x17c] sm:$0xf]
    %v119 = vld [vmem:[%s1 + $0x180] sm:$0xf]
    %v120 = vld [vmem:[%s1 + $0x184] sm:$0xf]
    %v121 = vld [vmem:[%s1 + $0x188] sm:$0xf]
    %v122 = vld [vmem:[%s1 + $0x18c] sm:$0xf]
    %v123 = vld [vmem:[%s1 + $0x190] sm:$0xf]
    %v124 = vld [vmem:[%s1 + $0x194] sm:$0xf]
    %v125 = vld [vmem:[%s1 + $0x198] sm:$0xf]
    %v126 = vld [vmem:[%s1 + $0x19c] sm:$0xf]
    %v127 = vld [vmem:[%s1 + $0x1a0] sm:$0xf]
    %v128 = vld [vmem:[%s1 + $0x1a4] sm:$0xf]
    %v129 = vld [vmem:[%s1 + $0x1a8] sm:$0xf]
    %v130 = vld [vmem:[%s1 + $0x1ac] sm:$0xf]
    %v131 = vld [vmem:[%s1 + $0x1b0] sm:$0xf]
    %v132 = vld [vmem:[%s1 + $0x1b4] sm:$0xf]
    %v133 = vld [vmem:[%s1 + $0x1b8] sm:$0xf]
    %v134 = vld [vmem:[%s1 + $0x1bc] sm:$0xf]
    %v135 = vld [vmem:[%s1 + $0x1c0] sm:$0xf]
    %v136 = vld [vmem:[%s1 + $0x1c4] sm:$0xf]
    %v137 = vld [vmem:[%s1 + $0x1c8] sm:$0xf]
    %v138 = vld [vmem:[%s1 + $0x1cc] sm:$0xf]
    %v139 = vld [vmem:[%s1 + $0x1d0] sm:$0xf]
    %v140 = vld [vmem:[%s1 + $0x1d4] sm:$0xf]
    %v141 = vld [vmem:[%s1 + $0x1d8] sm:$0xf]
    %v142 = vld [vmem:[%s1 + $0x1dc] sm:$0xf]
    %v143 = vld [vmem:[%s1 + $0x1e0] sm:$0xf]
    %v144 = vld [vmem:[%s1 + $0x1e4] sm:$0xf]
    %v145 = vld [vmem:[%s1 + $0x1e8] sm:$0xf]
    %v146 = vld [vmem:[%s1 + $0x1ec] sm:$0xf]
    %v147 = vld [vmem:[%s1 + $0x1f0] sm:$0xf]
    %v148 = vld [vmem:[%s1 + $0x1f4] sm:$0xf]
    %v149 = vld [vmem:[%s1 + $0x1f8] sm:$0xf]
    %v150 = vld [vmem:[%s1 + $0x1fc] sm:$0xf]
    %v151 = vld [vmem:[%s2] sm:$0x1]
    %v153 = vlaneseq
    %v154 = vshrl.u32 %v153, 7
    %v155 = vsub.s32 0, %v154
    %v156 = vrot.slane %v151, %v155
    %v159 = vcombine.high %v22, %v22
    %v161 = vunpack.c.l.s4 1966171168
    %v162 = vunpack.c.0.s8 %v161
    %v163 = vlaneseq
    %v164 = vshrl.u32 %v163, 7
    %v165 = vsub.s32 %v162, %v164
    %v166 = vrot.slane %v22, %v165
    %v168 = vunpack.c.l.s4 1966171168
    %v169 = vunpack.c.0.s8 %v168
    %v170 = vlaneseq
    %v171 = vshrl.u32 %v170, 7
    %v172 = vsub.s32 %v169, %v171
    %v173 = vrot.slane %v159, %v172
    %v174 = vcombine.high %v166, %v166
    %v175 = vcombine.high %v173, %v173
    %v177 = vunpack.c.l.s4 1966171168
    %v178 = vunpack.c.0.s8 %v177
    %v179 = vlaneseq
    %v180 = vshrl.u32 %v179, 7
    %v181 = vsub.s32 %v178, %v180
    %v182 = vrot.slane %v166, %v181
    %v184 = vunpack.c.l.s4 1966171168
    %v185 = vunpack.c.0.s8 %v184
    %v186 = vlaneseq
    %v187 = vshrl.u32 %v186, 7
    %v188 = vsub.s32 %v185, %v187
    %v189 = vrot.slane %v173, %v188
    %v191 = vunpack.c.l.s4 1966171168
    %v192 = vunpack.c.0.s8 %v191
    %v193 = vlaneseq
    %v194 = vshrl.u32 %v193, 7
    %v195 = vsub.s32 %v192, %v194
    %v196 = vrot.slane %v174, %v195
    %v198 = vunpack.c.l.s4 1966171168
    %v199 = vunpack.c.0.s8 %v198
    %v200 = vlaneseq
    %v201 = vshrl.u32 %v200, 7
    %v202 = vsub.s32 %v199, %v201
    %v203 = vrot.slane %v175, %v202
    %v204 = vcombine.high %v182, %v182
    %v205 = vcombine.high %v189, %v189
    %v206 = vcombine.high %v196, %v196
    %v207 = vcombine.high %v203, %v203
    %v344 = vunpack.c.l.b16 %v23
    %v345 = vunpack.c.l.b16 %v24
    %v346 = vunpack.c.l.b16 %v25
    %v347 = vunpack.c.l.b16 %v26
    %v348 = vunpack.c.l.b16 %v27
    %v349 = vunpack.c.l.b16 %v28
    %v350 = vunpack.c.l.b16 %v29
    %v351 = vunpack.c.l.b16 %v30
    %v352 = vunpack.c.l.b16 %v31
    %v353 = vunpack.c.l.b16 %v32
    %v354 = vunpack.c.l.b16 %v33
    %v355 = vunpack.c.l.b16 %v34
    %v356 = vunpack.c.l.b16 %v35
    %v357 = vunpack.c.l.b16 %v36
    %v358 = vunpack.c.l.b16 %v37
    %v359 = vunpack.c.l.b16 %v38
    %v360 = vunpack.c.l.b16 %v39
    %v361 = vunpack.c.l.b16 %v40
    %v362 = vunpack.c.l.b16 %v41
    %v363 = vunpack.c.l.b16 %v42
    %v364 = vunpack.c.l.b16 %v43
    %v365 = vunpack.c.l.b16 %v44
    %v366 = vunpack.c.l.b16 %v45
    %v367 = vunpack.c.l.b16 %v46
    %v368 = vunpack.c.l.b16 %v47
    %v369 = vunpack.c.l.b16 %v48
    %v370 = vunpack.c.l.b16 %v49
    %v371 = vunpack.c.l.b16 %v50
    %v372 = vunpack.c.l.b16 %v51
    %v373 = vunpack.c.l.b16 %v52
    %v374 = vunpack.c.l.b16 %v53
    %v375 = vunpack.c.l.b16 %v54
    %v376 = vunpack.c.l.b16 %v55
    %v377 = vunpack.c.l.b16 %v56
    %v378 = vunpack.c.l.b16 %v57
    %v379 = vunpack.c.l.b16 %v58
    %v380 = vunpack.c.l.b16 %v59
    %v381 = vunpack.c.l.b16 %v60
    %v382 = vunpack.c.l.b16 %v61
    %v383 = vunpack.c.l.b16 %v62
    %v384 = vunpack.c.l.b16 %v63
    %v385 = vunpack.c.l.b16 %v64
    %v386 = vunpack.c.l.b16 %v65
    %v387 = vunpack.c.l.b16 %v66
    %v388 = vunpack.c.l.b16 %v67
    %v389 = vunpack.c.l.b16 %v68
    %v390 = vunpack.c.l.b16 %v69
    %v391 = vunpack.c.l.b16 %v70
    %v392 = vunpack.c.l.b16 %v71
    %v393 = vunpack.c.l.b16 %v72
    %v394 = vunpack.c.l.b16 %v73
    %v395 = vunpack.c.l.b16 %v74
    %v396 = vunpack.c.l.b16 %v75
    %v397 = vunpack.c.l.b16 %v76
    %v398 = vunpack.c.l.b16 %v77
    %v399 = vunpack.c.l.b16 %v78
    %v400 = vunpack.c.l.b16 %v79
    %v401 = vunpack.c.l.b16 %v80
    %v402 = vunpack.c.l.b16 %v81
    %v403 = vunpack.c.l.b16 %v82
    %v404 = vunpack.c.l.b16 %v83
    %v405 = vunpack.c.l.b16 %v84
    %v406 = vunpack.c.l.b16 %v85
    %v407 = vunpack.c.l.b16 %v86
    %v408 = vunpack.c.l.b16 %v87
    %v409 = vunpack.c.l.b16 %v88
    %v410 = vunpack.c.l.b16 %v89
    %v411 = vunpack.c.l.b16 %v90
    %v412 = vunpack.c.l.b16 %v91
    %v413 = vunpack.c.l.b16 %v92
    %v414 = vunpack.c.l.b16 %v93
    %v415 = vunpack.c.l.b16 %v94
    %v416 = vunpack.c.l.b16 %v95
    %v417 = vunpack.c.l.b16 %v96
    %v418 = vunpack.c.l.b16 %v97
    %v419 = vunpack.c.l.b16 %v98
    %v420 = vunpack.c.l.b16 %v99
    %v421 = vunpack.c.l.b16 %v100
    %v422 = vunpack.c.l.b16 %v101
    %v423 = vunpack.c.l.b16 %v102
    %v424 = vunpack.c.l.b16 %v103
    %v425 = vunpack.c.l.b16 %v104
    %v426 = vunpack.c.l.b16 %v105
    %v427 = vunpack.c.l.b16 %v106
    %v428 = vunpack.c.l.b16 %v107
    %v429 = vunpack.c.l.b16 %v108
    %v430 = vunpack.c.l.b16 %v109
    %v431 = vunpack.c.l.b16 %v110
    %v432 = vunpack.c.l.b16 %v111
    %v433 = vunpack.c.l.b16 %v112
    %v434 = vunpack.c.l.b16 %v113
    %v435 = vunpack.c.l.b16 %v114
    %v436 = vunpack.c.l.b16 %v115
    %v437 = vunpack.c.l.b16 %v116
    %v438 = vunpack.c.l.b16 %v117
    %v439 = vunpack.c.l.b16 %v118
    %v440 = vunpack.c.l.b16 %v119
    %v441 = vunpack.c.l.b16 %v120
    %v442 = vunpack.c.l.b16 %v121
    %v443 = vunpack.c.l.b16 %v122
    %v444 = vunpack.c.l.b16 %v123
    %v445 = vunpack.c.l.b16 %v124
    %v446 = vunpack.c.l.b16 %v125
    %v447 = vunpack.c.l.b16 %v126
    %v448 = vunpack.c.l.b16 %v127
    %v449 = vunpack.c.l.b16 %v128
    %v450 = vunpack.c.l.b16 %v129
    %v451 = vunpack.c.l.b16 %v130
    %v452 = vunpack.c.l.b16 %v131
    %v453 = vunpack.c.l.b16 %v132
    %v454 = vunpack.c.l.b16 %v133
    %v455 = vunpack.c.l.b16 %v134
    %v456 = vunpack.c.l.b16 %v135
    %v457 = vunpack.c.l.b16 %v136
    %v458 = vunpack.c.l.b16 %v137
    %v459 = vunpack.c.l.b16 %v138
    %v460 = vunpack.c.l.b16 %v139
    %v461 = vunpack.c.l.b16 %v140
    %v462 = vunpack.c.l.b16 %v141
    %v463 = vunpack.c.l.b16 %v142
    %v464 = vunpack.c.l.b16 %v143
    %v465 = vunpack.c.l.b16 %v144
    %v466 = vunpack.c.l.b16 %v145
    %v467 = vunpack.c.l.b16 %v146
    %v468 = vunpack.c.l.b16 %v147
    %v469 = vunpack.c.l.b16 %v148
    %v470 = vunpack.c.l.b16 %v149
    %v471 = vunpack.c.l.b16 %v150
    %v472 = vpack.c.b16 %v345, %v344
    %v473 = vpack.c.b16 %v347, %v346
    %v474 = vpack.c.b16 %v349, %v348
    %v475 = vpack.c.b16 %v351, %v350
    %v476 = vpack.c.b16 %v353, %v352
    %v477 = vpack.c.b16 %v355, %v354
    %v478 = vpack.c.b16 %v357, %v356
    %v479 = vpack.c.b16 %v359, %v358
    %v480 = vpack.c.b16 %v361, %v360
    %v481 = vpack.c.b16 %v363, %v362
    %v482 = vpack.c.b16 %v365, %v364
    %v483 = vpack.c.b16 %v367, %v366
    %v484 = vpack.c.b16 %v369, %v368
    %v485 = vpack.c.b16 %v371, %v370
    %v486 = vpack.c.b16 %v373, %v372
    %v487 = vpack.c.b16 %v375, %v374
    %v488 = vpack.c.b16 %v377, %v376
    %v489 = vpack.c.b16 %v379, %v378
    %v490 = vpack.c.b16 %v381, %v380
    %v491 = vpack.c.b16 %v383, %v382
    %v492 = vpack.c.b16 %v385, %v384
    %v493 = vpack.c.b16 %v387, %v386
    %v494 = vpack.c.b16 %v389, %v388
    %v495 = vpack.c.b16 %v391, %v390
    %v496 = vpack.c.b16 %v393, %v392
    %v497 = vpack.c.b16 %v395, %v394
    %v498 = vpack.c.b16 %v397, %v396
    %v499 = vpack.c.b16 %v399, %v398
    %v500 = vpack.c.b16 %v401, %v400
    %v501 = vpack.c.b16 %v403, %v402
    %v502 = vpack.c.b16 %v405, %v404
    %v503 = vpack.c.b16 %v407, %v406
    %v504 = vpack.c.b16 %v409, %v408
    %v505 = vpack.c.b16 %v411, %v410
    %v506 = vpack.c.b16 %v413, %v412
    %v507 = vpack.c.b16 %v415, %v414
    %v508 = vpack.c.b16 %v417, %v416
    %v509 = vpack.c.b16 %v419, %v418
    %v510 = vpack.c.b16 %v421, %v420
    %v511 = vpack.c.b16 %v423, %v422
    %v512 = vpack.c.b16 %v425, %v424
    %v513 = vpack.c.b16 %v427, %v426
    %v514 = vpack.c.b16 %v429, %v428
    %v515 = vpack.c.b16 %v431, %v430
    %v516 = vpack.c.b16 %v433, %v432
    %v517 = vpack.c.b16 %v435, %v434
    %v518 = vpack.c.b16 %v437, %v436
    %v519 = vpack.c.b16 %v439, %v438
    %v520 = vpack.c.b16 %v441, %v440
    %v521 = vpack.c.b16 %v443, %v442
    %v522 = vpack.c.b16 %v445, %v444
    %v523 = vpack.c.b16 %v447, %v446
    %v524 = vpack.c.b16 %v449, %v448
    %v525 = vpack.c.b16 %v451, %v450
    %v526 = vpack.c.b16 %v453, %v452
    %v527 = vpack.c.b16 %v455, %v454
    %v528 = vpack.c.b16 %v457, %v456
    %v529 = vpack.c.b16 %v459, %v458
    %v530 = vpack.c.b16 %v461, %v460
    %v531 = vpack.c.b16 %v463, %v462
    %v532 = vpack.c.b16 %v465, %v464
    %v533 = vpack.c.b16 %v467, %v466
    %v534 = vpack.c.b16 %v469, %v468
    %v535 = vpack.c.b16 %v471, %v470
    %600 = vmatprep.subr.bf16.mxu0 0
    %601 = vmatpush1.bf16.msra.mxu0 %v472
    %602 = vmatprep.subr.bf16.mxu0 0
    %603 = vmatpush1.bf16.msra.mxu0 %v473
    %604 = vmatprep.subr.bf16.mxu0 0
    %605 = vmatpush1.bf16.msra.mxu0 %v474
    %606 = vmatprep.subr.bf16.mxu0 0
    %607 = vmatpush1.bf16.msra.mxu0 %v475
    %608 = vmatprep.subr.bf16.mxu0 0
    %609 = vmatpush1.bf16.msra.mxu0 %v476
    %610 = vmatprep.subr.bf16.mxu0 0
    %611 = vmatpush1.bf16.msra.mxu0 %v477
    %612 = vmatprep.subr.bf16.mxu0 0
    %613 = vmatpush1.bf16.msra.mxu0 %v478
    %614 = vmatprep.subr.bf16.mxu0 0
    %615 = vmatpush1.bf16.msra.mxu0 %v479
    %616 = vmatprep.subr.bf16.mxu0 0
    %617 = vmatpush1.bf16.msra.mxu0 %v480
    %618 = vmatprep.subr.bf16.mxu0 0
    %619 = vmatpush1.bf16.msra.mxu0 %v481
    %620 = vmatprep.subr.bf16.mxu0 0
    %621 = vmatpush1.bf16.msra.mxu0 %v482
    %622 = vmatprep.subr.bf16.mxu0 0
    %623 = vmatpush1.bf16.msra.mxu0 %v483
    %624 = vmatprep.subr.bf16.mxu0 0
    %625 = vmatpush1.bf16.msra.mxu0 %v484
    %626 = vmatprep.subr.bf16.mxu0 0
    %627 = vmatpush1.bf16.msra.mxu0 %v485
    %628 = vmatprep.subr.bf16.mxu0 0
    %629 = vmatpush1.bf16.msra.mxu0 %v486
    %630 = vmatprep.subr.bf16.mxu0 0
    %631 = vmatpush1.bf16.msra.mxu0 %v487
    %632 = vmatprep.mubr.bf16.mxu0 %v196
    %633 = vmatmul.mubr.bf16.gmra.mrb[0].mxu0 %v182
    %v634 = vpop.f32.mrb[0].mxu0
    %v635 = vadd.f32 %v156, %v634
    %v636 = vpop.f32.mrb[0].mxu0
    %v637 = vpop.f32.mrb[0].mxu0
    %v638 = vpop.f32.mrb[0].mxu0
    %639 = vdwg.mxu0
    %640 = vmatprep.subr.bf16.mxu0 0
    %641 = vmatpush1.bf16.msra.mxu0 %v488
    %642 = vmatprep.subr.bf16.mxu0 0
    %643 = vmatpush1.bf16.msra.mxu0 %v489
    %644 = vmatprep.subr.bf16.mxu0 0
    %645 = vmatpush1.bf16.msra.mxu0 %v490
    %646 = vmatprep.subr.bf16.mxu0 0
    %647 = vmatpush1.bf16.msra.mxu0 %v491
    %648 = vmatprep.subr.bf16.mxu0 0
    %649 = vmatpush1.bf16.msra.mxu0 %v492
    %650 = vmatprep.subr.bf16.mxu0 0
    %651 = vmatpush1.bf16.msra.mxu0 %v493
    %652 = vmatprep.subr.bf16.mxu0 0
    %653 = vmatpush1.bf16.msra.mxu0 %v494
    %654 = vmatprep.subr.bf16.mxu0 0
    %655 = vmatpush1.bf16.msra.mxu0 %v495
    %656 = vmatprep.subr.bf16.mxu0 0
    %657 = vmatpush1.bf16.msra.mxu0 %v496
    %658 = vmatprep.subr.bf16.mxu0 0
    %659 = vmatpush1.bf16.msra.mxu0 %v497
    %660 = vmatprep.subr.bf16.mxu0 0
    %661 = vmatpush1.bf16.msra.mxu0 %v498
    %662 = vmatprep.subr.bf16.mxu0 0
    %663 = vmatpush1.bf16.msra.mxu0 %v499
    %664 = vmatprep.subr.bf16.mxu0 0
    %665 = vmatpush1.bf16.msra.mxu0 %v500
    %666 = vmatprep.subr.bf16.mxu0 0
    %667 = vmatpush1.bf16.msra.mxu0 %v501
    %668 = vmatprep.subr.bf16.mxu0 0
    %669 = vmatpush1.bf16.msra.mxu0 %v502
    %670 = vmatprep.subr.bf16.mxu0 0
    %671 = vmatpush1.bf16.msra.mxu0 %v503
    %672 = vmatprep.mubr.bf16.mxu0 %v206
    %673 = vmatmul.mubr.bf16.gmra.mrb[0].mxu0 %v204
    %v674 = vpop.f32.mrb[0].mxu0
    %v675 = vadd.f32 %v635, %v674
    %v676 = vpop.f32.mrb[0].mxu0
    %v677 = vpop.f32.mrb[0].mxu0
    %v678 = vpop.f32.mrb[0].mxu0
    %679 = vdwg.mxu0
    %680 = vmatprep.subr.bf16.mxu0 0
    %681 = vmatpush1.bf16.msra.mxu0 %v504
    %682 = vmatprep.subr.bf16.mxu0 0
    %683 = vmatpush1.bf16.msra.mxu0 %v505
    %684 = vmatprep.subr.bf16.mxu0 0
    %685 = vmatpush1.bf16.msra.mxu0 %v506
    %686 = vmatprep.subr.bf16.mxu0 0
    %687 = vmatpush1.bf16.msra.mxu0 %v507
    %688 = vmatprep.subr.bf16.mxu0 0
    %689 = vmatpush1.bf16.msra.mxu0 %v508
    %690 = vmatprep.subr.bf16.mxu0 0
    %691 = vmatpush1.bf16.msra.mxu0 %v509
    %692 = vmatprep.subr.bf16.mxu0 0
    %693 = vmatpush1.bf16.msra.mxu0 %v510
    %694 = vmatprep.subr.bf16.mxu0 0
    %695 = vmatpush1.bf16.msra.mxu0 %v511
    %696 = vmatprep.subr.bf16.mxu0 0
    %697 = vmatpush1.bf16.msra.mxu0 %v512
    %698 = vmatprep.subr.bf16.mxu0 0
    %699 = vmatpush1.bf16.msra.mxu0 %v513
    %700 = vmatprep.subr.bf16.mxu0 0
    %701 = vmatpush1.bf16.msra.mxu0 %v514
    %702 = vmatprep.subr.bf16.mxu0 0
    %703 = vmatpush1.bf16.msra.mxu0 %v515
    %704 = vmatprep.subr.bf16.mxu0 0
    %705 = vmatpush1.bf16.msra.mxu0 %v516
    %706 = vmatprep.subr.bf16.mxu0 0
    %707 = vmatpush1.bf16.msra.mxu0 %v517
    %708 = vmatprep.subr.bf16.mxu0 0
    %709 = vmatpush1.bf16.msra.mxu0 %v518
    %710 = vmatprep.subr.bf16.mxu0 0
    %711 = vmatpush1.bf16.msra.mxu0 %v519
    %712 = vmatprep.mubr.bf16.mxu0 %v203
    %713 = vmatmul.mubr.bf16.gmra.mrb[0].mxu0 %v189
    %v714 = vpop.f32.mrb[0].mxu0
    %v715 = vadd.f32 %v675, %v714
    %v716 = vpop.f32.mrb[0].mxu0
    %v717 = vpop.f32.mrb[0].mxu0
    %v718 = vpop.f32.mrb[0].mxu0
    %719 = vdwg.mxu0
    %720 = vmatprep.subr.bf16.mxu0 0
    %721 = vmatpush1.bf16.msra.mxu0 %v520
    %722 = vmatprep.subr.bf16.mxu0 0
    %723 = vmatpush1.bf16.msra.mxu0 %v521
    %724 = vmatprep.subr.bf16.mxu0 0
    %725 = vmatpush1.bf16.msra.mxu0 %v522
    %726 = vmatprep.subr.bf16.mxu0 0
    %727 = vmatpush1.bf16.msra.mxu0 %v523
    %728 = vmatprep.subr.bf16.mxu0 0
    %729 = vmatpush1.bf16.msra.mxu0 %v524
    %730 = vmatprep.subr.bf16.mxu0 0
    %731 = vmatpush1.bf16.msra.mxu0 %v525
    %732 = vmatprep.subr.bf16.mxu0 0
    %733 = vmatpush1.bf16.msra.mxu0 %v526
    %734 = vmatprep.subr.bf16.mxu0 0
    %735 = vmatpush1.bf16.msra.mxu0 %v527
    %736 = vmatprep.subr.bf16.mxu0 0
    %737 = vmatpush1.bf16.msra.mxu0 %v528
    %738 = vmatprep.subr.bf16.mxu0 0
    %739 = vmatpush1.bf16.msra.mxu0 %v529
    %740 = vmatprep.subr.bf16.mxu0 0
    %741 = vmatpush1.bf16.msra.mxu0 %v530
    %742 = vmatprep.subr.bf16.mxu0 0
    %743 = vmatpush1.bf16.msra.mxu0 %v531
    %744 = vmatprep.subr.bf16.mxu0 0
    %745 = vmatpush1.bf16.msra.mxu0 %v532
    %746 = vmatprep.subr.bf16.mxu0 0
    %747 = vmatpush1.bf16.msra.mxu0 %v533
    %748 = vmatprep.subr.bf16.mxu0 0
    %749 = vmatpush1.bf16.msra.mxu0 %v534
    %750 = vmatprep.subr.bf16.mxu0 0
    %751 = vmatpush1.bf16.msra.mxu0 %v535
    %752 = vmatprep.mubr.bf16.mxu0 %v207
    %753 = vmatmul.mubr.bf16.gmra.mrb[0].mxu0 %v205
    %v754 = vpop.f32.mrb[0].mxu0
    %v755 = vadd.f32 %v715, %v754
    %v756 = vpop.f32.mrb[0].mxu0
    %v757 = vpop.f32.mrb[0].mxu0
    %v758 = vpop.f32.mrb[0].mxu0
    %759 = vdwg.mxu0
    %v760 = vpack.c.bf16 %v755, %v755
    %v761 = vld [vmem:[%s3] sm:$0xf]
    %v762 = vld [vmem:[%s3 + $0x4] sm:$0xf]
    %v763 = vld [vmem:[%s3 + $0x8] sm:$0xf]
    %v764 = vld [vmem:[%s3 + $0xc] sm:$0xf]
    %v765 = vld [vmem:[%s3 + $0x10] sm:$0xf]
    %v766 = vld [vmem:[%s3 + $0x14] sm:$0xf]
    %v767 = vld [vmem:[%s3 + $0x18] sm:$0xf]
    %v768 = vld [vmem:[%s3 + $0x1c] sm:$0xf]
    %v769 = vld [vmem:[%s4] sm:$0x1]
    %v771 = vlaneseq
    %v772 = vshrl.u32 %v771, 7
    %v773 = vsub.s32 0, %v772
    %v774 = vrot.slane %v769, %v773
    %v784 = vunpack.c.l.b16 %v761
    %v785 = vunpack.c.l.b16 %v762
    %v786 = vunpack.c.l.b16 %v763
    %v787 = vunpack.c.l.b16 %v764
    %v788 = vunpack.c.l.b16 %v765
    %v789 = vunpack.c.l.b16 %v766
    %v790 = vunpack.c.l.b16 %v767
    %v791 = vunpack.c.l.b16 %v768
    %v792 = vpack.c.b16 %v785, %v784
    %v793 = vpack.c.b16 %v787, %v786
    %v794 = vpack.c.b16 %v789, %v788
    %v795 = vpack.c.b16 %v791, %v790
    %vm800 = vcmask 523264
    %v802 = vsel %vm800, %v760, 0
    %804 = vmatprep.subr.bf16.mxu0 0
    %805 = vmatpush1.bf16.msra.mxu0 %v792
    %806 = vmatprep.subr.bf16.mxu0 0
    %807 = vmatpush1.bf16.msra.mxu0 %v793
    %808 = vmatprep.subr.bf16.mxu0 0
    %809 = vmatpush1.bf16.msra.mxu0 %v794
    %810 = vmatprep.subr.bf16.mxu0 0
    %811 = vmatpush1.bf16.msra.mxu0 %v795
    %812 = vmatprep.subr.bf16.mxu0 0
    %813 = vmatpush1.bf16.msra.mxu0 0
    %814 = vmatprep.subr.bf16.mxu0 0
    %815 = vmatpush1.bf16.msra.mxu0 0
    %816 = vmatprep.subr.bf16.mxu0 0
    %817 = vmatpush1.bf16.msra.mxu0 0
    %818 = vmatprep.subr.bf16.mxu0 0
    %819 = vmatpush1.bf16.msra.mxu0 0
    %820 = vmatprep.subr.bf16.mxu0 0
    %821 = vmatpush1.bf16.msra.mxu0 0
    %822 = vmatprep.subr.bf16.mxu0 0
    %823 = vmatpush1.bf16.msra.mxu0 0
    %824 = vmatprep.subr.bf16.mxu0 0
    %825 = vmatpush1.bf16.msra.mxu0 0
    %826 = vmatprep.subr.bf16.mxu0 0
    %827 = vmatpush1.bf16.msra.mxu0 0
    %828 = vmatprep.subr.bf16.mxu0 0
    %829 = vmatpush1.bf16.msra.mxu0 0
    %830 = vmatprep.subr.bf16.mxu0 0
    %831 = vmatpush1.bf16.msra.mxu0 0
    %832 = vmatprep.subr.bf16.mxu0 0
    %833 = vmatpush1.bf16.msra.mxu0 0
    %834 = vmatprep.subr.bf16.mxu0 0
    %835 = vmatpush1.bf16.msra.mxu0 0
    %836 = vmatprep.mubr.bf16.mxu0 0
    %837 = vmatmul.mubr.bf16.gmra.mrb[0].mxu0 %v802
    %v838 = vpop.f32.mrb[0].mxu0
    %v839 = vadd.f32 %v774, %v838
    %v840 = vpop.f32.mrb[0].mxu0
    %v841 = vpop.f32.mrb[0].mxu0
    %v842 = vpop.f32.mrb[0].mxu0
    %843 = vdwg.mxu0
    %vm844 = vcmask 74752
    %845 = vst.msk [vmem:[#allocation2] sm:$0x3] %vm844, %v839
    // Predicated region
    $region22: #{jlnet_forward.7} parent=1 // pred_check
      _
    $region23: #{jlnet_forward.7} parent=1 // pred_check_branch
      %847 = sbr.rel (0) target = $region25
    $region24: #{jlnet_forward.7} parent=1 // pred_region
      %s849 = ssub.s32 32, 32
      %850 = vsyncadd [#allocation3], %s849
      %s852 = sshll.u32 [#allocation2], 4
      %s853 = int_to_ptr.vmem [resolvable:$true] %s852
      %855 = dma.vmem_to_hbm [thread:$0]  %s853, 32, %s5, [#allocation3]
    $region25: #{jlnet_forward.7} parent=1 // pred_fallthru
      _
    // Predicated region
    $region26: #{jlnet_forward.7} parent=1 // pred_check
      _
    $region27: #{jlnet_forward.7} parent=1 // pred_check_branch
      %857 = sbr.rel (0) target = $region29
    $region28: #{jlnet_forward.7} parent=1 // pred_region
      %858 = dma.done [#allocation3], 32
    $region29: #{jlnet_forward.7} parent=1 // pred_fallthru
      _
    %859 = vsyncpa [#allocation3], 1

</llo_original>
